<compile_context>
chip_gen: v7x
topology: tpu7x:2x2x1
jax: 0.10.0
libtpu: 0.0.40
codegen_flags: <defaults>
</compile_context>

<pallas_src>
import functools

import numpy as np
import jax
import jax.numpy as jnp
from jax import lax
from jax.experimental import pallas as pl
from jax.experimental.pallas import tpu as pltpu

BN_EPS = 1e-5  # PyTorch BatchNorm2d default


# --------------------------------- kernel ---------------------------------- #

def _residual_conv_kernel(x_ref, valid_ref, gz_ref, s1_ref, t1_ref,
                          w1_ref, wsk_ref, w2_ref, b1_ref, bo_ref,
                          out_ref, a_scr, z_scr, *,
                          taps1, taps_sk, offs2, L, base, cdt):
    P, Cin, Lin = a_scr.shape
    Cout = z_scr.shape[0]

    # bn1 affine + ReLU on the phased padded input; the `valid` mask keeps the
    # conv zero-padding ring exactly zero.  Stored once to VMEM scratch.
    for ph in range(P):
        xf = x_ref[0, ph].astype(jnp.float32)                       # (Cin, Lin)
        a = jnp.maximum(xf * s1_ref[...] + t1_ref[...], 0.0) * valid_ref[ph]
        a_scr[ph] = a.astype(cdt)

    # conv1 (bn2 folded) and skip conv (bn_skip folded): 9 shifted matmuls
    # each, f32 accumulation; the skip branch seeds the final accumulator.
    acc1 = jnp.zeros((Cout, L), jnp.float32)
    acc_out = jnp.zeros((Cout, L), jnp.float32)
    for t in range(9):
        ph1, o1 = taps1[t]
        phs, os_ = taps_sk[t]
        a_tap = a_scr[ph1, :, o1:o1 + L]                            # (Cin, L)
        x_tap = x_ref[0, phs, :, os_:os_ + L].astype(cdt)           # (Cin, L)
        acc1 = acc1 + jnp.dot(w1_ref[t], a_tap,
                              preferred_element_type=jnp.float32)
        acc_out = acc_out + jnp.dot(wsk_ref[t], x_tap,
                                    preferred_element_type=jnp.float32)

    # bn2 is folded into w1/b1, so z = relu(acc1 + b1).  Garbage lanes are
    # zeroed (gz) and z is stashed into a zero-padded VMEM scratch so the
    # zeroed lanes / scratch borders act as conv2's zero padding.
    z = jnp.maximum(acc1 + b1_ref[...], 0.0) * gz_ref[...]
    z_scr[...] = jnp.zeros(z_scr.shape, z_scr.dtype)
    z_scr[:, base:base + L] = z.astype(cdt)

    # conv2 (stride 1, pad 1) accumulated on top of the skip branch.
    for t in range(9):
        acc_out = acc_out + jnp.dot(w2_ref[t], z_scr[:, offs2[t]:offs2[t] + L],
                                    preferred_element_type=jnp.float32)

    out_ref[0] = (acc_out + bo_ref[...]).astype(out_ref.dtype)


# -------------------------------- helpers ----------------------------------- #

def _fold_bn(gamma, beta, mean, var, eps=BN_EPS):
    scale = gamma / jnp.sqrt(var + eps)
    return scale, beta - mean * scale


def _w_to_taps(w):
    # (Cout, Cin, 3, 3) -> (9, Cout, Cin), tap index t = kh*3 + kw.
    return jnp.transpose(w, (2, 3, 0, 1)).reshape(9, w.shape[0], w.shape[1])


# ------------------------------ full forward -------------------------------- #

def residual_conv_forward(x, params, stride, padding,
                          compute_dtype=jnp.bfloat16):
    """ResidualConv.forward for NCHW input x (inference-mode BatchNorm)."""
    n, cin, h, w = x.shape
    cout = params["w_conv1"].shape[0]
    s, pd = int(stride), int(padding)
    pmax = max(pd, 1)

    ho = (h + 2 * pd - 3) // s + 1
    wo = (w + 2 * pd - 3) // s + 1
    assert (ho, wo) == ((h - 1) // s + 1, (w - 1) // s + 1), \
        "conv_block / conv_skip output shapes must match"

    hp, wp = h + 2 * pmax, w + 2 * pmax
    hq = -(-hp // s)
    wq = max(-(-wp // s), wo + 1)          # conv2 wrap-around needs a spare col
    hp2, wp2 = hq * s, wq * s

    l_valid = ho * wq
    L = ((l_valid + 127) // 128) * 128     # lane-dense compute / output width

    # Tap tables: (phase index, flattened offset) for the two strided convs.
    def tap_table(extra):
        tab = []
        for kh in range(3):
            for kw in range(3):
                qh, rh = divmod(kh + extra, s)
                qw, rw = divmod(kw + extra, s)
                tab.append((rh * s + rw, qh * wq + qw))
        return tab

    taps1 = tap_table(pmax - pd)           # conv1 (padding = pd)
    taps_sk = tap_table(pmax - 1)          # skip conv (padding = 1)
    offs2 = [kh * wq + kw for kh in range(3) for kw in range(3)]
    base = wq + 1

    off_max = max(o for _, o in taps1 + taps_sk)
    lin = max(hq * wq, off_max + L)
    P = s * s
    lz = 2 * wq + 2 + L

    # Wrapper-side layout prep: pad + space-to-depth + flatten.  Same byte
    # count as the input (no im2col inflation).
    xp = jnp.pad(x, ((0, 0), (0, 0),
                     (pmax, hp2 - h - pmax), (pmax, wp2 - w - pmax)))
    xph = xp.reshape(n, cin, hq, s, wq, s)
    xph = jnp.transpose(xph, (0, 3, 5, 1, 2, 4)).reshape(n, P, cin, hq * wq)
    xph = jnp.pad(xph, ((0, 0), (0, 0), (0, 0), (0, lin - hq * wq)))
    xph = xph.astype(compute_dtype)

    # bn1 validity mask (1 inside the original image, 0 on the zero-pad ring)
    # and the garbage-lane mask for z; built host-side, tiny.
    rh_ = np.arange(s)[:, None, None, None]
    rw_ = np.arange(s)[None, :, None, None]
    ii = np.arange(hq)[None, None, :, None]
    jj = np.arange(wq)[None, None, None, :]
    row, col = ii * s + rh_, jj * s + rw_
    valid = ((row >= pmax) & (row < pmax + h) &
             (col >= pmax) & (col < pmax + w))
    valid = valid.reshape(P, 1, hq * wq).astype(np.float32)
    valid = np.pad(valid, ((0, 0), (0, 0), (0, lin - hq * wq)))
    m = np.arange(L)
    gz = ((m < l_valid) & ((m % wq) < wo)).astype(np.float32).reshape(1, L)

    # Parameter folding (all in f32), then cast to the compute dtype.
    s1, t1 = _fold_bn(params["bn1_gamma"], params["bn1_beta"],
                      params["bn1_mean"], params["bn1_var"])
    s2, t2 = _fold_bn(params["bn2_gamma"], params["bn2_beta"],
                      params["bn2_mean"], params["bn2_var"])
    ss, ts = _fold_bn(params["bns_gamma"], params["bns_beta"],
                      params["bns_mean"], params["bns_var"])

    w1 = _w_to_taps(params["w_conv1"] * s2[:, None, None, None]).astype(compute_dtype)
    b1 = (params["b_conv1"] * s2 + t2).reshape(cout, 1).astype(jnp.float32)
    wsk = _w_to_taps(params["w_skip"] * ss[:, None, None, None]).astype(compute_dtype)
    w2 = _w_to_taps(params["w_conv2"]).astype(compute_dtype)
    bo = (params["b_conv2"] + params["b_skip"] * ss + ts
          ).reshape(cout, 1).astype(jnp.float32)

    kernel = functools.partial(
        _residual_conv_kernel, taps1=taps1, taps_sk=taps_sk, offs2=offs2,
        L=L, base=base, cdt=compute_dtype)

    # VMEM budget derived from the actual per-step working set (+ headroom).
    csz = jnp.dtype(compute_dtype).itemsize
    work_bytes = (2 * P * cin * lin * csz                     # dbl-buf input
                  + P * lin * 4 + L * 4                       # masks
                  + 9 * (2 * cout * cin + cout * cout) * csz  # weights
                  + 2 * cout * L * 4                          # dbl-buf output
                  + P * cin * lin * csz + cout * lz * csz     # scratch
                  + 4 * cout * L * 4)                         # accumulators
    vmem_limit = int(min(100 * 2**20, max(32 * 2**20, 2 * work_bytes)))

    out = pl.pallas_call(
        kernel,
        out_shape=jax.ShapeDtypeStruct((n, cout, L), x.dtype),
        grid_spec=pltpu.PrefetchScalarGridSpec(
            num_scalar_prefetch=0,
            grid=(n,),
            in_specs=[
                pl.BlockSpec((1, P, cin, lin), lambda b: (b, 0, 0, 0)),
                pl.BlockSpec((P, 1, lin), lambda b: (0, 0, 0)),
                pl.BlockSpec((1, L), lambda b: (0, 0)),
                pl.BlockSpec((cin, 1), lambda b: (0, 0)),
                pl.BlockSpec((cin, 1), lambda b: (0, 0)),
                pl.BlockSpec((9, cout, cin), lambda b: (0, 0, 0)),
                pl.BlockSpec((9, cout, cin), lambda b: (0, 0, 0)),
                pl.BlockSpec((9, cout, cout), lambda b: (0, 0, 0)),
                pl.BlockSpec((cout, 1), lambda b: (0, 0)),
                pl.BlockSpec((cout, 1), lambda b: (0, 0)),
            ],
            out_specs=pl.BlockSpec((1, cout, L), lambda b: (b, 0, 0)),
            scratch_shapes=[
                pltpu.VMEM((P, cin, lin), compute_dtype),
                pltpu.VMEM((cout, lz), compute_dtype),
            ]),
        compiler_params=pltpu.CompilerParams(
            dimension_semantics=("parallel",),
            vmem_limit_bytes=vmem_limit),
    )(xph, jnp.asarray(valid), jnp.asarray(gz),
      s1.reshape(cin, 1).astype(jnp.float32),
      t1.reshape(cin, 1).astype(jnp.float32),
      w1, wsk, w2, b1, bo)

    out = out[:, :, :l_valid].reshape(n, cout, ho, wq)[:, :, :, :wo]
    return out


# -------------------------- pure-JAX reference ------------------------------ #

def _ref_residual_conv(x, p, stride, padding):
    def bn(v, g, b, m, s):
        return ((v - m[None, :, None, None]) /
                jnp.sqrt(s[None, :, None, None] + BN_EPS) *
                g[None, :, None, None] + b[None, :, None, None])

    def conv(v, w, b, s, pad):
        y = lax.conv_general_dilated(
            v, w, window_strides=(s, s), padding=((pad, pad), (pad, pad)),
            dimension_numbers=("NCHW", "OIHW", "NCHW"),
            precision=lax.Precision.HIGHEST)
        return y + b[None, :, None, None]

    h = jax.nn.relu(bn(x, p["bn1_gamma"], p["bn1_beta"], p["bn1_mean"], p["bn1_var"]))
    h = conv(h, p["w_conv1"], p["b_conv1"], stride, padding)
    h = jax.nn.relu(bn(h, p["bn2_gamma"], p["bn2_beta"], p["bn2_mean"], p["bn2_var"]))
    h = conv(h, p["w_conv2"], p["b_conv2"], 1, 1)
    sk = conv(x, p["w_skip"], p["b_skip"], stride, 1)
    sk = bn(sk, p["bns_gamma"], p["bns_beta"], p["bns_mean"], p["bns_var"])
    return h + sk


# --------------------------------- main ------------------------------------- #

if __name__ == "__main__":
    key = jax.random.PRNGKey(0)
    ks = jax.random.split(key, 20)

    N, Cin, Cout, H, W = 2, 4, 8, 16, 16

    def nrm(k, shape, s=0.1):
        return s * jax.random.normal(k, shape, jnp.float32)

    params = {
        "bn1_gamma": 1.0 + nrm(ks[0], (Cin,)),
        "bn1_beta": nrm(ks[1], (Cin,)),
        "bn1_mean": nrm(ks[2], (Cin,)),
        "bn1_var": 0.5 + jax.random.uniform(ks[3], (Cin,), jnp.float32),
        "w_conv1": nrm(ks[4], (Cout, Cin, 3, 3), 0.2),
        "b_conv1": nrm(ks[5], (Cout,)),
        "bn2_gamma": 1.0 + nrm(ks[6], (Cout,)),
        "bn2_beta": nrm(ks[7], (Cout,)),
        "bn2_mean": nrm(ks[8], (Cout,)),
        "bn2_var": 0.5 + jax.random.uniform(ks[9], (Cout,), jnp.float32),
        "w_conv2": nrm(ks[10], (Cout, Cout, 3, 3), 0.2),
        "b_conv2": nrm(ks[11], (Cout,)),
        "w_skip": nrm(ks[12], (Cout, Cin, 3, 3), 0.2),
        "b_skip": nrm(ks[13], (Cout,)),
        "bns_gamma": 1.0 + nrm(ks[14], (Cout,)),
        "bns_beta": nrm(ks[15], (Cout,)),
        "bns_mean": nrm(ks[16], (Cout,)),
        "bns_var": 0.5 + jax.random.uniform(ks[17], (Cout,), jnp.float32),
    }

    x = jax.random.normal(ks[18], (N, Cin, H, W), jnp.float32)

    def check(stride, padding, cdt, tol, tag):
        out = jax.block_until_ready(
            residual_conv_forward(x, params, stride, padding, compute_dtype=cdt))
        ref = _ref_residual_conv(x, params, stride, padding)
        assert out.shape == ref.shape, f"{tag}: shape {out.shape} vs {ref.shape}"
        err = float(jnp.linalg.norm((out - ref).astype(jnp.float32)) /
                    (jnp.linalg.norm(ref.astype(jnp.float32)) + 1e-12))
        assert err < tol, f"{tag}: rel-L2 error {err:.3e} >= {tol}"

    check(1, 1, jnp.float32, 1e-3, "stride=1 f32")
    check(2, 1, jnp.float32, 1e-3, "stride=2 f32")
    check(1, 1, jnp.bfloat16, 2e-2, "stride=1 bf16")

    print("KERNEL_OK")
</pallas_src>

<mosaic_0001>
module attributes {stable_mosaic.version = 11 : i64} {
  func.func @_residual_conv_kernel(%arg0: i32, %arg1: memref<1x1x4x422xf32, #tpu.memory_space<vmem>>, %arg2: memref<1x1x422xf32, #tpu.memory_space<vmem>>, %arg3: memref<1x384xf32, #tpu.memory_space<vmem>>, %arg4: memref<4x1xf32, #tpu.memory_space<vmem>>, %arg5: memref<4x1xf32, #tpu.memory_space<vmem>>, %arg6: memref<9x8x4xf32, #tpu.memory_space<vmem>>, %arg7: memref<9x8x4xf32, #tpu.memory_space<vmem>>, %arg8: memref<9x8x8xf32, #tpu.memory_space<vmem>>, %arg9: memref<8x1xf32, #tpu.memory_space<vmem>>, %arg10: memref<8x1xf32, #tpu.memory_space<vmem>>, %arg11: memref<1x8x384xf32, #tpu.memory_space<vmem>>, %arg12: memref<1x4x422xf32, #tpu.memory_space<vmem>>, %arg13: memref<8x422xf32, #tpu.memory_space<vmem>>) attributes {dimension_semantics = [#tpu.dimension_semantics<parallel>], iteration_bounds = array<i64: 2>, scalar_prefetch = 0 : i64, scratch_operands = 2 : i64, tpu.core_type = #tpu.core_type<tc>, window_params = [{transform_indices = @transform_0, window_bounds = array<i64: 1, 1, 4, 422>}, {pipeline_mode = #tpu.pipeline_mode<synchronous>, transform_indices = @transform_1, window_bounds = array<i64: 1, 1, 422>}, {pipeline_mode = #tpu.pipeline_mode<synchronous>, transform_indices = @transform_2, window_bounds = array<i64: 1, 384>}, {pipeline_mode = #tpu.pipeline_mode<synchronous>, transform_indices = @transform_3, window_bounds = array<i64: 4, 1>}, {pipeline_mode = #tpu.pipeline_mode<synchronous>, transform_indices = @transform_4, window_bounds = array<i64: 4, 1>}, {pipeline_mode = #tpu.pipeline_mode<synchronous>, transform_indices = @transform_5, window_bounds = array<i64: 9, 8, 4>}, {pipeline_mode = #tpu.pipeline_mode<synchronous>, transform_indices = @transform_6, window_bounds = array<i64: 9, 8, 4>}, {pipeline_mode = #tpu.pipeline_mode<synchronous>, transform_indices = @transform_7, window_bounds = array<i64: 9, 8, 8>}, {pipeline_mode = #tpu.pipeline_mode<synchronous>, transform_indices = @transform_8, window_bounds = array<i64: 8, 1>}, {pipeline_mode = #tpu.pipeline_mode<synchronous>, transform_indices = @transform_9, window_bounds = array<i64: 8, 1>}, {transform_indices = @transform_10, window_bounds = array<i64: 1, 8, 384>}]} {
    %c0 = arith.constant 0 : index
    %c0_0 = arith.constant 0 : index
    %c0_1 = arith.constant 0 : index
    %c0_2 = arith.constant 0 : index
    %0 = vector.load %arg1[%c0, %c0_0, %c0_1, %c0_2] : memref<1x1x4x422xf32, #tpu.memory_space<vmem>>, vector<1x1x4x422xf32>
    %1 = vector.shape_cast %0 : vector<1x1x4x422xf32> to vector<4x422xf32>
    %c0_3 = arith.constant 0 : index
    %c0_4 = arith.constant 0 : index
    %2 = vector.load %arg4[%c0_3, %c0_4] : memref<4x1xf32, #tpu.memory_space<vmem>>, vector<4x1xf32>
    %3 = vector.broadcast %2 : vector<4x1xf32> to vector<4x422xf32>
    %4 = arith.mulf %1, %3 : vector<4x422xf32>
    %c0_5 = arith.constant 0 : index
    %c0_6 = arith.constant 0 : index
    %5 = vector.load %arg5[%c0_5, %c0_6] : memref<4x1xf32, #tpu.memory_space<vmem>>, vector<4x1xf32>
    %6 = vector.broadcast %5 : vector<4x1xf32> to vector<4x422xf32>
    %7 = arith.addf %4, %6 : vector<4x422xf32>
    %cst = arith.constant 0.000000e+00 : f32
    %8 = vector.broadcast %cst : f32 to vector<4x422xf32>
    %9 = arith.maximumf %7, %8 : vector<4x422xf32>
    %c0_7 = arith.constant 0 : index
    %c0_8 = arith.constant 0 : index
    %c0_9 = arith.constant 0 : index
    %10 = vector.load %arg2[%c0_7, %c0_8, %c0_9] : memref<1x1x422xf32, #tpu.memory_space<vmem>>, vector<1x1x422xf32>
    %11 = vector.shape_cast %10 : vector<1x1x422xf32> to vector<1x422xf32>
    %12 = vector.broadcast %11 : vector<1x422xf32> to vector<4x422xf32>
    %13 = arith.mulf %9, %12 : vector<4x422xf32>
    %c0_10 = arith.constant 0 : index
    %c0_11 = arith.constant 0 : index
    %c0_12 = arith.constant 0 : index
    %14 = vector.load %arg12[%c0_10, %c0_11, %c0_12] : memref<1x4x422xf32, #tpu.memory_space<vmem>>, vector<1x4x422xf32>
    %15 = vector.shape_cast %14 : vector<1x4x422xf32> to vector<4x422xf32>
    %16 = vector.shape_cast %13 : vector<4x422xf32> to vector<1x4x422xf32>
    tpu.vector_store %arg12[%c0_10, %c0_11, %c0_12], %16 {strides = array<i32>} : memref<1x4x422xf32, #tpu.memory_space<vmem>>, vector<1x4x422xf32>,
    %cst_13 = arith.constant 0.000000e+00 : f32
    %17 = vector.broadcast %cst_13 : f32 to vector<8x384xf32>
    %cst_14 = arith.constant 0.000000e+00 : f32
    %18 = vector.broadcast %cst_14 : f32 to vector<8x384xf32>
    %c0_15 = arith.constant 0 : index
    %c0_16 = arith.constant 0 : index
    %c0_17 = arith.constant 0 : index
    %19 = vector.load %arg12[%c0_15, %c0_16, %c0_17] : memref<1x4x422xf32, #tpu.memory_space<vmem>>, vector<1x4x384xf32>
    %20 = vector.shape_cast %19 : vector<1x4x384xf32> to vector<4x384xf32>
    %c0_18 = arith.constant 0 : index
    %c0_19 = arith.constant 0 : index
    %c0_20 = arith.constant 0 : index
    %c0_21 = arith.constant 0 : index
    %21 = vector.load %arg1[%c0_18, %c0_19, %c0_20, %c0_21] : memref<1x1x4x422xf32, #tpu.memory_space<vmem>>, vector<1x1x4x384xf32>
    %22 = vector.shape_cast %21 : vector<1x1x4x384xf32> to vector<4x384xf32>
    %c0_22 = arith.constant 0 : index
    %c0_23 = arith.constant 0 : index
    %c0_24 = arith.constant 0 : index
    %23 = vector.load %arg6[%c0_22, %c0_23, %c0_24] : memref<9x8x4xf32, #tpu.memory_space<vmem>>, vector<1x8x4xf32>
    %24 = vector.shape_cast %23 : vector<1x8x4xf32> to vector<8x4xf32>
    %cst_25 = arith.constant dense<0.000000e+00> : vector<8x384xf32>
    %25 = tpu.matmul %24, %20, %cst_25 {dimension_numbers = #tpu.dot_dimension_numbers<[1], [0], [0], [1], [0, 0, 1, 1], [], []>} : vector<8x4xf32>, vector<4x384xf32>, vector<8x384xf32> -> vector<8x384xf32>
    %26 = arith.addf %17, %25 : vector<8x384xf32>
    %c0_26 = arith.constant 0 : index
    %c0_27 = arith.constant 0 : index
    %c0_28 = arith.constant 0 : index
    %27 = vector.load %arg7[%c0_26, %c0_27, %c0_28] : memref<9x8x4xf32, #tpu.memory_space<vmem>>, vector<1x8x4xf32>
    %28 = vector.shape_cast %27 : vector<1x8x4xf32> to vector<8x4xf32>
    %cst_29 = arith.constant dense<0.000000e+00> : vector<8x384xf32>
    %29 = tpu.matmul %28, %22, %cst_29 {dimension_numbers = #tpu.dot_dimension_numbers<[1], [0], [0], [1], [0, 0, 1, 1], [], []>} : vector<8x4xf32>, vector<4x384xf32>, vector<8x384xf32> -> vector<8x384xf32>
    %30 = arith.addf %18, %29 : vector<8x384xf32>
    %c0_30 = arith.constant 0 : index
    %c0_31 = arith.constant 0 : index
    %c1 = arith.constant 1 : index
    %31 = vector.load %arg12[%c0_30, %c0_31, %c1] : memref<1x4x422xf32, #tpu.memory_space<vmem>>, vector<1x4x384xf32>
    %32 = vector.shape_cast %31 : vector<1x4x384xf32> to vector<4x384xf32>
    %c0_32 = arith.constant 0 : index
    %c0_33 = arith.constant 0 : index
    %c0_34 = arith.constant 0 : index
    %c1_35 = arith.constant 1 : index
    %33 = vector.load %arg1[%c0_32, %c0_33, %c0_34, %c1_35] : memref<1x1x4x422xf32, #tpu.memory_space<vmem>>, vector<1x1x4x384xf32>
    %34 = vector.shape_cast %33 : vector<1x1x4x384xf32> to vector<4x384xf32>
    %c1_36 = arith.constant 1 : index
    %c0_37 = arith.constant 0 : index
    %c0_38 = arith.constant 0 : index
    %35 = vector.load %arg6[%c1_36, %c0_37, %c0_38] : memref<9x8x4xf32, #tpu.memory_space<vmem>>, vector<1x8x4xf32>
    %36 = vector.shape_cast %35 : vector<1x8x4xf32> to vector<8x4xf32>
    %cst_39 = arith.constant dense<0.000000e+00> : vector<8x384xf32>
    %37 = tpu.matmul %36, %32, %cst_39 {dimension_numbers = #tpu.dot_dimension_numbers<[1], [0], [0], [1], [0, 0, 1, 1], [], []>} : vector<8x4xf32>, vector<4x384xf32>, vector<8x384xf32> -> vector<8x384xf32>
    %38 = arith.addf %26, %37 : vector<8x384xf32>
    %c1_40 = arith.constant 1 : index
    %c0_41 = arith.constant 0 : index
    %c0_42 = arith.constant 0 : index
    %39 = vector.load %arg7[%c1_40, %c0_41, %c0_42] : memref<9x8x4xf32, #tpu.memory_space<vmem>>, vector<1x8x4xf32>
    %40 = vector.shape_cast %39 : vector<1x8x4xf32> to vector<8x4xf32>
    %cst_43 = arith.constant dense<0.000000e+00> : vector<8x384xf32>
    %41 = tpu.matmul %40, %34, %cst_43 {dimension_numbers = #tpu.dot_dimension_numbers<[1], [0], [0], [1], [0, 0, 1, 1], [], []>} : vector<8x4xf32>, vector<4x384xf32>, vector<8x384xf32> -> vector<8x384xf32>
    %42 = arith.addf %30, %41 : vector<8x384xf32>
    %c0_44 = arith.constant 0 : index
    %c0_45 = arith.constant 0 : index
    %c2 = arith.constant 2 : index
    %43 = vector.load %arg12[%c0_44, %c0_45, %c2] : memref<1x4x422xf32, #tpu.memory_space<vmem>>, vector<1x4x384xf32>
    %44 = vector.shape_cast %43 : vector<1x4x384xf32> to vector<4x384xf32>
    %c0_46 = arith.constant 0 : index
    %c0_47 = arith.constant 0 : index
    %c0_48 = arith.constant 0 : index
    %c2_49 = arith.constant 2 : index
    %45 = vector.load %arg1[%c0_46, %c0_47, %c0_48, %c2_49] : memref<1x1x4x422xf32, #tpu.memory_space<vmem>>, vector<1x1x4x384xf32>
    %46 = vector.shape_cast %45 : vector<1x1x4x384xf32> to vector<4x384xf32>
    %c2_50 = arith.constant 2 : index
    %c0_51 = arith.constant 0 : index
    %c0_52 = arith.constant 0 : index
    %47 = vector.load %arg6[%c2_50, %c0_51, %c0_52] : memref<9x8x4xf32, #tpu.memory_space<vmem>>, vector<1x8x4xf32>
    %48 = vector.shape_cast %47 : vector<1x8x4xf32> to vector<8x4xf32>
    %cst_53 = arith.constant dense<0.000000e+00> : vector<8x384xf32>
    %49 = tpu.matmul %48, %44, %cst_53 {dimension_numbers = #tpu.dot_dimension_numbers<[1], [0], [0], [1], [0, 0, 1, 1], [], []>} : vector<8x4xf32>, vector<4x384xf32>, vector<8x384xf32> -> vector<8x384xf32>
    %50 = arith.addf %38, %49 : vector<8x384xf32>
    %c2_54 = arith.constant 2 : index
    %c0_55 = arith.constant 0 : index
    %c0_56 = arith.constant 0 : index
    %51 = vector.load %arg7[%c2_54, %c0_55, %c0_56] : memref<9x8x4xf32, #tpu.memory_space<vmem>>, vector<1x8x4xf32>
    %52 = vector.shape_cast %51 : vector<1x8x4xf32> to vector<8x4xf32>
    %cst_57 = arith.constant dense<0.000000e+00> : vector<8x384xf32>
    %53 = tpu.matmul %52, %46, %cst_57 {dimension_numbers = #tpu.dot_dimension_numbers<[1], [0], [0], [1], [0, 0, 1, 1], [], []>} : vector<8x4xf32>, vector<4x384xf32>, vector<8x384xf32> -> vector<8x384xf32>
    %54 = arith.addf %42, %53 : vector<8x384xf32>
    %c0_58 = arith.constant 0 : index
    %c0_59 = arith.constant 0 : index
    %c18 = arith.constant 18 : index
    %55 = vector.load %arg12[%c0_58, %c0_59, %c18] : memref<1x4x422xf32, #tpu.memory_space<vmem>>, vector<1x4x384xf32>
    %56 = vector.shape_cast %55 : vector<1x4x384xf32> to vector<4x384xf32>
    %c0_60 = arith.constant 0 : index
    %c0_61 = arith.constant 0 : index
    %c0_62 = arith.constant 0 : index
    %c18_63 = arith.constant 18 : index
    %57 = vector.load %arg1[%c0_60, %c0_61, %c0_62, %c18_63] : memref<1x1x4x422xf32, #tpu.memory_space<vmem>>, vector<1x1x4x384xf32>
    %58 = vector.shape_cast %57 : vector<1x1x4x384xf32> to vector<4x384xf32>
    %c3 = arith.constant 3 : index
    %c0_64 = arith.constant 0 : index
    %c0_65 = arith.constant 0 : index
    %59 = vector.load %arg6[%c3, %c0_64, %c0_65] : memref<9x8x4xf32, #tpu.memory_space<vmem>>, vector<1x8x4xf32>
    %60 = vector.shape_cast %59 : vector<1x8x4xf32> to vector<8x4xf32>
    %cst_66 = arith.constant dense<0.000000e+00> : vector<8x384xf32>
    %61 = tpu.matmul %60, %56, %cst_66 {dimension_numbers = #tpu.dot_dimension_numbers<[1], [0], [0], [1], [0, 0, 1, 1], [], []>} : vector<8x4xf32>, vector<4x384xf32>, vector<8x384xf32> -> vector<8x384xf32>
    %62 = arith.addf %50, %61 : vector<8x384xf32>
    %c3_67 = arith.constant 3 : index
    %c0_68 = arith.constant 0 : index
    %c0_69 = arith.constant 0 : index
    %63 = vector.load %arg7[%c3_67, %c0_68, %c0_69] : memref<9x8x4xf32, #tpu.memory_space<vmem>>, vector<1x8x4xf32>
    %64 = vector.shape_cast %63 : vector<1x8x4xf32> to vector<8x4xf32>
    %cst_70 = arith.constant dense<0.000000e+00> : vector<8x384xf32>
    %65 = tpu.matmul %64, %58, %cst_70 {dimension_numbers = #tpu.dot_dimension_numbers<[1], [0], [0], [1], [0, 0, 1, 1], [], []>} : vector<8x4xf32>, vector<4x384xf32>, vector<8x384xf32> -> vector<8x384xf32>
    %66 = arith.addf %54, %65 : vector<8x384xf32>
    %c0_71 = arith.constant 0 : index
    %c0_72 = arith.constant 0 : index
    %c19 = arith.constant 19 : index
    %67 = vector.load %arg12[%c0_71, %c0_72, %c19] : memref<1x4x422xf32, #tpu.memory_space<vmem>>, vector<1x4x384xf32>
    %68 = vector.shape_cast %67 : vector<1x4x384xf32> to vector<4x384xf32>
    %c0_73 = arith.constant 0 : index
    %c0_74 = arith.constant 0 : index
    %c0_75 = arith.constant 0 : index
    %c19_76 = arith.constant 19 : index
    %69 = vector.load %arg1[%c0_73, %c0_74, %c0_75, %c19_76] : memref<1x1x4x422xf32, #tpu.memory_space<vmem>>, vector<1x1x4x384xf32>
    %70 = vector.shape_cast %69 : vector<1x1x4x384xf32> to vector<4x384xf32>
    %c4 = arith.constant 4 : index
    %c0_77 = arith.constant 0 : index
    %c0_78 = arith.constant 0 : index
    %71 = vector.load %arg6[%c4, %c0_77, %c0_78] : memref<9x8x4xf32, #tpu.memory_space<vmem>>, vector<1x8x4xf32>
    %72 = vector.shape_cast %71 : vector<1x8x4xf32> to vector<8x4xf32>
    %cst_79 = arith.constant dense<0.000000e+00> : vector<8x384xf32>
    %73 = tpu.matmul %72, %68, %cst_79 {dimension_numbers = #tpu.dot_dimension_numbers<[1], [0], [0], [1], [0, 0, 1, 1], [], []>} : vector<8x4xf32>, vector<4x384xf32>, vector<8x384xf32> -> vector<8x384xf32>
    %74 = arith.addf %62, %73 : vector<8x384xf32>
    %c4_80 = arith.constant 4 : index
    %c0_81 = arith.constant 0 : index
    %c0_82 = arith.constant 0 : index
    %75 = vector.load %arg7[%c4_80, %c0_81, %c0_82] : memref<9x8x4xf32, #tpu.memory_space<vmem>>, vector<1x8x4xf32>
    %76 = vector.shape_cast %75 : vector<1x8x4xf32> to vector<8x4xf32>
    %cst_83 = arith.constant dense<0.000000e+00> : vector<8x384xf32>
    %77 = tpu.matmul %76, %70, %cst_83 {dimension_numbers = #tpu.dot_dimension_numbers<[1], [0], [0], [1], [0, 0, 1, 1], [], []>} : vector<8x4xf32>, vector<4x384xf32>, vector<8x384xf32> -> vector<8x384xf32>
    %78 = arith.addf %66, %77 : vector<8x384xf32>
    %c0_84 = arith.constant 0 : index
    %c0_85 = arith.constant 0 : index
    %c20 = arith.constant 20 : index
    %79 = vector.load %arg12[%c0_84, %c0_85, %c20] : memref<1x4x422xf32, #tpu.memory_space<vmem>>, vector<1x4x384xf32>
    %80 = vector.shape_cast %79 : vector<1x4x384xf32> to vector<4x384xf32>
    %c0_86 = arith.constant 0 : index
    %c0_87 = arith.constant 0 : index
    %c0_88 = arith.constant 0 : index
    %c20_89 = arith.constant 20 : index
    %81 = vector.load %arg1[%c0_86, %c0_87, %c0_88, %c20_89] : memref<1x1x4x422xf32, #tpu.memory_space<vmem>>, vector<1x1x4x384xf32>
    %82 = vector.shape_cast %81 : vector<1x1x4x384xf32> to vector<4x384xf32>
    %c5 = arith.constant 5 : index
    %c0_90 = arith.constant 0 : index
    %c0_91 = arith.constant 0 : index
    %83 = vector.load %arg6[%c5, %c0_90, %c0_91] : memref<9x8x4xf32, #tpu.memory_space<vmem>>, vector<1x8x4xf32>
    %84 = vector.shape_cast %83 : vector<1x8x4xf32> to vector<8x4xf32>
    %cst_92 = arith.constant dense<0.000000e+00> : vector<8x384xf32>
    %85 = tpu.matmul %84, %80, %cst_92 {dimension_numbers = #tpu.dot_dimension_numbers<[1], [0], [0], [1], [0, 0, 1, 1], [], []>} : vector<8x4xf32>, vector<4x384xf32>, vector<8x384xf32> -> vector<8x384xf32>
    %86 = arith.addf %74, %85 : vector<8x384xf32>
    %c5_93 = arith.constant 5 : index
    %c0_94 = arith.constant 0 : index
    %c0_95 = arith.constant 0 : index
    %87 = vector.load %arg7[%c5_93, %c0_94, %c0_95] : memref<9x8x4xf32, #tpu.memory_space<vmem>>, vector<1x8x4xf32>
    %88 = vector.shape_cast %87 : vector<1x8x4xf32> to vector<8x4xf32>
    %cst_96 = arith.constant dense<0.000000e+00> : vector<8x384xf32>
    %89 = tpu.matmul %88, %82, %cst_96 {dimension_numbers = #tpu.dot_dimension_numbers<[1], [0], [0], [1], [0, 0, 1, 1], [], []>} : vector<8x4xf32>, vector<4x384xf32>, vector<8x384xf32> -> vector<8x384xf32>
    %90 = arith.addf %78, %89 : vector<8x384xf32>
    %c0_97 = arith.constant 0 : index
    %c0_98 = arith.constant 0 : index
    %c36 = arith.constant 36 : index
    %91 = vector.load %arg12[%c0_97, %c0_98, %c36] : memref<1x4x422xf32, #tpu.memory_space<vmem>>, vector<1x4x384xf32>
    %92 = vector.shape_cast %91 : vector<1x4x384xf32> to vector<4x384xf32>
    %c0_99 = arith.constant 0 : index
    %c0_100 = arith.constant 0 : index
    %c0_101 = arith.constant 0 : index
    %c36_102 = arith.constant 36 : index
    %93 = vector.load %arg1[%c0_99, %c0_100, %c0_101, %c36_102] : memref<1x1x4x422xf32, #tpu.memory_space<vmem>>, vector<1x1x4x384xf32>
    %94 = vector.shape_cast %93 : vector<1x1x4x384xf32> to vector<4x384xf32>
    %c6 = arith.constant 6 : index
    %c0_103 = arith.constant 0 : index
    %c0_104 = arith.constant 0 : index
    %95 = vector.load %arg6[%c6, %c0_103, %c0_104] : memref<9x8x4xf32, #tpu.memory_space<vmem>>, vector<1x8x4xf32>
    %96 = vector.shape_cast %95 : vector<1x8x4xf32> to vector<8x4xf32>
    %cst_105 = arith.constant dense<0.000000e+00> : vector<8x384xf32>
    %97 = tpu.matmul %96, %92, %cst_105 {dimension_numbers = #tpu.dot_dimension_numbers<[1], [0], [0], [1], [0, 0, 1, 1], [], []>} : vector<8x4xf32>, vector<4x384xf32>, vector<8x384xf32> -> vector<8x384xf32>
    %98 = arith.addf %86, %97 : vector<8x384xf32>
    %c6_106 = arith.constant 6 : index
    %c0_107 = arith.constant 0 : index
    %c0_108 = arith.constant 0 : index
    %99 = vector.load %arg7[%c6_106, %c0_107, %c0_108] : memref<9x8x4xf32, #tpu.memory_space<vmem>>, vector<1x8x4xf32>
    %100 = vector.shape_cast %99 : vector<1x8x4xf32> to vector<8x4xf32>
    %cst_109 = arith.constant dense<0.000000e+00> : vector<8x384xf32>
    %101 = tpu.matmul %100, %94, %cst_109 {dimension_numbers = #tpu.dot_dimension_numbers<[1], [0], [0], [1], [0, 0, 1, 1], [], []>} : vector<8x4xf32>, vector<4x384xf32>, vector<8x384xf32> -> vector<8x384xf32>
    %102 = arith.addf %90, %101 : vector<8x384xf32>
    %c0_110 = arith.constant 0 : index
    %c0_111 = arith.constant 0 : index
    %c37 = arith.constant 37 : index
    %103 = vector.load %arg12[%c0_110, %c0_111, %c37] : memref<1x4x422xf32, #tpu.memory_space<vmem>>, vector<1x4x384xf32>
    %104 = vector.shape_cast %103 : vector<1x4x384xf32> to vector<4x384xf32>
    %c0_112 = arith.constant 0 : index
    %c0_113 = arith.constant 0 : index
    %c0_114 = arith.constant 0 : index
    %c37_115 = arith.constant 37 : index
    %105 = vector.load %arg1[%c0_112, %c0_113, %c0_114, %c37_115] : memref<1x1x4x422xf32, #tpu.memory_space<vmem>>, vector<1x1x4x384xf32>
    %106 = vector.shape_cast %105 : vector<1x1x4x384xf32> to vector<4x384xf32>
    %c7 = arith.constant 7 : index
    %c0_116 = arith.constant 0 : index
    %c0_117 = arith.constant 0 : index
    %107 = vector.load %arg6[%c7, %c0_116, %c0_117] : memref<9x8x4xf32, #tpu.memory_space<vmem>>, vector<1x8x4xf32>
    %108 = vector.shape_cast %107 : vector<1x8x4xf32> to vector<8x4xf32>
    %cst_118 = arith.constant dense<0.000000e+00> : vector<8x384xf32>
    %109 = tpu.matmul %108, %104, %cst_118 {dimension_numbers = #tpu.dot_dimension_numbers<[1], [0], [0], [1], [0, 0, 1, 1], [], []>} : vector<8x4xf32>, vector<4x384xf32>, vector<8x384xf32> -> vector<8x384xf32>
    %110 = arith.addf %98, %109 : vector<8x384xf32>
    %c7_119 = arith.constant 7 : index
    %c0_120 = arith.constant 0 : index
    %c0_121 = arith.constant 0 : index
    %111 = vector.load %arg7[%c7_119, %c0_120, %c0_121] : memref<9x8x4xf32, #tpu.memory_space<vmem>>, vector<1x8x4xf32>
    %112 = vector.shape_cast %111 : vector<1x8x4xf32> to vector<8x4xf32>
    %cst_122 = arith.constant dense<0.000000e+00> : vector<8x384xf32>
    %113 = tpu.matmul %112, %106, %cst_122 {dimension_numbers = #tpu.dot_dimension_numbers<[1], [0], [0], [1], [0, 0, 1, 1], [], []>} : vector<8x4xf32>, vector<4x384xf32>, vector<8x384xf32> -> vector<8x384xf32>
    %114 = arith.addf %102, %113 : vector<8x384xf32>
    %c0_123 = arith.constant 0 : index
    %c0_124 = arith.constant 0 : index
    %c38 = arith.constant 38 : index
    %115 = vector.load %arg12[%c0_123, %c0_124, %c38] : memref<1x4x422xf32, #tpu.memory_space<vmem>>, vector<1x4x384xf32>
    %116 = vector.shape_cast %115 : vector<1x4x384xf32> to vector<4x384xf32>
    %c0_125 = arith.constant 0 : index
    %c0_126 = arith.constant 0 : index
    %c0_127 = arith.constant 0 : index
    %c38_128 = arith.constant 38 : index
    %117 = vector.load %arg1[%c0_125, %c0_126, %c0_127, %c38_128] : memref<1x1x4x422xf32, #tpu.memory_space<vmem>>, vector<1x1x4x384xf32>
    %118 = vector.shape_cast %117 : vector<1x1x4x384xf32> to vector<4x384xf32>
    %c8 = arith.constant 8 : index
    %c0_129 = arith.constant 0 : index
    %c0_130 = arith.constant 0 : index
    %119 = vector.load %arg6[%c8, %c0_129, %c0_130] : memref<9x8x4xf32, #tpu.memory_space<vmem>>, vector<1x8x4xf32>
    %120 = vector.shape_cast %119 : vector<1x8x4xf32> to vector<8x4xf32>
    %cst_131 = arith.constant dense<0.000000e+00> : vector<8x384xf32>
    %121 = tpu.matmul %120, %116, %cst_131 {dimension_numbers = #tpu.dot_dimension_numbers<[1], [0], [0], [1], [0, 0, 1, 1], [], []>} : vector<8x4xf32>, vector<4x384xf32>, vector<8x384xf32> -> vector<8x384xf32>
    %122 = arith.addf %110, %121 : vector<8x384xf32>
    %c8_132 = arith.constant 8 : index
    %c0_133 = arith.constant 0 : index
    %c0_134 = arith.constant 0 : index
    %123 = vector.load %arg7[%c8_132, %c0_133, %c0_134] : memref<9x8x4xf32, #tpu.memory_space<vmem>>, vector<1x8x4xf32>
    %124 = vector.shape_cast %123 : vector<1x8x4xf32> to vector<8x4xf32>
    %cst_135 = arith.constant dense<0.000000e+00> : vector<8x384xf32>
    %125 = tpu.matmul %124, %118, %cst_135 {dimension_numbers = #tpu.dot_dimension_numbers<[1], [0], [0], [1], [0, 0, 1, 1], [], []>} : vector<8x4xf32>, vector<4x384xf32>, vector<8x384xf32> -> vector<8x384xf32>
    %126 = arith.addf %114, %125 : vector<8x384xf32>
    %c0_136 = arith.constant 0 : index
    %c0_137 = arith.constant 0 : index
    %127 = vector.load %arg9[%c0_136, %c0_137] : memref<8x1xf32, #tpu.memory_space<vmem>>, vector<8x1xf32>
    %128 = vector.broadcast %127 : vector<8x1xf32> to vector<8x384xf32>
    %129 = arith.addf %122, %128 : vector<8x384xf32>
    %cst_138 = arith.constant 0.000000e+00 : f32
    %130 = vector.broadcast %cst_138 : f32 to vector<8x384xf32>
    %131 = arith.maximumf %129, %130 : vector<8x384xf32>
    %c0_139 = arith.constant 0 : index
    %c0_140 = arith.constant 0 : index
    %132 = vector.load %arg3[%c0_139, %c0_140] : memref<1x384xf32, #tpu.memory_space<vmem>>, vector<1x384xf32>
    %133 = vector.broadcast %132 : vector<1x384xf32> to vector<8x384xf32>
    %134 = arith.mulf %131, %133 : vector<8x384xf32>
    %cst_141 = arith.constant 0.000000e+00 : f32
    %135 = vector.broadcast %cst_141 : f32 to vector<8x422xf32>
    %c0_142 = arith.constant 0 : index
    %c0_143 = arith.constant 0 : index
    %136 = vector.load %arg13[%c0_142, %c0_143] : memref<8x422xf32, #tpu.memory_space<vmem>>, vector<8x422xf32>
    tpu.vector_store %arg13[%c0_142, %c0_143], %135 {strides = array<i32>} : memref<8x422xf32, #tpu.memory_space<vmem>>, vector<8x422xf32>,
    %c0_144 = arith.constant 0 : index
    %c19_145 = arith.constant 19 : index
    %137 = vector.load %arg13[%c0_144, %c19_145] : memref<8x422xf32, #tpu.memory_space<vmem>>, vector<8x384xf32>
    tpu.vector_store %arg13[%c0_144, %c19_145], %134 {strides = array<i32>} : memref<8x422xf32, #tpu.memory_space<vmem>>, vector<8x384xf32>,
    %c0_146 = arith.constant 0 : index
    %c0_147 = arith.constant 0 : index
    %c0_148 = arith.constant 0 : index
    %138 = vector.load %arg8[%c0_146, %c0_147, %c0_148] : memref<9x8x8xf32, #tpu.memory_space<vmem>>, vector<1x8x8xf32>
    %139 = vector.shape_cast %138 : vector<1x8x8xf32> to vector<8x8xf32>
    %c0_149 = arith.constant 0 : index
    %c0_150 = arith.constant 0 : index
    %140 = vector.load %arg13[%c0_149, %c0_150] : memref<8x422xf32, #tpu.memory_space<vmem>>, vector<8x384xf32>
    %cst_151 = arith.constant dense<0.000000e+00> : vector<8x384xf32>
    %141 = tpu.matmul %139, %140, %cst_151 {dimension_numbers = #tpu.dot_dimension_numbers<[1], [0], [0], [1], [0, 0, 1, 1], [], []>} : vector<8x8xf32>, vector<8x384xf32>, vector<8x384xf32> -> vector<8x384xf32>
    %142 = arith.addf %126, %141 : vector<8x384xf32>
    %c1_152 = arith.constant 1 : index
    %c0_153 = arith.constant 0 : index
    %c0_154 = arith.constant 0 : index
    %143 = vector.load %arg8[%c1_152, %c0_153, %c0_154] : memref<9x8x8xf32, #tpu.memory_space<vmem>>, vector<1x8x8xf32>
    %144 = vector.shape_cast %143 : vector<1x8x8xf32> to vector<8x8xf32>
    %c0_155 = arith.constant 0 : index
    %c1_156 = arith.constant 1 : index
    %145 = vector.load %arg13[%c0_155, %c1_156] : memref<8x422xf32, #tpu.memory_space<vmem>>, vector<8x384xf32>
    %cst_157 = arith.constant dense<0.000000e+00> : vector<8x384xf32>
    %146 = tpu.matmul %144, %145, %cst_157 {dimension_numbers = #tpu.dot_dimension_numbers<[1], [0], [0], [1], [0, 0, 1, 1], [], []>} : vector<8x8xf32>, vector<8x384xf32>, vector<8x384xf32> -> vector<8x384xf32>
    %147 = arith.addf %142, %146 : vector<8x384xf32>
    %c2_158 = arith.constant 2 : index
    %c0_159 = arith.constant 0 : index
    %c0_160 = arith.constant 0 : index
    %148 = vector.load %arg8[%c2_158, %c0_159, %c0_160] : memref<9x8x8xf32, #tpu.memory_space<vmem>>, vector<1x8x8xf32>
    %149 = vector.shape_cast %148 : vector<1x8x8xf32> to vector<8x8xf32>
    %c0_161 = arith.constant 0 : index
    %c2_162 = arith.constant 2 : index
    %150 = vector.load %arg13[%c0_161, %c2_162] : memref<8x422xf32, #tpu.memory_space<vmem>>, vector<8x384xf32>
    %cst_163 = arith.constant dense<0.000000e+00> : vector<8x384xf32>
    %151 = tpu.matmul %149, %150, %cst_163 {dimension_numbers = #tpu.dot_dimension_numbers<[1], [0], [0], [1], [0, 0, 1, 1], [], []>} : vector<8x8xf32>, vector<8x384xf32>, vector<8x384xf32> -> vector<8x384xf32>
    %152 = arith.addf %147, %151 : vector<8x384xf32>
    %c3_164 = arith.constant 3 : index
    %c0_165 = arith.constant 0 : index
    %c0_166 = arith.constant 0 : index
    %153 = vector.load %arg8[%c3_164, %c0_165, %c0_166] : memref<9x8x8xf32, #tpu.memory_space<vmem>>, vector<1x8x8xf32>
    %154 = vector.shape_cast %153 : vector<1x8x8xf32> to vector<8x8xf32>
    %c0_167 = arith.constant 0 : index
    %c18_168 = arith.constant 18 : index
    %155 = vector.load %arg13[%c0_167, %c18_168] : memref<8x422xf32, #tpu.memory_space<vmem>>, vector<8x384xf32>
    %cst_169 = arith.constant dense<0.000000e+00> : vector<8x384xf32>
    %156 = tpu.matmul %154, %155, %cst_169 {dimension_numbers = #tpu.dot_dimension_numbers<[1], [0], [0], [1], [0, 0, 1, 1], [], []>} : vector<8x8xf32>, vector<8x384xf32>, vector<8x384xf32> -> vector<8x384xf32>
    %157 = arith.addf %152, %156 : vector<8x384xf32>
    %c4_170 = arith.constant 4 : index
    %c0_171 = arith.constant 0 : index
    %c0_172 = arith.constant 0 : index
    %158 = vector.load %arg8[%c4_170, %c0_171, %c0_172] : memref<9x8x8xf32, #tpu.memory_space<vmem>>, vector<1x8x8xf32>
    %159 = vector.shape_cast %158 : vector<1x8x8xf32> to vector<8x8xf32>
    %c0_173 = arith.constant 0 : index
    %c19_174 = arith.constant 19 : index
    %160 = vector.load %arg13[%c0_173, %c19_174] : memref<8x422xf32, #tpu.memory_space<vmem>>, vector<8x384xf32>
    %cst_175 = arith.constant dense<0.000000e+00> : vector<8x384xf32>
    %161 = tpu.matmul %159, %160, %cst_175 {dimension_numbers = #tpu.dot_dimension_numbers<[1], [0], [0], [1], [0, 0, 1, 1], [], []>} : vector<8x8xf32>, vector<8x384xf32>, vector<8x384xf32> -> vector<8x384xf32>
    %162 = arith.addf %157, %161 : vector<8x384xf32>
    %c5_176 = arith.constant 5 : index
    %c0_177 = arith.constant 0 : index
    %c0_178 = arith.constant 0 : index
    %163 = vector.load %arg8[%c5_176, %c0_177, %c0_178] : memref<9x8x8xf32, #tpu.memory_space<vmem>>, vector<1x8x8xf32>
    %164 = vector.shape_cast %163 : vector<1x8x8xf32> to vector<8x8xf32>
    %c0_179 = arith.constant 0 : index
    %c20_180 = arith.constant 20 : index
    %165 = vector.load %arg13[%c0_179, %c20_180] : memref<8x422xf32, #tpu.memory_space<vmem>>, vector<8x384xf32>
    %cst_181 = arith.constant dense<0.000000e+00> : vector<8x384xf32>
    %166 = tpu.matmul %164, %165, %cst_181 {dimension_numbers = #tpu.dot_dimension_numbers<[1], [0], [0], [1], [0, 0, 1, 1], [], []>} : vector<8x8xf32>, vector<8x384xf32>, vector<8x384xf32> -> vector<8x384xf32>
    %167 = arith.addf %162, %166 : vector<8x384xf32>
    %c6_182 = arith.constant 6 : index
    %c0_183 = arith.constant 0 : index
    %c0_184 = arith.constant 0 : index
    %168 = vector.load %arg8[%c6_182, %c0_183, %c0_184] : memref<9x8x8xf32, #tpu.memory_space<vmem>>, vector<1x8x8xf32>
    %169 = vector.shape_cast %168 : vector<1x8x8xf32> to vector<8x8xf32>
    %c0_185 = arith.constant 0 : index
    %c36_186 = arith.constant 36 : index
    %170 = vector.load %arg13[%c0_185, %c36_186] : memref<8x422xf32, #tpu.memory_space<vmem>>, vector<8x384xf32>
    %cst_187 = arith.constant dense<0.000000e+00> : vector<8x384xf32>
    %171 = tpu.matmul %169, %170, %cst_187 {dimension_numbers = #tpu.dot_dimension_numbers<[1], [0], [0], [1], [0, 0, 1, 1], [], []>} : vector<8x8xf32>, vector<8x384xf32>, vector<8x384xf32> -> vector<8x384xf32>
    %172 = arith.addf %167, %171 : vector<8x384xf32>
    %c7_188 = arith.constant 7 : index
    %c0_189 = arith.constant 0 : index
    %c0_190 = arith.constant 0 : index
    %173 = vector.load %arg8[%c7_188, %c0_189, %c0_190] : memref<9x8x8xf32, #tpu.memory_space<vmem>>, vector<1x8x8xf32>
    %174 = vector.shape_cast %173 : vector<1x8x8xf32> to vector<8x8xf32>
    %c0_191 = arith.constant 0 : index
    %c37_192 = arith.constant 37 : index
    %175 = vector.load %arg13[%c0_191, %c37_192] : memref<8x422xf32, #tpu.memory_space<vmem>>, vector<8x384xf32>
    %cst_193 = arith.constant dense<0.000000e+00> : vector<8x384xf32>
    %176 = tpu.matmul %174, %175, %cst_193 {dimension_numbers = #tpu.dot_dimension_numbers<[1], [0], [0], [1], [0, 0, 1, 1], [], []>} : vector<8x8xf32>, vector<8x384xf32>, vector<8x384xf32> -> vector<8x384xf32>
    %177 = arith.addf %172, %176 : vector<8x384xf32>
    %c8_194 = arith.constant 8 : index
    %c0_195 = arith.constant 0 : index
    %c0_196 = arith.constant 0 : index
    %178 = vector.load %arg8[%c8_194, %c0_195, %c0_196] : memref<9x8x8xf32, #tpu.memory_space<vmem>>, vector<1x8x8xf32>
    %179 = vector.shape_cast %178 : vector<1x8x8xf32> to vector<8x8xf32>
    %c0_197 = arith.constant 0 : index
    %c38_198 = arith.constant 38 : index
    %180 = vector.load %arg13[%c0_197, %c38_198] : memref<8x422xf32, #tpu.memory_space<vmem>>, vector<8x384xf32>
    %cst_199 = arith.constant dense<0.000000e+00> : vector<8x384xf32>
    %181 = tpu.matmul %179, %180, %cst_199 {dimension_numbers = #tpu.dot_dimension_numbers<[1], [0], [0], [1], [0, 0, 1, 1], [], []>} : vector<8x8xf32>, vector<8x384xf32>, vector<8x384xf32> -> vector<8x384xf32>
    %182 = arith.addf %177, %181 : vector<8x384xf32>
    %c0_200 = arith.constant 0 : index
    %c0_201 = arith.constant 0 : index
    %183 = vector.load %arg10[%c0_200, %c0_201] : memref<8x1xf32, #tpu.memory_space<vmem>>, vector<8x1xf32>
    %184 = vector.broadcast %183 : vector<8x1xf32> to vector<8x384xf32>
    %185 = arith.addf %182, %184 : vector<8x384xf32>
    %c0_202 = arith.constant 0 : index
    %c0_203 = arith.constant 0 : index
    %c0_204 = arith.constant 0 : index
    %186 = vector.load %arg11[%c0_202, %c0_203, %c0_204] : memref<1x8x384xf32, #tpu.memory_space<vmem>>, vector<1x8x384xf32>
    %187 = vector.shape_cast %186 : vector<1x8x384xf32> to vector<8x384xf32>
    %188 = vector.shape_cast %185 : vector<8x384xf32> to vector<1x8x384xf32>
    tpu.vector_store %arg11[%c0_202, %c0_203, %c0_204], %188 {strides = array<i32>} : memref<1x8x384xf32, #tpu.memory_space<vmem>>, vector<1x8x384xf32>,
    return
  }
  func.func @transform_0(%arg0: i32) -> (i32, i32, i32, i32) {
    %c0_i32 = arith.constant 0 : i32
    %c0_i32_0 = arith.constant 0 : i32
    %c0_i32_1 = arith.constant 0 : i32
    %c0_i32_2 = arith.constant 0 : i32
    return %arg0, %c0_i32, %c0_i32_0, %c0_i32_1 : i32, i32, i32, i32
  }
  func.func @transform_1(%arg0: i32) -> (i32, i32, i32) {
    %c0_i32 = arith.constant 0 : i32
    %c0_i32_0 = arith.constant 0 : i32
    %c0_i32_1 = arith.constant 0 : i32
    %c0_i32_2 = arith.constant 0 : i32
    return %c0_i32, %c0_i32_0, %c0_i32_1 : i32, i32, i32
  }
  func.func @transform_2(%arg0: i32) -> (i32, i32) {
    %c0_i32 = arith.constant 0 : i32
    %c0_i32_0 = arith.constant 0 : i32
    %c0_i32_1 = arith.constant 0 : i32
    return %c0_i32, %c0_i32_0 : i32, i32
  }
  func.func @transform_3(%arg0: i32) -> (i32, i32) {
    %c0_i32 = arith.constant 0 : i32
    %c0_i32_0 = arith.constant 0 : i32
    %c0_i32_1 = arith.constant 0 : i32
    return %c0_i32, %c0_i32_0 : i32, i32
  }
  func.func @transform_4(%arg0: i32) -> (i32, i32) {
    %c0_i32 = arith.constant 0 : i32
    %c0_i32_0 = arith.constant 0 : i32
    %c0_i32_1 = arith.constant 0 : i32
    return %c0_i32, %c0_i32_0 : i32, i32
  }
  func.func @transform_5(%arg0: i32) -> (i32, i32, i32) {
    %c0_i32 = arith.constant 0 : i32
    %c0_i32_0 = arith.constant 0 : i32
    %c0_i32_1 = arith.constant 0 : i32
    %c0_i32_2 = arith.constant 0 : i32
    return %c0_i32, %c0_i32_0, %c0_i32_1 : i32, i32, i32
  }
  func.func @transform_6(%arg0: i32) -> (i32, i32, i32) {
    %c0_i32 = arith.constant 0 : i32
    %c0_i32_0 = arith.constant 0 : i32
    %c0_i32_1 = arith.constant 0 : i32
    %c0_i32_2 = arith.constant 0 : i32
    return %c0_i32, %c0_i32_0, %c0_i32_1 : i32, i32, i32
  }
  func.func @transform_7(%arg0: i32) -> (i32, i32, i32) {
    %c0_i32 = arith.constant 0 : i32
    %c0_i32_0 = arith.constant 0 : i32
    %c0_i32_1 = arith.constant 0 : i32
    %c0_i32_2 = arith.constant 0 : i32
    return %c0_i32, %c0_i32_0, %c0_i32_1 : i32, i32, i32
  }
  func.func @transform_8(%arg0: i32) -> (i32, i32) {
    %c0_i32 = arith.constant 0 : i32
    %c0_i32_0 = arith.constant 0 : i32
    %c0_i32_1 = arith.constant 0 : i32
    return %c0_i32, %c0_i32_0 : i32, i32
  }
  func.func @transform_9(%arg0: i32) -> (i32, i32) {
    %c0_i32 = arith.constant 0 : i32
    %c0_i32_0 = arith.constant 0 : i32
    %c0_i32_1 = arith.constant 0 : i32
    return %c0_i32, %c0_i32_0 : i32, i32
  }
  func.func @transform_10(%arg0: i32) -> (i32, i32, i32) {
    %c0_i32 = arith.constant 0 : i32
    %c0_i32_0 = arith.constant 0 : i32
    %c0_i32_1 = arith.constant 0 : i32
    return %arg0, %c0_i32, %c0_i32_0 : i32, i32, i32
  }
}

</mosaic_0001>

<llo_original>
// kernel: tpu_custom_call.1
$region0: #{tpu_custom_call.1}
  #allocation0 [shape = 'u32[]', space=smem, size = 0x4, offset = 0x4, fixed_abs, tag = 'smem constant byte address 0x4 - core index']
  #allocation1 [shape = 'u32[144,128]{1,0:T(1,128)}', space=vmem, size = 0x12000, scoped, tag = 'internal scratch']
  #allocation2 [shape = 'f32[1,4,422]{2,1,0:T(4,128)}', space=vmem, size = 0x2000, scoped, tag = 'scratch operand']
  #allocation3 [shape = 'f32[8,422]{1,0:T(8,128)}', space=vmem, size = 0x4000, scoped, tag = 'scratch operand']
  %s0 = inlined_call_operand.vmem [shape: f32[2,1,4,422], index: 0, kind: input, shape index: {}]
  %s1 = inlined_call_operand.vmem [shape: f32[1,1,422], index: 1, kind: input, shape index: {}]
  %s2 = inlined_call_operand.vmem [shape: f32[1,384], index: 2, kind: input, shape index: {}]
  %s3 = inlined_call_operand.vmem [shape: f32[4,1], index: 3, kind: input, shape index: {}]
  %s4 = inlined_call_operand.vmem [shape: f32[4,1], index: 4, kind: input, shape index: {}]
  %s5 = inlined_call_operand.vmem [shape: f32[9,8,4], index: 5, kind: input, shape index: {}]
  %s6 = inlined_call_operand.vmem [shape: f32[9,8,4], index: 6, kind: input, shape index: {}]
  %s7 = inlined_call_operand.vmem [shape: f32[9,8,8], index: 7, kind: input, shape index: {}]
  %s8 = inlined_call_operand.vmem [shape: f32[8,1], index: 8, kind: input, shape index: {}]
  %s9 = inlined_call_operand.vmem [shape: f32[8,1], index: 9, kind: input, shape index: {}]
  %s10 = inlined_call_operand.hbm [shape: f32[2,8,384], index: 10, kind: output, shape index: {}]
  %s11 = sld [smem:[#allocation0]]
  $region73: #{tpu_custom_call.1} parent=0
    _
  %s13 = ssub.s32 1, %s11
  %s14 = scalar_select 0, %s13, %s11
  $region1: #{tpu_custom_call.1} parent=0
    #allocation4 [shape = 'u8[24576]{0}', space=vmem, size = 0x6000, scoped, tag = 'output window, operand 0']
    #allocation5 [shape = 's32[2]{0}', space=sflag, size = 0x8, scoped, tag = 'scoped memory for tpu_custom_call.1']
    %15 = vsyncpa [#allocation5], 0
    %s16 = scalar_lea.sflag [#allocation5], 1
    %17 = vsyncpa %s16, 0
    loop: start=0, step=1, limit=4
    $region2: #{tpu_custom_call.1} parent=1 // loop_pre_header
      _
    $region3: #{tpu_custom_call.1} parent=1 // loop_header
      %s19 = sphi 0, %s23
      %p20 = scmp.ge.s32.totalorder %s19, 4
      %s29 = sphi 0, %s31
      %s32 = sphi 0, %s29
      %s33 = sphi 0, %s32
      %s49 = sphi 0, %s33
      %s53 = sphi 0, %s53
      %s55 = sphi 0, %s53
      %s56 = sphi 0, %s55
      %s70 = sphi 0, %s56
      %s74 = sphi 0, %s74
      %s76 = sphi 0, %s74
      %s77 = sphi 0, %s76
      %s91 = sphi 0, %s77
      %s95 = sphi 0, %s95
      %s97 = sphi 0, %s95
      %s98 = sphi 0, %s97
      %s112 = sphi 0, %s98
      %s116 = sphi 0, %s116
      %s118 = sphi 0, %s116
      %s119 = sphi 0, %s118
      %s133 = sphi 0, %s119
      %s137 = sphi 0, %s137
      %s139 = sphi 0, %s137
      %s140 = sphi 0, %s139
      %s154 = sphi 0, %s140
      %s158 = sphi 0, %s158
      %s160 = sphi 0, %s158
      %s161 = sphi 0, %s160
      %s175 = sphi 0, %s161
      %s179 = sphi 0, %s179
      %s181 = sphi 0, %s179
      %s182 = sphi 0, %s181
      %s196 = sphi 0, %s182
      %s200 = sphi 0, %s200
      %s202 = sphi 0, %s200
      %s203 = sphi 0, %s202
      %s217 = sphi 0, %s203
      %s221 = sphi 0, %s221
      %s223 = sphi 0, %s221
      %s224 = sphi 0, %s223
      %s238 = sphi 0, %s224
      %s244 = sphi 0, %s246
      %s247 = sphi 0, %s244
      %s248 = sphi 0, %s247
      %s264 = sphi 0, %s248
    $region4: #{tpu_custom_call.1} parent=1 // loop_header_branch
      %22 = sbr.rel (%p20) target = $region8
    $region5: #{tpu_custom_call.1} parent=1 // loop_body
      %s24 = ssub.s32 %s19, 1
      %s25 = ssub.s32 %s19, 2
      %s26 = sadd.s32 %s19, 1
      %s27 = ssub.s32 %s19, %s26
      %p28 = scmp.eq.s32.totalorder %s27, 0
      %s30 = sadd.s32 %s29, 1
      %s31 = scalar_select %p28, %s29, %s30
      %p34 = pneg %p28
      %p35 = scmp.eq.s32.totalorder %s19, 1
      %p36 = por %p34, %p35
      %p37 = scmp.ne.s32.totalorder %s29, %s32
      %p38 = scmp.eq.s32.totalorder %s19, 0
      %p39 = por %p37, %p38
      %p40 = scmp.ne.s32.totalorder %s29, %s32
      %p41 = scmp.eq.s32.totalorder %s24, 1
      %p42 = por %p40, %p41
      %p43 = scmp.ne.s32.totalorder %s32, %s33
      %p44 = scmp.eq.s32.totalorder %s24, 0
      %p45 = por %p43, %p44
      %p46 = scmp.ne.s32.totalorder %s32, %s33
      %p47 = scmp.eq.s32.totalorder %s25, 1
      %p48 = por %p46, %p47
      %p50 = scmp.ne.s32.totalorder %s33, %s49
      %p51 = scmp.eq.s32.totalorder %s25, 0
      %p52 = por %p50, %p51
      %s54 = sadd.s32 %s53, 1
      %p57 = scmp.eq.s32.totalorder %s19, 1
      %p58 = scmp.ne.s32.totalorder %s53, %s55
      %p59 = scmp.eq.s32.totalorder %s19, 0
      %p60 = por %p58, %p59
      %p61 = scmp.ne.s32.totalorder %s53, %s55
      %p62 = scmp.eq.s32.totalorder %s24, 1
      %p63 = por %p61, %p62
      %p64 = scmp.ne.s32.totalorder %s55, %s56
      %p65 = scmp.eq.s32.totalorder %s24, 0
      %p66 = por %p64, %p65
      %p67 = scmp.ne.s32.totalorder %s55, %s56
      %p68 = scmp.eq.s32.totalorder %s25, 1
      %p69 = por %p67, %p68
      %p71 = scmp.ne.s32.totalorder %s56, %s70
      %p72 = scmp.eq.s32.totalorder %s25, 0
      %p73 = por %p71, %p72
      %s75 = sadd.s32 %s74, 1
      %p78 = scmp.eq.s32.totalorder %s19, 1
      %p79 = scmp.ne.s32.totalorder %s74, %s76
      %p80 = scmp.eq.s32.totalorder %s19, 0
      %p81 = por %p79, %p80
      %p82 = scmp.ne.s32.totalorder %s74, %s76
      %p83 = scmp.eq.s32.totalorder %s24, 1
      %p84 = por %p82, %p83
      %p85 = scmp.ne.s32.totalorder %s76, %s77
      %p86 = scmp.eq.s32.totalorder %s24, 0
      %p87 = por %p85, %p86
      %p88 = scmp.ne.s32.totalorder %s76, %s77
      %p89 = scmp.eq.s32.totalorder %s25, 1
      %p90 = por %p88, %p89
      %p92 = scmp.ne.s32.totalorder %s77, %s91
      %p93 = scmp.eq.s32.totalorder %s25, 0
      %p94 = por %p92, %p93
      %s96 = sadd.s32 %s95, 1
      %p99 = scmp.eq.s32.totalorder %s19, 1
      %p100 = scmp.ne.s32.totalorder %s95, %s97
      %p101 = scmp.eq.s32.totalorder %s19, 0
      %p102 = por %p100, %p101
      %p103 = scmp.ne.s32.totalorder %s95, %s97
      %p104 = scmp.eq.s32.totalorder %s24, 1
      %p105 = por %p103, %p104
      %p106 = scmp.ne.s32.totalorder %s97, %s98
      %p107 = scmp.eq.s32.totalorder %s24, 0
      %p108 = por %p106, %p107
      %p109 = scmp.ne.s32.totalorder %s97, %s98
      %p110 = scmp.eq.s32.totalorder %s25, 1
      %p111 = por %p109, %p110
      %p113 = scmp.ne.s32.totalorder %s98, %s112
      %p114 = scmp.eq.s32.totalorder %s25, 0
      %p115 = por %p113, %p114
      %s117 = sadd.s32 %s116, 1
      %p120 = scmp.eq.s32.totalorder %s19, 1
      %p121 = scmp.ne.s32.totalorder %s116, %s118
      %p122 = scmp.eq.s32.totalorder %s19, 0
      %p123 = por %p121, %p122
      %p124 = scmp.ne.s32.totalorder %s116, %s118
      %p125 = scmp.eq.s32.totalorder %s24, 1
      %p126 = por %p124, %p125
      %p127 = scmp.ne.s32.totalorder %s118, %s119
      %p128 = scmp.eq.s32.totalorder %s24, 0
      %p129 = por %p127, %p128
      %p130 = scmp.ne.s32.totalorder %s118, %s119
      %p131 = scmp.eq.s32.totalorder %s25, 1
      %p132 = por %p130, %p131
      %p134 = scmp.ne.s32.totalorder %s119, %s133
      %p135 = scmp.eq.s32.totalorder %s25, 0
      %p136 = por %p134, %p135
      %s138 = sadd.s32 %s137, 1
      %p141 = scmp.eq.s32.totalorder %s19, 1
      %p142 = scmp.ne.s32.totalorder %s137, %s139
      %p143 = scmp.eq.s32.totalorder %s19, 0
      %p144 = por %p142, %p143
      %p145 = scmp.ne.s32.totalorder %s137, %s139
      %p146 = scmp.eq.s32.totalorder %s24, 1
      %p147 = por %p145, %p146
      %p148 = scmp.ne.s32.totalorder %s139, %s140
      %p149 = scmp.eq.s32.totalorder %s24, 0
      %p150 = por %p148, %p149
      %p151 = scmp.ne.s32.totalorder %s139, %s140
      %p152 = scmp.eq.s32.totalorder %s25, 1
      %p153 = por %p151, %p152
      %p155 = scmp.ne.s32.totalorder %s140, %s154
      %p156 = scmp.eq.s32.totalorder %s25, 0
      %p157 = por %p155, %p156
      %s159 = sadd.s32 %s158, 1
      %p162 = scmp.eq.s32.totalorder %s19, 1
      %p163 = scmp.ne.s32.totalorder %s158, %s160
      %p164 = scmp.eq.s32.totalorder %s19, 0
      %p165 = por %p163, %p164
      %p166 = scmp.ne.s32.totalorder %s158, %s160
      %p167 = scmp.eq.s32.totalorder %s24, 1
      %p168 = por %p166, %p167
      %p169 = scmp.ne.s32.totalorder %s160, %s161
      %p170 = scmp.eq.s32.totalorder %s24, 0
      %p171 = por %p169, %p170
      %p172 = scmp.ne.s32.totalorder %s160, %s161
      %p173 = scmp.eq.s32.totalorder %s25, 1
      %p174 = por %p172, %p173
      %p176 = scmp.ne.s32.totalorder %s161, %s175
      %p177 = scmp.eq.s32.totalorder %s25, 0
      %p178 = por %p176, %p177
      %s180 = sadd.s32 %s179, 1
      %p183 = scmp.eq.s32.totalorder %s19, 1
      %p184 = scmp.ne.s32.totalorder %s179, %s181
      %p185 = scmp.eq.s32.totalorder %s19, 0
      %p186 = por %p184, %p185
      %p187 = scmp.ne.s32.totalorder %s179, %s181
      %p188 = scmp.eq.s32.totalorder %s24, 1
      %p189 = por %p187, %p188
      %p190 = scmp.ne.s32.totalorder %s181, %s182
      %p191 = scmp.eq.s32.totalorder %s24, 0
      %p192 = por %p190, %p191
      %p193 = scmp.ne.s32.totalorder %s181, %s182
      %p194 = scmp.eq.s32.totalorder %s25, 1
      %p195 = por %p193, %p194
      %p197 = scmp.ne.s32.totalorder %s182, %s196
      %p198 = scmp.eq.s32.totalorder %s25, 0
      %p199 = por %p197, %p198
      %s201 = sadd.s32 %s200, 1
      %p204 = scmp.eq.s32.totalorder %s19, 1
      %p205 = scmp.ne.s32.totalorder %s200, %s202
      %p206 = scmp.eq.s32.totalorder %s19, 0
      %p207 = por %p205, %p206
      %p208 = scmp.ne.s32.totalorder %s200, %s202
      %p209 = scmp.eq.s32.totalorder %s24, 1
      %p210 = por %p208, %p209
      %p211 = scmp.ne.s32.totalorder %s202, %s203
      %p212 = scmp.eq.s32.totalorder %s24, 0
      %p213 = por %p211, %p212
      %p214 = scmp.ne.s32.totalorder %s202, %s203
      %p215 = scmp.eq.s32.totalorder %s25, 1
      %p216 = por %p214, %p215
      %p218 = scmp.ne.s32.totalorder %s203, %s217
      %p219 = scmp.eq.s32.totalorder %s25, 0
      %p220 = por %p218, %p219
      %s222 = sadd.s32 %s221, 1
      %p225 = scmp.eq.s32.totalorder %s19, 1
      %p226 = scmp.ne.s32.totalorder %s221, %s223
      %p227 = scmp.eq.s32.totalorder %s19, 0
      %p228 = por %p226, %p227
      %p229 = scmp.ne.s32.totalorder %s221, %s223
      %p230 = scmp.eq.s32.totalorder %s24, 1
      %p231 = por %p229, %p230
      %p232 = scmp.ne.s32.totalorder %s223, %s224
      %p233 = scmp.eq.s32.totalorder %s24, 0
      %p234 = por %p232, %p233
      %p235 = scmp.ne.s32.totalorder %s223, %s224
      %p236 = scmp.eq.s32.totalorder %s25, 1
      %p237 = por %p235, %p236
      %p239 = scmp.ne.s32.totalorder %s224, %s238
      %p240 = scmp.eq.s32.totalorder %s25, 0
      %p241 = por %p239, %p240
      %s242 = ssub.s32 %s19, %s26
      %p243 = scmp.eq.s32.totalorder %s242, 0
      %s245 = sadd.s32 %s244, 1
      %s246 = scalar_select %p243, %s244, %s245
      %p249 = pneg %p243
      %p250 = scmp.eq.s32.totalorder %s19, 1
      %p251 = por %p249, %p250
      %p252 = scmp.ne.s32.totalorder %s244, %s247
      %p253 = scmp.eq.s32.totalorder %s19, 0
      %p254 = por %p252, %p253
      %p255 = scmp.ne.s32.totalorder %s244, %s247
      %p256 = scmp.eq.s32.totalorder %s24, 1
      %p257 = por %p255, %p256
      %p258 = scmp.ne.s32.totalorder %s247, %s248
      %p259 = scmp.eq.s32.totalorder %s24, 0
      %p260 = por %p258, %p259
      %p261 = scmp.ne.s32.totalorder %s247, %s248
      %p262 = scmp.eq.s32.totalorder %s25, 1
      %p263 = por %p261, %p262
      %p265 = scmp.ne.s32.totalorder %s248, %s264
      %p266 = scmp.eq.s32.totalorder %s25, 0
      %p267 = por %p265, %p266
      %p268 = scmp.le.s32.totalorder 1, %s19
      %p269 = scmp.lt.s32.totalorder %s19, 3
      %p270 = pnand %p268, %p269
      %p271 = pneg %p270
      // Predicated region
      $region9: #{tpu_custom_call.1} parent=5 // pred_check
        _
      $region10: #{tpu_custom_call.1} parent=5 // pred_check_branch
        %273 = sbr.rel (%p270) target = $region12
      $region11: #{tpu_custom_call.1} parent=5 // pred_region
        %s274 = ssub.s32 %s19, 1
        // Predicated region
        $region13: #{tpu_custom_call.1} parent=11 // pred_check
          %p275 = pneg %p66
        $region14: #{tpu_custom_call.1} parent=11 // pred_check_branch
          %277 = sbr.rel (%p275) target = $region16
        $region15: #{tpu_custom_call.1} parent=11 // pred_region
          _
        $region16: #{tpu_custom_call.1} parent=11 // pred_fallthru
          _
        // Predicated region
        $region17: #{tpu_custom_call.1} parent=11 // pred_check
          %p278 = pneg %p87
        $region18: #{tpu_custom_call.1} parent=11 // pred_check_branch
          %280 = sbr.rel (%p278) target = $region20
        $region19: #{tpu_custom_call.1} parent=11 // pred_region
          _
        $region20: #{tpu_custom_call.1} parent=11 // pred_fallthru
          _
        // Predicated region
        $region21: #{tpu_custom_call.1} parent=11 // pred_check
          %p281 = pneg %p108
        $region22: #{tpu_custom_call.1} parent=11 // pred_check_branch
          %283 = sbr.rel (%p281) target = $region24
        $region23: #{tpu_custom_call.1} parent=11 // pred_region
          _
        $region24: #{tpu_custom_call.1} parent=11 // pred_fallthru
          _
        // Predicated region
        $region25: #{tpu_custom_call.1} parent=11 // pred_check
          %p284 = pneg %p129
        $region26: #{tpu_custom_call.1} parent=11 // pred_check_branch
          %286 = sbr.rel (%p284) target = $region28
        $region27: #{tpu_custom_call.1} parent=11 // pred_region
          _
        $region28: #{tpu_custom_call.1} parent=11 // pred_fallthru
          _
        // Predicated region
        $region29: #{tpu_custom_call.1} parent=11 // pred_check
          %p287 = pneg %p150
        $region30: #{tpu_custom_call.1} parent=11 // pred_check_branch
          %289 = sbr.rel (%p287) target = $region32
        $region31: #{tpu_custom_call.1} parent=11 // pred_region
          _
        $region32: #{tpu_custom_call.1} parent=11 // pred_fallthru
          _
        // Predicated region
        $region33: #{tpu_custom_call.1} parent=11 // pred_check
          %p290 = pneg %p171
        $region34: #{tpu_custom_call.1} parent=11 // pred_check_branch
          %292 = sbr.rel (%p290) target = $region36
        $region35: #{tpu_custom_call.1} parent=11 // pred_region
          _
        $region36: #{tpu_custom_call.1} parent=11 // pred_fallthru
          _
        // Predicated region
        $region37: #{tpu_custom_call.1} parent=11 // pred_check
          %p293 = pneg %p192
        $region38: #{tpu_custom_call.1} parent=11 // pred_check_branch
          %295 = sbr.rel (%p293) target = $region40
        $region39: #{tpu_custom_call.1} parent=11 // pred_region
          _
        $region40: #{tpu_custom_call.1} parent=11 // pred_fallthru
          _
        // Predicated region
        $region41: #{tpu_custom_call.1} parent=11 // pred_check
          %p296 = pneg %p213
        $region42: #{tpu_custom_call.1} parent=11 // pred_check_branch
          %298 = sbr.rel (%p296) target = $region44
        $region43: #{tpu_custom_call.1} parent=11 // pred_region
          _
        $region44: #{tpu_custom_call.1} parent=11 // pred_fallthru
          _
        // Predicated region
        $region45: #{tpu_custom_call.1} parent=11 // pred_check
          %p299 = pneg %p234
        $region46: #{tpu_custom_call.1} parent=11 // pred_check_branch
          %301 = sbr.rel (%p299) target = $region48
        $region47: #{tpu_custom_call.1} parent=11 // pred_region
          _
        $region48: #{tpu_custom_call.1} parent=11 // pred_fallthru
          _
      $region12: #{tpu_custom_call.1} parent=5 // pred_fallthru
        _
      %p302 = scmp.lt.s32.totalorder %s19, 2
      // Predicated region
      $region49: #{tpu_custom_call.1} parent=5 // pred_check
        %p303 = pneg %p302
      $region50: #{tpu_custom_call.1} parent=5 // pred_check_branch
        %305 = sbr.rel (%p303) target = $region52
      $region51: #{tpu_custom_call.1} parent=5 // pred_region
        // Predicated region
        $region53: #{tpu_custom_call.1} parent=51 // pred_check
          %p306 = pneg %p39
        $region54: #{tpu_custom_call.1} parent=51 // pred_check_branch
          %308 = sbr.rel (%p306) target = $region56
        $region55: #{tpu_custom_call.1} parent=51 // pred_region
          %p309 = scmp.lt.s32.totalorder %s19, 1
          %s310 = scalar_select %p309, %s19, 1
          %s311 = smul.addr %s310, 4
          %s312 = smul.addr %s311, 4
          %s313 = scalar_lea.vmem %s0, %s312
        $region56: #{tpu_custom_call.1} parent=51 // pred_fallthru
          _
      $region52: #{tpu_custom_call.1} parent=5 // pred_fallthru
        _
      %p314 = scmp.le.s32.totalorder 1, %s19
      %p315 = scmp.lt.s32.totalorder %s19, 3
      %p316 = pnand %p314, %p315
      %p317 = pneg %p316
      // Predicated region
      $region57: #{tpu_custom_call.1} parent=5 // pred_check
        _
      $region58: #{tpu_custom_call.1} parent=5 // pred_check_branch
        %319 = sbr.rel (%p316) target = $region60
      $region59: #{tpu_custom_call.1} parent=5 // pred_region
        %s320 = ssub.s32 %s19, 1
        %p321 = scmp.lt.s32.totalorder %s24, 1
        %s322 = scalar_select %p321, %s24, 1
        %s323 = smul.addr %s322, 4
        %s324 = smul.addr %s323, 4
        %s325 = scalar_lea.vmem %s0, %s324
        %p326 = pneg %p45
        %p327 = pneg %p42
        %p328 = pneg %p66
        %p329 = pneg %p63
        %p330 = pneg %p87
        %p331 = pneg %p84
        %p332 = pneg %p108
        %p333 = pneg %p105
        %p334 = pneg %p129
        %p335 = pneg %p126
        %p336 = pneg %p150
        %p337 = pneg %p147
        %p338 = pneg %p171
        %p339 = pneg %p168
        %p340 = pneg %p192
        %p341 = pneg %p189
        %p342 = pneg %p213
        %p343 = pneg %p210
        %p344 = pneg %p234
        %p345 = pneg %p231
        %p346 = pneg %p260
        %p347 = pneg %p257
        %s348 = sand.u32 %s247, 1
        %s349 = scalar_lea.sflag [#allocation5], %s348
        %s350 = sand.u32 %s247, 1
        %s351 = smul.addr %s350, 24
        %s352 = scalar_lea.vmem [#allocation4], %s351
        %p353 = scmp.lt.s32.totalorder %s24, 1
        %s354 = scalar_select %p353, %s24, 1
        %s355 = smul.addr %s354, 4
        %s356 = smul.addr %s355, 4
        %s357 = scalar_lea.vmem %s0, %s356
        %v358 = vld [vmem:[%s357] sm:$0xff]
        %v359 = vld [vmem:[%s357 + $0x8] sm:$0xff]
        %v360 = vld [vmem:[%s3] sm:$0xf]
        %362 = vset.pattern.permute.xlu0 0
        %363 = vperm.xlu0 %362, %v360
        %v364 = vpop.permute.xlu0 %363
        %v366 = vunpack.c.l.s4 839922192
        %v367 = vunpack.c.0.s8 %v366
        %v368 = vlaneseq
        %v369 = vshrl.u32 %v368, 7
        %v370 = vsub.s32 %v367, %v369
        %v371 = vrot.slane %v364, %v370
        %v373 = vmul.f32 %v358, %v371
        %v374 = vmul.f32 %v359, %v371
        %v375 = vld [vmem:[%s4] sm:$0xf]
        %377 = vset.pattern.permute.xlu0 0
        %378 = vperm.xlu0 %377, %v375
        %v379 = vpop.permute.xlu0 %378
        %v381 = vunpack.c.l.s4 839922192
        %v382 = vunpack.c.0.s8 %v381
        %v383 = vlaneseq
        %v384 = vshrl.u32 %v383, 7
        %v385 = vsub.s32 %v382, %v384
        %v386 = vrot.slane %v379, %v385
        %v388 = vadd.f32 %v373, %v386
        %v389 = vadd.f32 %v374, %v386
        %v390 = vmax.f32 %v388, 0.0
        %v391 = vmax.f32 %v389, 0.0
        %v392 = vld [vmem:[%s1] sm:$0xf]
        %v394 = vlaneseq
        %v395 = vshrl.u32 %v394, 7
        %v396 = vsub.s32 0, %v395
        %v397 = vrot.slane %v392, %v396
        %v398 = vlaneseq
        %v399 = vshrl.u32 %v398, 7
        %v400 = vsub.s32 1, %v399
        %v401 = vrot.slane %v392, %v400
        %v402 = vlaneseq
        %v403 = vshrl.u32 %v402, 7
        %v404 = vsub.s32 2, %v403
        %v405 = vrot.slane %v392, %v404
        %v406 = vlaneseq
        %v407 = vshrl.u32 %v406, 7
        %v408 = vsub.s32 3, %v407
        %v409 = vrot.slane %v392, %v408
        %v410 = vcombine.low %v397, %v401
        %v411 = vcombine.low %v405, %v409
        %v414 = vmul.f32 %v390, %v410
        %v415 = vmul.f32 %v391, %v411
        %416 = vst [vmem:[#allocation2] sm:$0xff] %v414
        %vm417 = vcmask 1043456
        %vm418 = vcmask 310276
        %vm419 = vmor %vm418, %vm417
        %420 = vst.msk [vmem:[#allocation2 + $0x8] sm:$0xff] %vm419, %v415
        %v421 = vld [vmem:[#allocation2] sm:$0xff]
        %v422 = vld [vmem:[#allocation2 + $0x8] sm:$0xf]
        %v423 = vld [vmem:[%s357] sm:$0xff]
        %v424 = vld [vmem:[%s357 + $0x8] sm:$0xf]
        %v425 = vld [vmem:[%s5] sm:$0xff]
        %v426 = vld [vmem:[%s6] sm:$0xff]
        %v427 = vld [vmem:[#allocation2 + $0x8] sm:$0xff]
        %v428 = vld [vmem:[%s357 + $0x8] sm:$0xff]
        %s429 = scalar_lea.vmem %s5, 8
        %v430 = vld [vmem:[%s429] sm:$0xff]
        %v433 = vcombine.high %v421, %v421
        %v434 = vcombine.high %v427, %v427
        %435 = vrot.lane.b32.xlu0 %v421, 127
        %v436 = vpop.permute.xlu0 %435
        %437 = vrot.lane.b32.xlu0 %v433, 127
        %v438 = vpop.permute.xlu0 %437
        %439 = vrot.lane.b32.xlu0 %v427, 127
        %v440 = vpop.permute.xlu0 %439
        %441 = vrot.lane.b32.xlu0 %v434, 127
        %v442 = vpop.permute.xlu0 %441
        %vm443 = vcmask 1039360
        %v444 = vsel %vm443, %v436, %v438
        %v445 = vsel %vm443, %v438, %v440
        %v446 = vsel %vm443, %v440, %v442
        %vm447 = vcmask 31744
        %v449 = vsel %vm447, %v430, 0
        %v451 = vsel %vm417, %v444, 0
        %v453 = vsel %vm417, %v445, 0
        %v455 = vsel %vm417, %v446, 0
        %457 = vmatprep.subr.mxu0 %v453
        %458 = vmatpush1.msra.mxu0 %v451
        %459 = vmatprep.subr.mxu0 0.0
        %460 = vmatpush1.msra.mxu0 0.0
        %461 = vmatprep.subr.mxu0 0.0
        %462 = vmatpush1.msra.mxu0 0.0
        %463 = vmatprep.subr.mxu0 0.0
        %464 = vmatpush1.msra.mxu0 0.0
        %465 = vmatprep.subr.mxu0 0.0
        %466 = vmatpush1.msra.mxu0 0.0
        %467 = vmatprep.subr.mxu0 0.0
        %468 = vmatpush1.msra.mxu0 0.0
        %469 = vmatprep.subr.mxu0 0.0
        %470 = vmatpush1.msra.mxu0 0.0
        %471 = vmatprep.subr.mxu0 0.0
        %472 = vmatpush1.msra.mxu0 0.0
        %473 = vmatprep.subr.mxu0 0.0
        %474 = vmatpush1.msra.mxu0 0.0
        %475 = vmatprep.subr.mxu0 0.0
        %476 = vmatpush1.msra.mxu0 0.0
        %477 = vmatprep.subr.mxu0 0.0
        %478 = vmatpush1.msra.mxu0 0.0
        %479 = vmatprep.subr.mxu0 0.0
        %480 = vmatpush1.msra.mxu0 0.0
        %481 = vmatprep.subr.mxu0 0.0
        %482 = vmatpush1.msra.mxu0 0.0
        %483 = vmatprep.subr.mxu0 0.0
        %484 = vmatpush1.msra.mxu0 0.0
        %485 = vmatprep.subr.mxu0 0.0
        %486 = vmatpush1.msra.mxu0 0.0
        %487 = vmatprep.subr.mxu0 0.0
        %488 = vmatpush1.msra.mxu0 0.0
        %489 = vmatprep.subr.mxu0 0.0
        %490 = vmatpush1.msra.mxu0 0.0
        %491 = vmatprep.subr.mxu0 0.0
        %492 = vmatpush1.msra.mxu0 0.0
        %493 = vmatprep.subr.mxu0 0.0
        %494 = vmatpush1.msra.mxu0 0.0
        %495 = vmatprep.subr.mxu0 0.0
        %496 = vmatpush1.msra.mxu0 0.0
        %497 = vmatprep.subr.mxu0 0.0
        %498 = vmatpush1.msra.mxu0 0.0
        %499 = vmatprep.subr.mxu0 0.0
        %500 = vmatpush1.msra.mxu0 0.0
        %501 = vmatprep.subr.mxu0 0.0
        %502 = vmatpush1.msra.mxu0 0.0
        %503 = vmatprep.subr.mxu0 0.0
        %504 = vmatpush1.msra.mxu0 0.0
        %505 = vmatprep.subr.mxu0 0.0
        %506 = vmatpush1.msra.mxu0 0.0
        %507 = vmatprep.subr.mxu0 0.0
        %508 = vmatpush1.msra.mxu0 0.0
        %509 = vmatprep.subr.mxu0 0.0
        %510 = vmatpush1.msra.mxu0 0.0
        %511 = vmatprep.subr.mxu0 0.0
        %512 = vmatpush1.msra.mxu0 0.0
        %513 = vmatprep.subr.mxu0 0.0
        %514 = vmatpush1.msra.mxu0 0.0
        %515 = vmatprep.subr.mxu0 0.0
        %516 = vmatpush1.msra.mxu0 0.0
        %517 = vmatprep.subr.mxu0 0.0
        %518 = vmatpush1.msra.mxu0 0.0
        %519 = vmatprep.subr.mxu0 0.0
        %520 = vmatpush1.msra.mxu0 0.0
        %521 = vmatprep.mubr.f32.mxu0 0.0
        %522 = vmatmul.mubr.f32.gmra.mrb[0].mxu0 %v449
        %v523 = vpop.f32.mrb[0].mxu0
        %v524 = vadd.f32 0.0, %v523
        %v525 = vpop.f32.mrb[0].mxu0
        %v526 = vadd.f32 0.0, %v525
        %527 = vdwg.mxu0
        %528 = vmatprep.subr.mxu0 0.0
        %529 = vmatpush1.msra.mxu0 %v455
        %530 = vmatprep.subr.mxu0 0.0
        %531 = vmatpush1.msra.mxu0 0.0
        %532 = vmatprep.subr.mxu0 0.0
        %533 = vmatpush1.msra.mxu0 0.0
        %534 = vmatprep.subr.mxu0 0.0
        %535 = vmatpush1.msra.mxu0 0.0
        %536 = vmatprep.subr.mxu0 0.0
        %537 = vmatpush1.msra.mxu0 0.0
        %538 = vmatprep.subr.mxu0 0.0
        %539 = vmatpush1.msra.mxu0 0.0
        %540 = vmatprep.subr.mxu0 0.0
        %541 = vmatpush1.msra.mxu0 0.0
        %542 = vmatprep.subr.mxu0 0.0
        %543 = vmatpush1.msra.mxu0 0.0
        %544 = vmatprep.subr.mxu0 0.0
        %545 = vmatpush1.msra.mxu0 0.0
        %546 = vmatprep.subr.mxu0 0.0
        %547 = vmatpush1.msra.mxu0 0.0
        %548 = vmatprep.subr.mxu0 0.0
        %549 = vmatpush1.msra.mxu0 0.0
        %550 = vmatprep.subr.mxu0 0.0
        %551 = vmatpush1.msra.mxu0 0.0
        %552 = vmatprep.subr.mxu0 0.0
        %553 = vmatpush1.msra.mxu0 0.0
        %554 = vmatprep.subr.mxu0 0.0
        %555 = vmatpush1.msra.mxu0 0.0
        %556 = vmatprep.subr.mxu0 0.0
        %557 = vmatpush1.msra.mxu0 0.0
        %558 = vmatprep.subr.mxu0 0.0
        %559 = vmatpush1.msra.mxu0 0.0
        %560 = vmatprep.subr.mxu0 0.0
        %561 = vmatpush1.msra.mxu0 0.0
        %562 = vmatprep.subr.mxu0 0.0
        %563 = vmatpush1.msra.mxu0 0.0
        %564 = vmatprep.subr.mxu0 0.0
        %565 = vmatpush1.msra.mxu0 0.0
        %566 = vmatprep.subr.mxu0 0.0
        %567 = vmatpush1.msra.mxu0 0.0
        %568 = vmatprep.subr.mxu0 0.0
        %569 = vmatpush1.msra.mxu0 0.0
        %570 = vmatprep.subr.mxu0 0.0
        %571 = vmatpush1.msra.mxu0 0.0
        %572 = vmatprep.subr.mxu0 0.0
        %573 = vmatpush1.msra.mxu0 0.0
        %574 = vmatprep.subr.mxu0 0.0
        %575 = vmatpush1.msra.mxu0 0.0
        %576 = vmatprep.subr.mxu0 0.0
        %577 = vmatpush1.msra.mxu0 0.0
        %578 = vmatprep.subr.mxu0 0.0
        %579 = vmatpush1.msra.mxu0 0.0
        %580 = vmatprep.subr.mxu0 0.0
        %581 = vmatpush1.msra.mxu0 0.0
        %582 = vmatprep.subr.mxu0 0.0
        %583 = vmatpush1.msra.mxu0 0.0
        %584 = vmatprep.subr.mxu0 0.0
        %585 = vmatpush1.msra.mxu0 0.0
        %586 = vmatprep.subr.mxu0 0.0
        %587 = vmatpush1.msra.mxu0 0.0
        %588 = vmatprep.subr.mxu0 0.0
        %589 = vmatpush1.msra.mxu0 0.0
        %590 = vmatprep.subr.mxu0 0.0
        %591 = vmatpush1.msra.mxu0 0.0
        %592 = vmatprep.mubr.f32.mxu0 0.0
        %593 = vmatmul.mubr.f32.gmra.mrb[0].mxu0 %v449
        %v594 = vpop.f32.mrb[0].mxu0
        %v595 = vadd.f32 0.0, %v594
        %v596 = vpop.f32.mrb[0].mxu0
        %597 = vdwg.mxu0
        %v600 = vsel %vm447, %v425, 0
        %v602 = vsel %vm417, %v421, 0
        %v604 = vsel %vm417, %v433, 0
        %v606 = vsel %vm417, %v422, 0
        %608 = vmatprep.subr.mxu0 %v604
        %609 = vmatpush1.msra.mxu0 %v602
        %610 = vmatprep.subr.mxu0 0.0
        %611 = vmatpush1.msra.mxu0 0.0
        %612 = vmatprep.subr.mxu0 0.0
        %613 = vmatpush1.msra.mxu0 0.0
        %614 = vmatprep.subr.mxu0 0.0
        %615 = vmatpush1.msra.mxu0 0.0
        %616 = vmatprep.subr.mxu0 0.0
        %617 = vmatpush1.msra.mxu0 0.0
        %618 = vmatprep.subr.mxu0 0.0
        %619 = vmatpush1.msra.mxu0 0.0
        %620 = vmatprep.subr.mxu0 0.0
        %621 = vmatpush1.msra.mxu0 0.0
        %622 = vmatprep.subr.mxu0 0.0
        %623 = vmatpush1.msra.mxu0 0.0
        %624 = vmatprep.subr.mxu0 0.0
        %625 = vmatpush1.msra.mxu0 0.0
        %626 = vmatprep.subr.mxu0 0.0
        %627 = vmatpush1.msra.mxu0 0.0
        %628 = vmatprep.subr.mxu0 0.0
        %629 = vmatpush1.msra.mxu0 0.0
        %630 = vmatprep.subr.mxu0 0.0
        %631 = vmatpush1.msra.mxu0 0.0
        %632 = vmatprep.subr.mxu0 0.0
        %633 = vmatpush1.msra.mxu0 0.0
        %634 = vmatprep.subr.mxu0 0.0
        %635 = vmatpush1.msra.mxu0 0.0
        %636 = vmatprep.subr.mxu0 0.0
        %637 = vmatpush1.msra.mxu0 0.0
        %638 = vmatprep.subr.mxu0 0.0
        %639 = vmatpush1.msra.mxu0 0.0
        %640 = vmatprep.subr.mxu0 0.0
        %641 = vmatpush1.msra.mxu0 0.0
        %642 = vmatprep.subr.mxu0 0.0
        %643 = vmatpush1.msra.mxu0 0.0
        %644 = vmatprep.subr.mxu0 0.0
        %645 = vmatpush1.msra.mxu0 0.0
        %646 = vmatprep.subr.mxu0 0.0
        %647 = vmatpush1.msra.mxu0 0.0
        %648 = vmatprep.subr.mxu0 0.0
        %649 = vmatpush1.msra.mxu0 0.0
        %650 = vmatprep.subr.mxu0 0.0
        %651 = vmatpush1.msra.mxu0 0.0
        %652 = vmatprep.subr.mxu0 0.0
        %653 = vmatpush1.msra.mxu0 0.0
        %654 = vmatprep.subr.mxu0 0.0
        %655 = vmatpush1.msra.mxu0 0.0
        %656 = vmatprep.subr.mxu0 0.0
        %657 = vmatpush1.msra.mxu0 0.0
        %658 = vmatprep.subr.mxu0 0.0
        %659 = vmatpush1.msra.mxu0 0.0
        %660 = vmatprep.subr.mxu0 0.0
        %661 = vmatpush1.msra.mxu0 0.0
        %662 = vmatprep.subr.mxu0 0.0
        %663 = vmatpush1.msra.mxu0 0.0
        %664 = vmatprep.subr.mxu0 0.0
        %665 = vmatpush1.msra.mxu0 0.0
        %666 = vmatprep.subr.mxu0 0.0
        %667 = vmatpush1.msra.mxu0 0.0
        %668 = vmatprep.subr.mxu0 0.0
        %669 = vmatpush1.msra.mxu0 0.0
        %670 = vmatprep.subr.mxu0 0.0
        %671 = vmatpush1.msra.mxu0 0.0
        %672 = vmatprep.mubr.f32.mxu0 0.0
        %673 = vmatmul.mubr.f32.gmra.mrb[0].mxu0 %v600
        %v674 = vpop.f32.mrb[0].mxu0
        %v675 = vadd.f32 %v524, %v674
        %v676 = vpop.f32.mrb[0].mxu0
        %v677 = vadd.f32 %v526, %v676
        %678 = vdwg.mxu0
        %679 = vmatprep.subr.mxu0 0.0
        %680 = vmatpush1.msra.mxu0 %v606
        %681 = vmatprep.subr.mxu0 0.0
        %682 = vmatpush1.msra.mxu0 0.0
        %683 = vmatprep.subr.mxu0 0.0
        %684 = vmatpush1.msra.mxu0 0.0
        %685 = vmatprep.subr.mxu0 0.0
        %686 = vmatpush1.msra.mxu0 0.0
        %687 = vmatprep.subr.mxu0 0.0
        %688 = vmatpush1.msra.mxu0 0.0
        %689 = vmatprep.subr.mxu0 0.0
        %690 = vmatpush1.msra.mxu0 0.0
        %691 = vmatprep.subr.mxu0 0.0
        %692 = vmatpush1.msra.mxu0 0.0
        %693 = vmatprep.subr.mxu0 0.0
        %694 = vmatpush1.msra.mxu0 0.0
        %695 = vmatprep.subr.mxu0 0.0
        %696 = vmatpush1.msra.mxu0 0.0
        %697 = vmatprep.subr.mxu0 0.0
        %698 = vmatpush1.msra.mxu0 0.0
        %699 = vmatprep.subr.mxu0 0.0
        %700 = vmatpush1.msra.mxu0 0.0
        %701 = vmatprep.subr.mxu0 0.0
        %702 = vmatpush1.msra.mxu0 0.0
        %703 = vmatprep.subr.mxu0 0.0
        %704 = vmatpush1.msra.mxu0 0.0
        %705 = vmatprep.subr.mxu0 0.0
        %706 = vmatpush1.msra.mxu0 0.0
        %707 = vmatprep.subr.mxu0 0.0
        %708 = vmatpush1.msra.mxu0 0.0
        %709 = vmatprep.subr.mxu0 0.0
        %710 = vmatpush1.msra.mxu0 0.0
        %711 = vmatprep.subr.mxu0 0.0
        %712 = vmatpush1.msra.mxu0 0.0
        %713 = vmatprep.subr.mxu0 0.0
        %714 = vmatpush1.msra.mxu0 0.0
        %715 = vmatprep.subr.mxu0 0.0
        %716 = vmatpush1.msra.mxu0 0.0
        %717 = vmatprep.subr.mxu0 0.0
        %718 = vmatpush1.msra.mxu0 0.0
        %719 = vmatprep.subr.mxu0 0.0
        %720 = vmatpush1.msra.mxu0 0.0
        %721 = vmatprep.subr.mxu0 0.0
        %722 = vmatpush1.msra.mxu0 0.0
        %723 = vmatprep.subr.mxu0 0.0
        %724 = vmatpush1.msra.mxu0 0.0
        %725 = vmatprep.subr.mxu0 0.0
        %726 = vmatpush1.msra.mxu0 0.0
        %727 = vmatprep.subr.mxu0 0.0
        %728 = vmatpush1.msra.mxu0 0.0
        %729 = vmatprep.subr.mxu0 0.0
        %730 = vmatpush1.msra.mxu0 0.0
        %731 = vmatprep.subr.mxu0 0.0
        %732 = vmatpush1.msra.mxu0 0.0
        %733 = vmatprep.subr.mxu0 0.0
        %734 = vmatpush1.msra.mxu0 0.0
        %735 = vmatprep.subr.mxu0 0.0
        %736 = vmatpush1.msra.mxu0 0.0
        %737 = vmatprep.subr.mxu0 0.0
        %738 = vmatpush1.msra.mxu0 0.0
        %739 = vmatprep.subr.mxu0 0.0
        %740 = vmatpush1.msra.mxu0 0.0
        %741 = vmatprep.subr.mxu0 0.0
        %742 = vmatpush1.msra.mxu0 0.0
        %743 = vmatprep.mubr.f32.mxu0 0.0
        %744 = vmatmul.mubr.f32.gmra.mrb[0].mxu0 %v600
        %v745 = vpop.f32.mrb[0].mxu0
        %v746 = vadd.f32 %v595, %v745
        %v747 = vpop.f32.mrb[0].mxu0
        %748 = vdwg.mxu0
        %s749 = scalar_lea.vmem %s6, 8
        %v750 = vld [vmem:[%s749] sm:$0xff]
        %v753 = vcombine.high %v423, %v423
        %v754 = vcombine.high %v428, %v428
        %755 = vrot.lane.b32.xlu0 %v423, 127
        %v756 = vpop.permute.xlu0 %755
        %757 = vrot.lane.b32.xlu0 %v753, 127
        %v758 = vpop.permute.xlu0 %757
        %759 = vrot.lane.b32.xlu0 %v428, 127
        %v760 = vpop.permute.xlu0 %759
        %761 = vrot.lane.b32.xlu0 %v754, 127
        %v762 = vpop.permute.xlu0 %761
        %v763 = vsel %vm443, %v756, %v758
        %v764 = vsel %vm443, %v758, %v760
        %v765 = vsel %vm443, %v760, %v762
        %v767 = vsel %vm447, %v750, 0
        %v769 = vsel %vm417, %v763, 0
        %v771 = vsel %vm417, %v764, 0
        %v773 = vsel %vm417, %v765, 0
        %775 = vmatprep.subr.mxu0 %v771
        %776 = vmatpush1.msra.mxu0 %v769
        %777 = vmatprep.subr.mxu0 0.0
        %778 = vmatpush1.msra.mxu0 0.0
        %779 = vmatprep.subr.mxu0 0.0
        %780 = vmatpush1.msra.mxu0 0.0
        %781 = vmatprep.subr.mxu0 0.0
        %782 = vmatpush1.msra.mxu0 0.0
        %783 = vmatprep.subr.mxu0 0.0
        %784 = vmatpush1.msra.mxu0 0.0
        %785 = vmatprep.subr.mxu0 0.0
        %786 = vmatpush1.msra.mxu0 0.0
        %787 = vmatprep.subr.mxu0 0.0
        %788 = vmatpush1.msra.mxu0 0.0
        %789 = vmatprep.subr.mxu0 0.0
        %790 = vmatpush1.msra.mxu0 0.0
        %791 = vmatprep.subr.mxu0 0.0
        %792 = vmatpush1.msra.mxu0 0.0
        %793 = vmatprep.subr.mxu0 0.0
        %794 = vmatpush1.msra.mxu0 0.0
        %795 = vmatprep.subr.mxu0 0.0
        %796 = vmatpush1.msra.mxu0 0.0
        %797 = vmatprep.subr.mxu0 0.0
        %798 = vmatpush1.msra.mxu0 0.0
        %799 = vmatprep.subr.mxu0 0.0
        %800 = vmatpush1.msra.mxu0 0.0
        %801 = vmatprep.subr.mxu0 0.0
        %802 = vmatpush1.msra.mxu0 0.0
        %803 = vmatprep.subr.mxu0 0.0
        %804 = vmatpush1.msra.mxu0 0.0
        %805 = vmatprep.subr.mxu0 0.0
        %806 = vmatpush1.msra.mxu0 0.0
        %807 = vmatprep.subr.mxu0 0.0
        %808 = vmatpush1.msra.mxu0 0.0
        %809 = vmatprep.subr.mxu0 0.0
        %810 = vmatpush1.msra.mxu0 0.0
        %811 = vmatprep.subr.mxu0 0.0
        %812 = vmatpush1.msra.mxu0 0.0
        %813 = vmatprep.subr.mxu0 0.0
        %814 = vmatpush1.msra.mxu0 0.0
        %815 = vmatprep.subr.mxu0 0.0
        %816 = vmatpush1.msra.mxu0 0.0
        %817 = vmatprep.subr.mxu0 0.0
        %818 = vmatpush1.msra.mxu0 0.0
        %819 = vmatprep.subr.mxu0 0.0
        %820 = vmatpush1.msra.mxu0 0.0
        %821 = vmatprep.subr.mxu0 0.0
        %822 = vmatpush1.msra.mxu0 0.0
        %823 = vmatprep.subr.mxu0 0.0
        %824 = vmatpush1.msra.mxu0 0.0
        %825 = vmatprep.subr.mxu0 0.0
        %826 = vmatpush1.msra.mxu0 0.0
        %827 = vmatprep.subr.mxu0 0.0
        %828 = vmatpush1.msra.mxu0 0.0
        %829 = vmatprep.subr.mxu0 0.0
        %830 = vmatpush1.msra.mxu0 0.0
        %831 = vmatprep.subr.mxu0 0.0
        %832 = vmatpush1.msra.mxu0 0.0
        %833 = vmatprep.subr.mxu0 0.0
        %834 = vmatpush1.msra.mxu0 0.0
        %835 = vmatprep.subr.mxu0 0.0
        %836 = vmatpush1.msra.mxu0 0.0
        %837 = vmatprep.subr.mxu0 0.0
        %838 = vmatpush1.msra.mxu0 0.0
        %839 = vmatprep.mubr.f32.mxu0 0.0
        %840 = vmatmul.mubr.f32.gmra.mrb[0].mxu0 %v767
        %v841 = vpop.f32.mrb[0].mxu0
        %v842 = vadd.f32 0.0, %v841
        %v843 = vpop.f32.mrb[0].mxu0
        %v844 = vadd.f32 0.0, %v843
        %845 = vdwg.mxu0
        %846 = vmatprep.subr.mxu0 0.0
        %847 = vmatpush1.msra.mxu0 %v773
        %848 = vmatprep.subr.mxu0 0.0
        %849 = vmatpush1.msra.mxu0 0.0
        %850 = vmatprep.subr.mxu0 0.0
        %851 = vmatpush1.msra.mxu0 0.0
        %852 = vmatprep.subr.mxu0 0.0
        %853 = vmatpush1.msra.mxu0 0.0
        %854 = vmatprep.subr.mxu0 0.0
        %855 = vmatpush1.msra.mxu0 0.0
        %856 = vmatprep.subr.mxu0 0.0
        %857 = vmatpush1.msra.mxu0 0.0
        %858 = vmatprep.subr.mxu0 0.0
        %859 = vmatpush1.msra.mxu0 0.0
        %860 = vmatprep.subr.mxu0 0.0
        %861 = vmatpush1.msra.mxu0 0.0
        %862 = vmatprep.subr.mxu0 0.0
        %863 = vmatpush1.msra.mxu0 0.0
        %864 = vmatprep.subr.mxu0 0.0
        %865 = vmatpush1.msra.mxu0 0.0
        %866 = vmatprep.subr.mxu0 0.0
        %867 = vmatpush1.msra.mxu0 0.0
        %868 = vmatprep.subr.mxu0 0.0
        %869 = vmatpush1.msra.mxu0 0.0
        %870 = vmatprep.subr.mxu0 0.0
        %871 = vmatpush1.msra.mxu0 0.0
        %872 = vmatprep.subr.mxu0 0.0
        %873 = vmatpush1.msra.mxu0 0.0
        %874 = vmatprep.subr.mxu0 0.0
        %875 = vmatpush1.msra.mxu0 0.0
        %876 = vmatprep.subr.mxu0 0.0
        %877 = vmatpush1.msra.mxu0 0.0
        %878 = vmatprep.subr.mxu0 0.0
        %879 = vmatpush1.msra.mxu0 0.0
        %880 = vmatprep.subr.mxu0 0.0
        %881 = vmatpush1.msra.mxu0 0.0
        %882 = vmatprep.subr.mxu0 0.0
        %883 = vmatpush1.msra.mxu0 0.0
        %884 = vmatprep.subr.mxu0 0.0
        %885 = vmatpush1.msra.mxu0 0.0
        %886 = vmatprep.subr.mxu0 0.0
        %887 = vmatpush1.msra.mxu0 0.0
        %888 = vmatprep.subr.mxu0 0.0
        %889 = vmatpush1.msra.mxu0 0.0
        %890 = vmatprep.subr.mxu0 0.0
        %891 = vmatpush1.msra.mxu0 0.0
        %892 = vmatprep.subr.mxu0 0.0
        %893 = vmatpush1.msra.mxu0 0.0
        %894 = vmatprep.subr.mxu0 0.0
        %895 = vmatpush1.msra.mxu0 0.0
        %896 = vmatprep.subr.mxu0 0.0
        %897 = vmatpush1.msra.mxu0 0.0
        %898 = vmatprep.subr.mxu0 0.0
        %899 = vmatpush1.msra.mxu0 0.0
        %900 = vmatprep.subr.mxu0 0.0
        %901 = vmatpush1.msra.mxu0 0.0
        %902 = vmatprep.subr.mxu0 0.0
        %903 = vmatpush1.msra.mxu0 0.0
        %904 = vmatprep.subr.mxu0 0.0
        %905 = vmatpush1.msra.mxu0 0.0
        %906 = vmatprep.subr.mxu0 0.0
        %907 = vmatpush1.msra.mxu0 0.0
        %908 = vmatprep.subr.mxu0 0.0
        %909 = vmatpush1.msra.mxu0 0.0
        %910 = vmatprep.mubr.f32.mxu0 0.0
        %911 = vmatmul.mubr.f32.gmra.mrb[0].mxu0 %v767
        %v912 = vpop.f32.mrb[0].mxu0
        %v913 = vadd.f32 0.0, %v912
        %v914 = vpop.f32.mrb[0].mxu0
        %915 = vdwg.mxu0
        %v918 = vsel %vm447, %v426, 0
        %v920 = vsel %vm417, %v423, 0
        %v922 = vsel %vm417, %v753, 0
        %v924 = vsel %vm417, %v424, 0
        %926 = vmatprep.subr.mxu0 %v922
        %927 = vmatpush1.msra.mxu0 %v920
        %928 = vmatprep.subr.mxu0 0.0
        %929 = vmatpush1.msra.mxu0 0.0
        %930 = vmatprep.subr.mxu0 0.0
        %931 = vmatpush1.msra.mxu0 0.0
        %932 = vmatprep.subr.mxu0 0.0
        %933 = vmatpush1.msra.mxu0 0.0
        %934 = vmatprep.subr.mxu0 0.0
        %935 = vmatpush1.msra.mxu0 0.0
        %936 = vmatprep.subr.mxu0 0.0
        %937 = vmatpush1.msra.mxu0 0.0
        %938 = vmatprep.subr.mxu0 0.0
        %939 = vmatpush1.msra.mxu0 0.0
        %940 = vmatprep.subr.mxu0 0.0
        %941 = vmatpush1.msra.mxu0 0.0
        %942 = vmatprep.subr.mxu0 0.0
        %943 = vmatpush1.msra.mxu0 0.0
        %944 = vmatprep.subr.mxu0 0.0
        %945 = vmatpush1.msra.mxu0 0.0
        %946 = vmatprep.subr.mxu0 0.0
        %947 = vmatpush1.msra.mxu0 0.0
        %948 = vmatprep.subr.mxu0 0.0
        %949 = vmatpush1.msra.mxu0 0.0
        %950 = vmatprep.subr.mxu0 0.0
        %951 = vmatpush1.msra.mxu0 0.0
        %952 = vmatprep.subr.mxu0 0.0
        %953 = vmatpush1.msra.mxu0 0.0
        %954 = vmatprep.subr.mxu0 0.0
        %955 = vmatpush1.msra.mxu0 0.0
        %956 = vmatprep.subr.mxu0 0.0
        %957 = vmatpush1.msra.mxu0 0.0
        %958 = vmatprep.subr.mxu0 0.0
        %959 = vmatpush1.msra.mxu0 0.0
        %960 = vmatprep.subr.mxu0 0.0
        %961 = vmatpush1.msra.mxu0 0.0
        %962 = vmatprep.subr.mxu0 0.0
        %963 = vmatpush1.msra.mxu0 0.0
        %964 = vmatprep.subr.mxu0 0.0
        %965 = vmatpush1.msra.mxu0 0.0
        %966 = vmatprep.subr.mxu0 0.0
        %967 = vmatpush1.msra.mxu0 0.0
        %968 = vmatprep.subr.mxu0 0.0
        %969 = vmatpush1.msra.mxu0 0.0
        %970 = vmatprep.subr.mxu0 0.0
        %971 = vmatpush1.msra.mxu0 0.0
        %972 = vmatprep.subr.mxu0 0.0
        %973 = vmatpush1.msra.mxu0 0.0
        %974 = vmatprep.subr.mxu0 0.0
        %975 = vmatpush1.msra.mxu0 0.0
        %976 = vmatprep.subr.mxu0 0.0
        %977 = vmatpush1.msra.mxu0 0.0
        %978 = vmatprep.subr.mxu0 0.0
        %979 = vmatpush1.msra.mxu0 0.0
        %980 = vmatprep.subr.mxu0 0.0
        %981 = vmatpush1.msra.mxu0 0.0
        %982 = vmatprep.subr.mxu0 0.0
        %983 = vmatpush1.msra.mxu0 0.0
        %984 = vmatprep.subr.mxu0 0.0
        %985 = vmatpush1.msra.mxu0 0.0
        %986 = vmatprep.subr.mxu0 0.0
        %987 = vmatpush1.msra.mxu0 0.0
        %988 = vmatprep.subr.mxu0 0.0
        %989 = vmatpush1.msra.mxu0 0.0
        %990 = vmatprep.mubr.f32.mxu0 0.0
        %991 = vmatmul.mubr.f32.gmra.mrb[0].mxu0 %v918
        %v992 = vpop.f32.mrb[0].mxu0
        %v993 = vadd.f32 %v842, %v992
        %v994 = vpop.f32.mrb[0].mxu0
        %v995 = vadd.f32 %v844, %v994
        %996 = vdwg.mxu0
        %997 = vmatprep.subr.mxu0 0.0
        %998 = vmatpush1.msra.mxu0 %v924
        %999 = vmatprep.subr.mxu0 0.0
        %1000 = vmatpush1.msra.mxu0 0.0
        %1001 = vmatprep.subr.mxu0 0.0
        %1002 = vmatpush1.msra.mxu0 0.0
        %1003 = vmatprep.subr.mxu0 0.0
        %1004 = vmatpush1.msra.mxu0 0.0
        %1005 = vmatprep.subr.mxu0 0.0
        %1006 = vmatpush1.msra.mxu0 0.0
        %1007 = vmatprep.subr.mxu0 0.0
        %1008 = vmatpush1.msra.mxu0 0.0
        %1009 = vmatprep.subr.mxu0 0.0
        %1010 = vmatpush1.msra.mxu0 0.0
        %1011 = vmatprep.subr.mxu0 0.0
        %1012 = vmatpush1.msra.mxu0 0.0
        %1013 = vmatprep.subr.mxu0 0.0
        %1014 = vmatpush1.msra.mxu0 0.0
        %1015 = vmatprep.subr.mxu0 0.0
        %1016 = vmatpush1.msra.mxu0 0.0
        %1017 = vmatprep.subr.mxu0 0.0
        %1018 = vmatpush1.msra.mxu0 0.0
        %1019 = vmatprep.subr.mxu0 0.0
        %1020 = vmatpush1.msra.mxu0 0.0
        %1021 = vmatprep.subr.mxu0 0.0
        %1022 = vmatpush1.msra.mxu0 0.0
        %1023 = vmatprep.subr.mxu0 0.0
        %1024 = vmatpush1.msra.mxu0 0.0
        %1025 = vmatprep.subr.mxu0 0.0
        %1026 = vmatpush1.msra.mxu0 0.0
        %1027 = vmatprep.subr.mxu0 0.0
        %1028 = vmatpush1.msra.mxu0 0.0
        %1029 = vmatprep.subr.mxu0 0.0
        %1030 = vmatpush1.msra.mxu0 0.0
        %1031 = vmatprep.subr.mxu0 0.0
        %1032 = vmatpush1.msra.mxu0 0.0
        %1033 = vmatprep.subr.mxu0 0.0
        %1034 = vmatpush1.msra.mxu0 0.0
        %1035 = vmatprep.subr.mxu0 0.0
        %1036 = vmatpush1.msra.mxu0 0.0
        %1037 = vmatprep.subr.mxu0 0.0
        %1038 = vmatpush1.msra.mxu0 0.0
        %1039 = vmatprep.subr.mxu0 0.0
        %1040 = vmatpush1.msra.mxu0 0.0
        %1041 = vmatprep.subr.mxu0 0.0
        %1042 = vmatpush1.msra.mxu0 0.0
        %1043 = vmatprep.subr.mxu0 0.0
        %1044 = vmatpush1.msra.mxu0 0.0
        %1045 = vmatprep.subr.mxu0 0.0
        %1046 = vmatpush1.msra.mxu0 0.0
        %1047 = vmatprep.subr.mxu0 0.0
        %1048 = vmatpush1.msra.mxu0 0.0
        %1049 = vmatprep.subr.mxu0 0.0
        %1050 = vmatpush1.msra.mxu0 0.0
        %1051 = vmatprep.subr.mxu0 0.0
        %1052 = vmatpush1.msra.mxu0 0.0
        %1053 = vmatprep.subr.mxu0 0.0
        %1054 = vmatpush1.msra.mxu0 0.0
        %1055 = vmatprep.subr.mxu0 0.0
        %1056 = vmatpush1.msra.mxu0 0.0
        %1057 = vmatprep.subr.mxu0 0.0
        %1058 = vmatpush1.msra.mxu0 0.0
        %1059 = vmatprep.subr.mxu0 0.0
        %1060 = vmatpush1.msra.mxu0 0.0
        %1061 = vmatprep.mubr.f32.mxu0 0.0
        %1062 = vmatmul.mubr.f32.gmra.mrb[0].mxu0 %v918
        %v1063 = vpop.f32.mrb[0].mxu0
        %v1064 = vadd.f32 %v913, %v1063
        %v1065 = vpop.f32.mrb[0].mxu0
        %1066 = vdwg.mxu0
        %v1067 = vld [vmem:[#allocation2] sm:$0xff]
        %v1068 = vld [vmem:[#allocation2 + $0x8] sm:$0xff]
        %v1069 = vld [vmem:[%s357] sm:$0xff]
        %v1070 = vld [vmem:[%s357 + $0x8] sm:$0xff]
        %s1071 = scalar_lea.vmem %s5, 16
        %v1072 = vld [vmem:[%s1071] sm:$0xff]
        %v1075 = vcombine.high %v1067, %v1067
        %v1076 = vcombine.high %v1068, %v1068
        %1077 = vrot.lane.b32.xlu0 %v1067, 126
        %v1078 = vpop.permute.xlu0 %1077
        %1079 = vrot.lane.b32.xlu0 %v1075, 126
        %v1080 = vpop.permute.xlu0 %1079
        %1081 = vrot.lane.b32.xlu0 %v1068, 126
        %v1082 = vpop.permute.xlu0 %1081
        %1083 = vrot.lane.b32.xlu0 %v1076, 126
        %v1084 = vpop.permute.xlu0 %1083
        %vm1085 = vcmask 1031168
        %v1086 = vsel %vm1085, %v1078, %v1080
        %v1087 = vsel %vm1085, %v1080, %v1082
        %v1088 = vsel %vm1085, %v1082, %v1084
        %v1090 = vsel %vm447, %v1072, 0
        %v1092 = vsel %vm417, %v1086, 0
        %v1094 = vsel %vm417, %v1087, 0
        %v1096 = vsel %vm417, %v1088, 0
        %1098 = vmatprep.subr.mxu0 %v1094
        %1099 = vmatpush1.msra.mxu0 %v1092
        %1100 = vmatprep.subr.mxu0 0.0
        %1101 = vmatpush1.msra.mxu0 0.0
        %1102 = vmatprep.subr.mxu0 0.0
        %1103 = vmatpush1.msra.mxu0 0.0
        %1104 = vmatprep.subr.mxu0 0.0
        %1105 = vmatpush1.msra.mxu0 0.0
        %1106 = vmatprep.subr.mxu0 0.0
        %1107 = vmatpush1.msra.mxu0 0.0
        %1108 = vmatprep.subr.mxu0 0.0
        %1109 = vmatpush1.msra.mxu0 0.0
        %1110 = vmatprep.subr.mxu0 0.0
        %1111 = vmatpush1.msra.mxu0 0.0
        %1112 = vmatprep.subr.mxu0 0.0
        %1113 = vmatpush1.msra.mxu0 0.0
        %1114 = vmatprep.subr.mxu0 0.0
        %1115 = vmatpush1.msra.mxu0 0.0
        %1116 = vmatprep.subr.mxu0 0.0
        %1117 = vmatpush1.msra.mxu0 0.0
        %1118 = vmatprep.subr.mxu0 0.0
        %1119 = vmatpush1.msra.mxu0 0.0
        %1120 = vmatprep.subr.mxu0 0.0
        %1121 = vmatpush1.msra.mxu0 0.0
        %1122 = vmatprep.subr.mxu0 0.0
        %1123 = vmatpush1.msra.mxu0 0.0
        %1124 = vmatprep.subr.mxu0 0.0
        %1125 = vmatpush1.msra.mxu0 0.0
        %1126 = vmatprep.subr.mxu0 0.0
        %1127 = vmatpush1.msra.mxu0 0.0
        %1128 = vmatprep.subr.mxu0 0.0
        %1129 = vmatpush1.msra.mxu0 0.0
        %1130 = vmatprep.subr.mxu0 0.0
        %1131 = vmatpush1.msra.mxu0 0.0
        %1132 = vmatprep.subr.mxu0 0.0
        %1133 = vmatpush1.msra.mxu0 0.0
        %1134 = vmatprep.subr.mxu0 0.0
        %1135 = vmatpush1.msra.mxu0 0.0
        %1136 = vmatprep.subr.mxu0 0.0
        %1137 = vmatpush1.msra.mxu0 0.0
        %1138 = vmatprep.subr.mxu0 0.0
        %1139 = vmatpush1.msra.mxu0 0.0
        %1140 = vmatprep.subr.mxu0 0.0
        %1141 = vmatpush1.msra.mxu0 0.0
        %1142 = vmatprep.subr.mxu0 0.0
        %1143 = vmatpush1.msra.mxu0 0.0
        %1144 = vmatprep.subr.mxu0 0.0
        %1145 = vmatpush1.msra.mxu0 0.0
        %1146 = vmatprep.subr.mxu0 0.0
        %1147 = vmatpush1.msra.mxu0 0.0
        %1148 = vmatprep.subr.mxu0 0.0
        %1149 = vmatpush1.msra.mxu0 0.0
        %1150 = vmatprep.subr.mxu0 0.0
        %1151 = vmatpush1.msra.mxu0 0.0
        %1152 = vmatprep.subr.mxu0 0.0
        %1153 = vmatpush1.msra.mxu0 0.0
        %1154 = vmatprep.subr.mxu0 0.0
        %1155 = vmatpush1.msra.mxu0 0.0
        %1156 = vmatprep.subr.mxu0 0.0
        %1157 = vmatpush1.msra.mxu0 0.0
        %1158 = vmatprep.subr.mxu0 0.0
        %1159 = vmatpush1.msra.mxu0 0.0
        %1160 = vmatprep.subr.mxu0 0.0
        %1161 = vmatpush1.msra.mxu0 0.0
        %1162 = vmatprep.mubr.f32.mxu0 0.0
        %1163 = vmatmul.mubr.f32.gmra.mrb[0].mxu0 %v1090
        %v1164 = vpop.f32.mrb[0].mxu0
        %v1165 = vadd.f32 0.0, %v1164
        %v1166 = vpop.f32.mrb[0].mxu0
        %v1167 = vadd.f32 0.0, %v1166
        %1168 = vdwg.mxu0
        %1169 = vmatprep.subr.mxu0 0.0
        %1170 = vmatpush1.msra.mxu0 %v1096
        %1171 = vmatprep.subr.mxu0 0.0
        %1172 = vmatpush1.msra.mxu0 0.0
        %1173 = vmatprep.subr.mxu0 0.0
        %1174 = vmatpush1.msra.mxu0 0.0
        %1175 = vmatprep.subr.mxu0 0.0
        %1176 = vmatpush1.msra.mxu0 0.0
        %1177 = vmatprep.subr.mxu0 0.0
        %1178 = vmatpush1.msra.mxu0 0.0
        %1179 = vmatprep.subr.mxu0 0.0
        %1180 = vmatpush1.msra.mxu0 0.0
        %1181 = vmatprep.subr.mxu0 0.0
        %1182 = vmatpush1.msra.mxu0 0.0
        %1183 = vmatprep.subr.mxu0 0.0
        %1184 = vmatpush1.msra.mxu0 0.0
        %1185 = vmatprep.subr.mxu0 0.0
        %1186 = vmatpush1.msra.mxu0 0.0
        %1187 = vmatprep.subr.mxu0 0.0
        %1188 = vmatpush1.msra.mxu0 0.0
        %1189 = vmatprep.subr.mxu0 0.0
        %1190 = vmatpush1.msra.mxu0 0.0
        %1191 = vmatprep.subr.mxu0 0.0
        %1192 = vmatpush1.msra.mxu0 0.0
        %1193 = vmatprep.subr.mxu0 0.0
        %1194 = vmatpush1.msra.mxu0 0.0
        %1195 = vmatprep.subr.mxu0 0.0
        %1196 = vmatpush1.msra.mxu0 0.0
        %1197 = vmatprep.subr.mxu0 0.0
        %1198 = vmatpush1.msra.mxu0 0.0
        %1199 = vmatprep.subr.mxu0 0.0
        %1200 = vmatpush1.msra.mxu0 0.0
        %1201 = vmatprep.subr.mxu0 0.0
        %1202 = vmatpush1.msra.mxu0 0.0
        %1203 = vmatprep.subr.mxu0 0.0
        %1204 = vmatpush1.msra.mxu0 0.0
        %1205 = vmatprep.subr.mxu0 0.0
        %1206 = vmatpush1.msra.mxu0 0.0
        %1207 = vmatprep.subr.mxu0 0.0
        %1208 = vmatpush1.msra.mxu0 0.0
        %1209 = vmatprep.subr.mxu0 0.0
        %1210 = vmatpush1.msra.mxu0 0.0
        %1211 = vmatprep.subr.mxu0 0.0
        %1212 = vmatpush1.msra.mxu0 0.0
        %1213 = vmatprep.subr.mxu0 0.0
        %1214 = vmatpush1.msra.mxu0 0.0
        %1215 = vmatprep.subr.mxu0 0.0
        %1216 = vmatpush1.msra.mxu0 0.0
        %1217 = vmatprep.subr.mxu0 0.0
        %1218 = vmatpush1.msra.mxu0 0.0
        %1219 = vmatprep.subr.mxu0 0.0
        %1220 = vmatpush1.msra.mxu0 0.0
        %1221 = vmatprep.subr.mxu0 0.0
        %1222 = vmatpush1.msra.mxu0 0.0
        %1223 = vmatprep.subr.mxu0 0.0
        %1224 = vmatpush1.msra.mxu0 0.0
        %1225 = vmatprep.subr.mxu0 0.0
        %1226 = vmatpush1.msra.mxu0 0.0
        %1227 = vmatprep.subr.mxu0 0.0
        %1228 = vmatpush1.msra.mxu0 0.0
        %1229 = vmatprep.subr.mxu0 0.0
        %1230 = vmatpush1.msra.mxu0 0.0
        %1231 = vmatprep.subr.mxu0 0.0
        %1232 = vmatpush1.msra.mxu0 0.0
        %1233 = vmatprep.mubr.f32.mxu0 0.0
        %1234 = vmatmul.mubr.f32.gmra.mrb[0].mxu0 %v1090
        %v1235 = vpop.f32.mrb[0].mxu0
        %v1236 = vadd.f32 0.0, %v1235
        %v1237 = vpop.f32.mrb[0].mxu0
        %1238 = vdwg.mxu0
        %v1239 = vadd.f32 %v675, %v1165
        %v1240 = vadd.f32 %v677, %v1167
        %v1241 = vadd.f32 %v746, %v1236
        %s1242 = scalar_lea.vmem %s6, 16
        %v1243 = vld [vmem:[%s1242] sm:$0xff]
        %v1246 = vcombine.high %v1069, %v1069
        %v1247 = vcombine.high %v1070, %v1070
        %1248 = vrot.lane.b32.xlu0 %v1069, 126
        %v1249 = vpop.permute.xlu0 %1248
        %1250 = vrot.lane.b32.xlu0 %v1246, 126
        %v1251 = vpop.permute.xlu0 %1250
        %1252 = vrot.lane.b32.xlu0 %v1070, 126
        %v1253 = vpop.permute.xlu0 %1252
        %1254 = vrot.lane.b32.xlu0 %v1247, 126
        %v1255 = vpop.permute.xlu0 %1254
        %v1256 = vsel %vm1085, %v1249, %v1251
        %v1257 = vsel %vm1085, %v1251, %v1253
        %v1258 = vsel %vm1085, %v1253, %v1255
        %v1260 = vsel %vm447, %v1243, 0
        %v1262 = vsel %vm417, %v1256, 0
        %v1264 = vsel %vm417, %v1257, 0
        %v1266 = vsel %vm417, %v1258, 0
        %1268 = vmatprep.subr.mxu0 %v1264
        %1269 = vmatpush1.msra.mxu0 %v1262
        %1270 = vmatprep.subr.mxu0 0.0
        %1271 = vmatpush1.msra.mxu0 0.0
        %1272 = vmatprep.subr.mxu0 0.0
        %1273 = vmatpush1.msra.mxu0 0.0
        %1274 = vmatprep.subr.mxu0 0.0
        %1275 = vmatpush1.msra.mxu0 0.0
        %1276 = vmatprep.subr.mxu0 0.0
        %1277 = vmatpush1.msra.mxu0 0.0
        %1278 = vmatprep.subr.mxu0 0.0
        %1279 = vmatpush1.msra.mxu0 0.0
        %1280 = vmatprep.subr.mxu0 0.0
        %1281 = vmatpush1.msra.mxu0 0.0
        %1282 = vmatprep.subr.mxu0 0.0
        %1283 = vmatpush1.msra.mxu0 0.0
        %1284 = vmatprep.subr.mxu0 0.0
        %1285 = vmatpush1.msra.mxu0 0.0
        %1286 = vmatprep.subr.mxu0 0.0
        %1287 = vmatpush1.msra.mxu0 0.0
        %1288 = vmatprep.subr.mxu0 0.0
        %1289 = vmatpush1.msra.mxu0 0.0
        %1290 = vmatprep.subr.mxu0 0.0
        %1291 = vmatpush1.msra.mxu0 0.0
        %1292 = vmatprep.subr.mxu0 0.0
        %1293 = vmatpush1.msra.mxu0 0.0
        %1294 = vmatprep.subr.mxu0 0.0
        %1295 = vmatpush1.msra.mxu0 0.0
        %1296 = vmatprep.subr.mxu0 0.0
        %1297 = vmatpush1.msra.mxu0 0.0
        %1298 = vmatprep.subr.mxu0 0.0
        %1299 = vmatpush1.msra.mxu0 0.0
        %1300 = vmatprep.subr.mxu0 0.0
        %1301 = vmatpush1.msra.mxu0 0.0
        %1302 = vmatprep.subr.mxu0 0.0
        %1303 = vmatpush1.msra.mxu0 0.0
        %1304 = vmatprep.subr.mxu0 0.0
        %1305 = vmatpush1.msra.mxu0 0.0
        %1306 = vmatprep.subr.mxu0 0.0
        %1307 = vmatpush1.msra.mxu0 0.0
        %1308 = vmatprep.subr.mxu0 0.0
        %1309 = vmatpush1.msra.mxu0 0.0
        %1310 = vmatprep.subr.mxu0 0.0
        %1311 = vmatpush1.msra.mxu0 0.0
        %1312 = vmatprep.subr.mxu0 0.0
        %1313 = vmatpush1.msra.mxu0 0.0
        %1314 = vmatprep.subr.mxu0 0.0
        %1315 = vmatpush1.msra.mxu0 0.0
        %1316 = vmatprep.subr.mxu0 0.0
        %1317 = vmatpush1.msra.mxu0 0.0
        %1318 = vmatprep.subr.mxu0 0.0
        %1319 = vmatpush1.msra.mxu0 0.0
        %1320 = vmatprep.subr.mxu0 0.0
        %1321 = vmatpush1.msra.mxu0 0.0
        %1322 = vmatprep.subr.mxu0 0.0
        %1323 = vmatpush1.msra.mxu0 0.0
        %1324 = vmatprep.subr.mxu0 0.0
        %1325 = vmatpush1.msra.mxu0 0.0
        %1326 = vmatprep.subr.mxu0 0.0
        %1327 = vmatpush1.msra.mxu0 0.0
        %1328 = vmatprep.subr.mxu0 0.0
        %1329 = vmatpush1.msra.mxu0 0.0
        %1330 = vmatprep.subr.mxu0 0.0
        %1331 = vmatpush1.msra.mxu0 0.0
        %1332 = vmatprep.mubr.f32.mxu0 0.0
        %1333 = vmatmul.mubr.f32.gmra.mrb[0].mxu0 %v1260
        %v1334 = vpop.f32.mrb[0].mxu0
        %v1335 = vadd.f32 0.0, %v1334
        %v1336 = vpop.f32.mrb[0].mxu0
        %v1337 = vadd.f32 0.0, %v1336
        %1338 = vdwg.mxu0
        %1339 = vmatprep.subr.mxu0 0.0
        %1340 = vmatpush1.msra.mxu0 %v1266
        %1341 = vmatprep.subr.mxu0 0.0
        %1342 = vmatpush1.msra.mxu0 0.0
        %1343 = vmatprep.subr.mxu0 0.0
        %1344 = vmatpush1.msra.mxu0 0.0
        %1345 = vmatprep.subr.mxu0 0.0
        %1346 = vmatpush1.msra.mxu0 0.0
        %1347 = vmatprep.subr.mxu0 0.0
        %1348 = vmatpush1.msra.mxu0 0.0
        %1349 = vmatprep.subr.mxu0 0.0
        %1350 = vmatpush1.msra.mxu0 0.0
        %1351 = vmatprep.subr.mxu0 0.0
        %1352 = vmatpush1.msra.mxu0 0.0
        %1353 = vmatprep.subr.mxu0 0.0
        %1354 = vmatpush1.msra.mxu0 0.0
        %1355 = vmatprep.subr.mxu0 0.0
        %1356 = vmatpush1.msra.mxu0 0.0
        %1357 = vmatprep.subr.mxu0 0.0
        %1358 = vmatpush1.msra.mxu0 0.0
        %1359 = vmatprep.subr.mxu0 0.0
        %1360 = vmatpush1.msra.mxu0 0.0
        %1361 = vmatprep.subr.mxu0 0.0
        %1362 = vmatpush1.msra.mxu0 0.0
        %1363 = vmatprep.subr.mxu0 0.0
        %1364 = vmatpush1.msra.mxu0 0.0
        %1365 = vmatprep.subr.mxu0 0.0
        %1366 = vmatpush1.msra.mxu0 0.0
        %1367 = vmatprep.subr.mxu0 0.0
        %1368 = vmatpush1.msra.mxu0 0.0
        %1369 = vmatprep.subr.mxu0 0.0
        %1370 = vmatpush1.msra.mxu0 0.0
        %1371 = vmatprep.subr.mxu0 0.0
        %1372 = vmatpush1.msra.mxu0 0.0
        %1373 = vmatprep.subr.mxu0 0.0
        %1374 = vmatpush1.msra.mxu0 0.0
        %1375 = vmatprep.subr.mxu0 0.0
        %1376 = vmatpush1.msra.mxu0 0.0
        %1377 = vmatprep.subr.mxu0 0.0
        %1378 = vmatpush1.msra.mxu0 0.0
        %1379 = vmatprep.subr.mxu0 0.0
        %1380 = vmatpush1.msra.mxu0 0.0
        %1381 = vmatprep.subr.mxu0 0.0
        %1382 = vmatpush1.msra.mxu0 0.0
        %1383 = vmatprep.subr.mxu0 0.0
        %1384 = vmatpush1.msra.mxu0 0.0
        %1385 = vmatprep.subr.mxu0 0.0
        %1386 = vmatpush1.msra.mxu0 0.0
        %1387 = vmatprep.subr.mxu0 0.0
        %1388 = vmatpush1.msra.mxu0 0.0
        %1389 = vmatprep.subr.mxu0 0.0
        %1390 = vmatpush1.msra.mxu0 0.0
        %1391 = vmatprep.subr.mxu0 0.0
        %1392 = vmatpush1.msra.mxu0 0.0
        %1393 = vmatprep.subr.mxu0 0.0
        %1394 = vmatpush1.msra.mxu0 0.0
        %1395 = vmatprep.subr.mxu0 0.0
        %1396 = vmatpush1.msra.mxu0 0.0
        %1397 = vmatprep.subr.mxu0 0.0
        %1398 = vmatpush1.msra.mxu0 0.0
        %1399 = vmatprep.subr.mxu0 0.0
        %1400 = vmatpush1.msra.mxu0 0.0
        %1401 = vmatprep.subr.mxu0 0.0
        %1402 = vmatpush1.msra.mxu0 0.0
        %1403 = vmatprep.mubr.f32.mxu0 0.0
        %1404 = vmatmul.mubr.f32.gmra.mrb[0].mxu0 %v1260
        %v1405 = vpop.f32.mrb[0].mxu0
        %v1406 = vadd.f32 0.0, %v1405
        %v1407 = vpop.f32.mrb[0].mxu0
        %1408 = vdwg.mxu0
        %v1409 = vadd.f32 %v993, %v1335
        %v1410 = vadd.f32 %v995, %v1337
        %v1411 = vadd.f32 %v1064, %v1406
        %v1412 = vld [vmem:[#allocation2] sm:$0xff]
        %v1413 = vld [vmem:[#allocation2 + $0x8] sm:$0xff]
        %v1414 = vld [vmem:[%s357] sm:$0xff]
        %v1415 = vld [vmem:[%s357 + $0x8] sm:$0xff]
        %s1416 = scalar_lea.vmem %s5, 24
        %v1417 = vld [vmem:[%s1416] sm:$0xff]
        %v1420 = vcombine.high %v1412, %v1412
        %v1421 = vcombine.high %v1413, %v1413
        %1422 = vrot.lane.b32.xlu0 %v1412, 110
        %v1423 = vpop.permute.xlu0 %1422
        %1424 = vrot.lane.b32.xlu0 %v1420, 110
        %v1425 = vpop.permute.xlu0 %1424
        %1426 = vrot.lane.b32.xlu0 %v1413, 110
        %v1427 = vpop.permute.xlu0 %1426
        %1428 = vrot.lane.b32.xlu0 %v1421, 110
        %v1429 = vpop.permute.xlu0 %1428
        %vm1430 = vcmask 900096
        %v1431 = vsel %vm1430, %v1423, %v1425
        %v1432 = vsel %vm1430, %v1425, %v1427
        %v1433 = vsel %vm1430, %v1427, %v1429
        %v1435 = vsel %vm447, %v1417, 0
        %v1437 = vsel %vm417, %v1431, 0
        %v1439 = vsel %vm417, %v1432, 0
        %v1441 = vsel %vm417, %v1433, 0
        %1443 = vmatprep.subr.mxu0 %v1439
        %1444 = vmatpush1.msra.mxu0 %v1437
        %1445 = vmatprep.subr.mxu0 0.0
        %1446 = vmatpush1.msra.mxu0 0.0
        %1447 = vmatprep.subr.mxu0 0.0
        %1448 = vmatpush1.msra.mxu0 0.0
        %1449 = vmatprep.subr.mxu0 0.0
        %1450 = vmatpush1.msra.mxu0 0.0
        %1451 = vmatprep.subr.mxu0 0.0
        %1452 = vmatpush1.msra.mxu0 0.0
        %1453 = vmatprep.subr.mxu0 0.0
        %1454 = vmatpush1.msra.mxu0 0.0
        %1455 = vmatprep.subr.mxu0 0.0
        %1456 = vmatpush1.msra.mxu0 0.0
        %1457 = vmatprep.subr.mxu0 0.0
        %1458 = vmatpush1.msra.mxu0 0.0
        %1459 = vmatprep.subr.mxu0 0.0
        %1460 = vmatpush1.msra.mxu0 0.0
        %1461 = vmatprep.subr.mxu0 0.0
        %1462 = vmatpush1.msra.mxu0 0.0
        %1463 = vmatprep.subr.mxu0 0.0
        %1464 = vmatpush1.msra.mxu0 0.0
        %1465 = vmatprep.subr.mxu0 0.0
        %1466 = vmatpush1.msra.mxu0 0.0
        %1467 = vmatprep.subr.mxu0 0.0
        %1468 = vmatpush1.msra.mxu0 0.0
        %1469 = vmatprep.subr.mxu0 0.0
        %1470 = vmatpush1.msra.mxu0 0.0
        %1471 = vmatprep.subr.mxu0 0.0
        %1472 = vmatpush1.msra.mxu0 0.0
        %1473 = vmatprep.subr.mxu0 0.0
        %1474 = vmatpush1.msra.mxu0 0.0
        %1475 = vmatprep.subr.mxu0 0.0
        %1476 = vmatpush1.msra.mxu0 0.0
        %1477 = vmatprep.subr.mxu0 0.0
        %1478 = vmatpush1.msra.mxu0 0.0
        %1479 = vmatprep.subr.mxu0 0.0
        %1480 = vmatpush1.msra.mxu0 0.0
        %1481 = vmatprep.subr.mxu0 0.0
        %1482 = vmatpush1.msra.mxu0 0.0
        %1483 = vmatprep.subr.mxu0 0.0
        %1484 = vmatpush1.msra.mxu0 0.0
        %1485 = vmatprep.subr.mxu0 0.0
        %1486 = vmatpush1.msra.mxu0 0.0
        %1487 = vmatprep.subr.mxu0 0.0
        %1488 = vmatpush1.msra.mxu0 0.0
        %1489 = vmatprep.subr.mxu0 0.0
        %1490 = vmatpush1.msra.mxu0 0.0
        %1491 = vmatprep.subr.mxu0 0.0
        %1492 = vmatpush1.msra.mxu0 0.0
        %1493 = vmatprep.subr.mxu0 0.0
        %1494 = vmatpush1.msra.mxu0 0.0
        %1495 = vmatprep.subr.mxu0 0.0
        %1496 = vmatpush1.msra.mxu0 0.0
        %1497 = vmatprep.subr.mxu0 0.0
        %1498 = vmatpush1.msra.mxu0 0.0
        %1499 = vmatprep.subr.mxu0 0.0
        %1500 = vmatpush1.msra.mxu0 0.0
        %1501 = vmatprep.subr.mxu0 0.0
        %1502 = vmatpush1.msra.mxu0 0.0
        %1503 = vmatprep.subr.mxu0 0.0
        %1504 = vmatpush1.msra.mxu0 0.0
        %1505 = vmatprep.subr.mxu0 0.0
        %1506 = vmatpush1.msra.mxu0 0.0
        %1507 = vmatprep.mubr.f32.mxu0 0.0
        %1508 = vmatmul.mubr.f32.gmra.mrb[0].mxu0 %v1435
        %v1509 = vpop.f32.mrb[0].mxu0
        %v1510 = vadd.f32 0.0, %v1509
        %v1511 = vpop.f32.mrb[0].mxu0
        %v1512 = vadd.f32 0.0, %v1511
        %1513 = vdwg.mxu0
        %1514 = vmatprep.subr.mxu0 0.0
        %1515 = vmatpush1.msra.mxu0 %v1441
        %1516 = vmatprep.subr.mxu0 0.0
        %1517 = vmatpush1.msra.mxu0 0.0
        %1518 = vmatprep.subr.mxu0 0.0
        %1519 = vmatpush1.msra.mxu0 0.0
        %1520 = vmatprep.subr.mxu0 0.0
        %1521 = vmatpush1.msra.mxu0 0.0
        %1522 = vmatprep.subr.mxu0 0.0
        %1523 = vmatpush1.msra.mxu0 0.0
        %1524 = vmatprep.subr.mxu0 0.0
        %1525 = vmatpush1.msra.mxu0 0.0
        %1526 = vmatprep.subr.mxu0 0.0
        %1527 = vmatpush1.msra.mxu0 0.0
        %1528 = vmatprep.subr.mxu0 0.0
        %1529 = vmatpush1.msra.mxu0 0.0
        %1530 = vmatprep.subr.mxu0 0.0
        %1531 = vmatpush1.msra.mxu0 0.0
        %1532 = vmatprep.subr.mxu0 0.0
        %1533 = vmatpush1.msra.mxu0 0.0
        %1534 = vmatprep.subr.mxu0 0.0
        %1535 = vmatpush1.msra.mxu0 0.0
        %1536 = vmatprep.subr.mxu0 0.0
        %1537 = vmatpush1.msra.mxu0 0.0
        %1538 = vmatprep.subr.mxu0 0.0
        %1539 = vmatpush1.msra.mxu0 0.0
        %1540 = vmatprep.subr.mxu0 0.0
        %1541 = vmatpush1.msra.mxu0 0.0
        %1542 = vmatprep.subr.mxu0 0.0
        %1543 = vmatpush1.msra.mxu0 0.0
        %1544 = vmatprep.subr.mxu0 0.0
        %1545 = vmatpush1.msra.mxu0 0.0
        %1546 = vmatprep.subr.mxu0 0.0
        %1547 = vmatpush1.msra.mxu0 0.0
        %1548 = vmatprep.subr.mxu0 0.0
        %1549 = vmatpush1.msra.mxu0 0.0
        %1550 = vmatprep.subr.mxu0 0.0
        %1551 = vmatpush1.msra.mxu0 0.0
        %1552 = vmatprep.subr.mxu0 0.0
        %1553 = vmatpush1.msra.mxu0 0.0
        %1554 = vmatprep.subr.mxu0 0.0
        %1555 = vmatpush1.msra.mxu0 0.0
        %1556 = vmatprep.subr.mxu0 0.0
        %1557 = vmatpush1.msra.mxu0 0.0
        %1558 = vmatprep.subr.mxu0 0.0
        %1559 = vmatpush1.msra.mxu0 0.0
        %1560 = vmatprep.subr.mxu0 0.0
        %1561 = vmatpush1.msra.mxu0 0.0
        %1562 = vmatprep.subr.mxu0 0.0
        %1563 = vmatpush1.msra.mxu0 0.0
        %1564 = vmatprep.subr.mxu0 0.0
        %1565 = vmatpush1.msra.mxu0 0.0
        %1566 = vmatprep.subr.mxu0 0.0
        %1567 = vmatpush1.msra.mxu0 0.0
        %1568 = vmatprep.subr.mxu0 0.0
        %1569 = vmatpush1.msra.mxu0 0.0
        %1570 = vmatprep.subr.mxu0 0.0
        %1571 = vmatpush1.msra.mxu0 0.0
        %1572 = vmatprep.subr.mxu0 0.0
        %1573 = vmatpush1.msra.mxu0 0.0
        %1574 = vmatprep.subr.mxu0 0.0
        %1575 = vmatpush1.msra.mxu0 0.0
        %1576 = vmatprep.subr.mxu0 0.0
        %1577 = vmatpush1.msra.mxu0 0.0
        %1578 = vmatprep.mubr.f32.mxu0 0.0
        %1579 = vmatmul.mubr.f32.gmra.mrb[0].mxu0 %v1435
        %v1580 = vpop.f32.mrb[0].mxu0
        %v1581 = vadd.f32 0.0, %v1580
        %v1582 = vpop.f32.mrb[0].mxu0
        %1583 = vdwg.mxu0
        %v1584 = vadd.f32 %v1239, %v1510
        %v1585 = vadd.f32 %v1240, %v1512
        %v1586 = vadd.f32 %v1241, %v1581
        %s1587 = scalar_lea.vmem %s6, 24
        %v1588 = vld [vmem:[%s1587] sm:$0xff]
        %v1591 = vcombine.high %v1414, %v1414
        %v1592 = vcombine.high %v1415, %v1415
        %1593 = vrot.lane.b32.xlu0 %v1414, 110
        %v1594 = vpop.permute.xlu0 %1593
        %1595 = vrot.lane.b32.xlu0 %v1591, 110
        %v1596 = vpop.permute.xlu0 %1595
        %1597 = vrot.lane.b32.xlu0 %v1415, 110
        %v1598 = vpop.permute.xlu0 %1597
        %1599 = vrot.lane.b32.xlu0 %v1592, 110
        %v1600 = vpop.permute.xlu0 %1599
        %v1601 = vsel %vm1430, %v1594, %v1596
        %v1602 = vsel %vm1430, %v1596, %v1598
        %v1603 = vsel %vm1430, %v1598, %v1600
        %v1605 = vsel %vm447, %v1588, 0
        %v1607 = vsel %vm417, %v1601, 0
        %v1609 = vsel %vm417, %v1602, 0
        %v1611 = vsel %vm417, %v1603, 0
        %1613 = vmatprep.subr.mxu0 %v1609
        %1614 = vmatpush1.msra.mxu0 %v1607
        %1615 = vmatprep.subr.mxu0 0.0
        %1616 = vmatpush1.msra.mxu0 0.0
        %1617 = vmatprep.subr.mxu0 0.0
        %1618 = vmatpush1.msra.mxu0 0.0
        %1619 = vmatprep.subr.mxu0 0.0
        %1620 = vmatpush1.msra.mxu0 0.0
        %1621 = vmatprep.subr.mxu0 0.0
        %1622 = vmatpush1.msra.mxu0 0.0
        %1623 = vmatprep.subr.mxu0 0.0
        %1624 = vmatpush1.msra.mxu0 0.0
        %1625 = vmatprep.subr.mxu0 0.0
        %1626 = vmatpush1.msra.mxu0 0.0
        %1627 = vmatprep.subr.mxu0 0.0
        %1628 = vmatpush1.msra.mxu0 0.0
        %1629 = vmatprep.subr.mxu0 0.0
        %1630 = vmatpush1.msra.mxu0 0.0
        %1631 = vmatprep.subr.mxu0 0.0
        %1632 = vmatpush1.msra.mxu0 0.0
        %1633 = vmatprep.subr.mxu0 0.0
        %1634 = vmatpush1.msra.mxu0 0.0
        %1635 = vmatprep.subr.mxu0 0.0
        %1636 = vmatpush1.msra.mxu0 0.0
        %1637 = vmatprep.subr.mxu0 0.0
        %1638 = vmatpush1.msra.mxu0 0.0
        %1639 = vmatprep.subr.mxu0 0.0
        %1640 = vmatpush1.msra.mxu0 0.0
        %1641 = vmatprep.subr.mxu0 0.0
        %1642 = vmatpush1.msra.mxu0 0.0
        %1643 = vmatprep.subr.mxu0 0.0
        %1644 = vmatpush1.msra.mxu0 0.0
        %1645 = vmatprep.subr.mxu0 0.0
        %1646 = vmatpush1.msra.mxu0 0.0
        %1647 = vmatprep.subr.mxu0 0.0
        %1648 = vmatpush1.msra.mxu0 0.0
        %1649 = vmatprep.subr.mxu0 0.0
        %1650 = vmatpush1.msra.mxu0 0.0
        %1651 = vmatprep.subr.mxu0 0.0
        %1652 = vmatpush1.msra.mxu0 0.0
        %1653 = vmatprep.subr.mxu0 0.0
        %1654 = vmatpush1.msra.mxu0 0.0
        %1655 = vmatprep.subr.mxu0 0.0
        %1656 = vmatpush1.msra.mxu0 0.0
        %1657 = vmatprep.subr.mxu0 0.0
        %1658 = vmatpush1.msra.mxu0 0.0
        %1659 = vmatprep.subr.mxu0 0.0
        %1660 = vmatpush1.msra.mxu0 0.0
        %1661 = vmatprep.subr.mxu0 0.0
        %1662 = vmatpush1.msra.mxu0 0.0
        %1663 = vmatprep.subr.mxu0 0.0
        %1664 = vmatpush1.msra.mxu0 0.0
        %1665 = vmatprep.subr.mxu0 0.0
        %1666 = vmatpush1.msra.mxu0 0.0
        %1667 = vmatprep.subr.mxu0 0.0
        %1668 = vmatpush1.msra.mxu0 0.0
        %1669 = vmatprep.subr.mxu0 0.0
        %1670 = vmatpush1.msra.mxu0 0.0
        %1671 = vmatprep.subr.mxu0 0.0
        %1672 = vmatpush1.msra.mxu0 0.0
        %1673 = vmatprep.subr.mxu0 0.0
        %1674 = vmatpush1.msra.mxu0 0.0
        %1675 = vmatprep.subr.mxu0 0.0
        %1676 = vmatpush1.msra.mxu0 0.0
        %1677 = vmatprep.mubr.f32.mxu0 0.0
        %1678 = vmatmul.mubr.f32.gmra.mrb[0].mxu0 %v1605
        %v1679 = vpop.f32.mrb[0].mxu0
        %v1680 = vadd.f32 0.0, %v1679
        %v1681 = vpop.f32.mrb[0].mxu0
        %v1682 = vadd.f32 0.0, %v1681
        %1683 = vdwg.mxu0
        %1684 = vmatprep.subr.mxu0 0.0
        %1685 = vmatpush1.msra.mxu0 %v1611
        %1686 = vmatprep.subr.mxu0 0.0
        %1687 = vmatpush1.msra.mxu0 0.0
        %1688 = vmatprep.subr.mxu0 0.0
        %1689 = vmatpush1.msra.mxu0 0.0
        %1690 = vmatprep.subr.mxu0 0.0
        %1691 = vmatpush1.msra.mxu0 0.0
        %1692 = vmatprep.subr.mxu0 0.0
        %1693 = vmatpush1.msra.mxu0 0.0
        %1694 = vmatprep.subr.mxu0 0.0
        %1695 = vmatpush1.msra.mxu0 0.0
        %1696 = vmatprep.subr.mxu0 0.0
        %1697 = vmatpush1.msra.mxu0 0.0
        %1698 = vmatprep.subr.mxu0 0.0
        %1699 = vmatpush1.msra.mxu0 0.0
        %1700 = vmatprep.subr.mxu0 0.0
        %1701 = vmatpush1.msra.mxu0 0.0
        %1702 = vmatprep.subr.mxu0 0.0
        %1703 = vmatpush1.msra.mxu0 0.0
        %1704 = vmatprep.subr.mxu0 0.0
        %1705 = vmatpush1.msra.mxu0 0.0
        %1706 = vmatprep.subr.mxu0 0.0
        %1707 = vmatpush1.msra.mxu0 0.0
        %1708 = vmatprep.subr.mxu0 0.0
        %1709 = vmatpush1.msra.mxu0 0.0
        %1710 = vmatprep.subr.mxu0 0.0
        %1711 = vmatpush1.msra.mxu0 0.0
        %1712 = vmatprep.subr.mxu0 0.0
        %1713 = vmatpush1.msra.mxu0 0.0
        %1714 = vmatprep.subr.mxu0 0.0
        %1715 = vmatpush1.msra.mxu0 0.0
        %1716 = vmatprep.subr.mxu0 0.0
        %1717 = vmatpush1.msra.mxu0 0.0
        %1718 = vmatprep.subr.mxu0 0.0
        %1719 = vmatpush1.msra.mxu0 0.0
        %1720 = vmatprep.subr.mxu0 0.0
        %1721 = vmatpush1.msra.mxu0 0.0
        %1722 = vmatprep.subr.mxu0 0.0
        %1723 = vmatpush1.msra.mxu0 0.0
        %1724 = vmatprep.subr.mxu0 0.0
        %1725 = vmatpush1.msra.mxu0 0.0
        %1726 = vmatprep.subr.mxu0 0.0
        %1727 = vmatpush1.msra.mxu0 0.0
        %1728 = vmatprep.subr.mxu0 0.0
        %1729 = vmatpush1.msra.mxu0 0.0
        %1730 = vmatprep.subr.mxu0 0.0
        %1731 = vmatpush1.msra.mxu0 0.0
        %1732 = vmatprep.subr.mxu0 0.0
        %1733 = vmatpush1.msra.mxu0 0.0
        %1734 = vmatprep.subr.mxu0 0.0
        %1735 = vmatpush1.msra.mxu0 0.0
        %1736 = vmatprep.subr.mxu0 0.0
        %1737 = vmatpush1.msra.mxu0 0.0
        %1738 = vmatprep.subr.mxu0 0.0
        %1739 = vmatpush1.msra.mxu0 0.0
        %1740 = vmatprep.subr.mxu0 0.0
        %1741 = vmatpush1.msra.mxu0 0.0
        %1742 = vmatprep.subr.mxu0 0.0
        %1743 = vmatpush1.msra.mxu0 0.0
        %1744 = vmatprep.subr.mxu0 0.0
        %1745 = vmatpush1.msra.mxu0 0.0
        %1746 = vmatprep.subr.mxu0 0.0
        %1747 = vmatpush1.msra.mxu0 0.0
        %1748 = vmatprep.mubr.f32.mxu0 0.0
        %1749 = vmatmul.mubr.f32.gmra.mrb[0].mxu0 %v1605
        %v1750 = vpop.f32.mrb[0].mxu0
        %v1751 = vadd.f32 0.0, %v1750
        %v1752 = vpop.f32.mrb[0].mxu0
        %1753 = vdwg.mxu0
        %v1754 = vadd.f32 %v1409, %v1680
        %v1755 = vadd.f32 %v1410, %v1682
        %v1756 = vadd.f32 %v1411, %v1751
        %v1757 = vld [vmem:[#allocation2] sm:$0xff]
        %v1758 = vld [vmem:[#allocation2 + $0x8] sm:$0xff]
        %v1759 = vld [vmem:[%s357] sm:$0xff]
        %v1760 = vld [vmem:[%s357 + $0x8] sm:$0xff]
        %s1761 = scalar_lea.vmem %s5, 32
        %v1762 = vld [vmem:[%s1761] sm:$0xff]
        %v1765 = vcombine.high %v1757, %v1757
        %v1766 = vcombine.high %v1758, %v1758
        %1767 = vrot.lane.b32.xlu0 %v1757, 109
        %v1768 = vpop.permute.xlu0 %1767
        %1769 = vrot.lane.b32.xlu0 %v1765, 109
        %v1770 = vpop.permute.xlu0 %1769
        %1771 = vrot.lane.b32.xlu0 %v1758, 109
        %v1772 = vpop.permute.xlu0 %1771
        %1773 = vrot.lane.b32.xlu0 %v1766, 109
        %v1774 = vpop.permute.xlu0 %1773
        %vm1775 = vcmask 891904
        %v1776 = vsel %vm1775, %v1768, %v1770
        %v1777 = vsel %vm1775, %v1770, %v1772
        %v1778 = vsel %vm1775, %v1772, %v1774
        %v1780 = vsel %vm447, %v1762, 0
        %v1782 = vsel %vm417, %v1776, 0
        %v1784 = vsel %vm417, %v1777, 0
        %v1786 = vsel %vm417, %v1778, 0
        %1788 = vmatprep.subr.mxu0 %v1784
        %1789 = vmatpush1.msra.mxu0 %v1782
        %1790 = vmatprep.subr.mxu0 0.0
        %1791 = vmatpush1.msra.mxu0 0.0
        %1792 = vmatprep.subr.mxu0 0.0
        %1793 = vmatpush1.msra.mxu0 0.0
        %1794 = vmatprep.subr.mxu0 0.0
        %1795 = vmatpush1.msra.mxu0 0.0
        %1796 = vmatprep.subr.mxu0 0.0
        %1797 = vmatpush1.msra.mxu0 0.0
        %1798 = vmatprep.subr.mxu0 0.0
        %1799 = vmatpush1.msra.mxu0 0.0
        %1800 = vmatprep.subr.mxu0 0.0
        %1801 = vmatpush1.msra.mxu0 0.0
        %1802 = vmatprep.subr.mxu0 0.0
        %1803 = vmatpush1.msra.mxu0 0.0
        %1804 = vmatprep.subr.mxu0 0.0
        %1805 = vmatpush1.msra.mxu0 0.0
        %1806 = vmatprep.subr.mxu0 0.0
        %1807 = vmatpush1.msra.mxu0 0.0
        %1808 = vmatprep.subr.mxu0 0.0
        %1809 = vmatpush1.msra.mxu0 0.0
        %1810 = vmatprep.subr.mxu0 0.0
        %1811 = vmatpush1.msra.mxu0 0.0
        %1812 = vmatprep.subr.mxu0 0.0
        %1813 = vmatpush1.msra.mxu0 0.0
        %1814 = vmatprep.subr.mxu0 0.0
        %1815 = vmatpush1.msra.mxu0 0.0
        %1816 = vmatprep.subr.mxu0 0.0
        %1817 = vmatpush1.msra.mxu0 0.0
        %1818 = vmatprep.subr.mxu0 0.0
        %1819 = vmatpush1.msra.mxu0 0.0
        %1820 = vmatprep.subr.mxu0 0.0
        %1821 = vmatpush1.msra.mxu0 0.0
        %1822 = vmatprep.subr.mxu0 0.0
        %1823 = vmatpush1.msra.mxu0 0.0
        %1824 = vmatprep.subr.mxu0 0.0
        %1825 = vmatpush1.msra.mxu0 0.0
        %1826 = vmatprep.subr.mxu0 0.0
        %1827 = vmatpush1.msra.mxu0 0.0
        %1828 = vmatprep.subr.mxu0 0.0
        %1829 = vmatpush1.msra.mxu0 0.0
        %1830 = vmatprep.subr.mxu0 0.0
        %1831 = vmatpush1.msra.mxu0 0.0
        %1832 = vmatprep.subr.mxu0 0.0
        %1833 = vmatpush1.msra.mxu0 0.0
        %1834 = vmatprep.subr.mxu0 0.0
        %1835 = vmatpush1.msra.mxu0 0.0
        %1836 = vmatprep.subr.mxu0 0.0
        %1837 = vmatpush1.msra.mxu0 0.0
        %1838 = vmatprep.subr.mxu0 0.0
        %1839 = vmatpush1.msra.mxu0 0.0
        %1840 = vmatprep.subr.mxu0 0.0
        %1841 = vmatpush1.msra.mxu0 0.0
        %1842 = vmatprep.subr.mxu0 0.0
        %1843 = vmatpush1.msra.mxu0 0.0
        %1844 = vmatprep.subr.mxu0 0.0
        %1845 = vmatpush1.msra.mxu0 0.0
        %1846 = vmatprep.subr.mxu0 0.0
        %1847 = vmatpush1.msra.mxu0 0.0
        %1848 = vmatprep.subr.mxu0 0.0
        %1849 = vmatpush1.msra.mxu0 0.0
        %1850 = vmatprep.subr.mxu0 0.0
        %1851 = vmatpush1.msra.mxu0 0.0
        %1852 = vmatprep.mubr.f32.mxu0 0.0
        %1853 = vmatmul.mubr.f32.gmra.mrb[0].mxu0 %v1780
        %v1854 = vpop.f32.mrb[0].mxu0
        %v1855 = vadd.f32 0.0, %v1854
        %v1856 = vpop.f32.mrb[0].mxu0
        %v1857 = vadd.f32 0.0, %v1856
        %1858 = vdwg.mxu0
        %1859 = vmatprep.subr.mxu0 0.0
        %1860 = vmatpush1.msra.mxu0 %v1786
        %1861 = vmatprep.subr.mxu0 0.0
        %1862 = vmatpush1.msra.mxu0 0.0
        %1863 = vmatprep.subr.mxu0 0.0
        %1864 = vmatpush1.msra.mxu0 0.0
        %1865 = vmatprep.subr.mxu0 0.0
        %1866 = vmatpush1.msra.mxu0 0.0
        %1867 = vmatprep.subr.mxu0 0.0
        %1868 = vmatpush1.msra.mxu0 0.0
        %1869 = vmatprep.subr.mxu0 0.0
        %1870 = vmatpush1.msra.mxu0 0.0
        %1871 = vmatprep.subr.mxu0 0.0
        %1872 = vmatpush1.msra.mxu0 0.0
        %1873 = vmatprep.subr.mxu0 0.0
        %1874 = vmatpush1.msra.mxu0 0.0
        %1875 = vmatprep.subr.mxu0 0.0
        %1876 = vmatpush1.msra.mxu0 0.0
        %1877 = vmatprep.subr.mxu0 0.0
        %1878 = vmatpush1.msra.mxu0 0.0
        %1879 = vmatprep.subr.mxu0 0.0
        %1880 = vmatpush1.msra.mxu0 0.0
        %1881 = vmatprep.subr.mxu0 0.0
        %1882 = vmatpush1.msra.mxu0 0.0
        %1883 = vmatprep.subr.mxu0 0.0
        %1884 = vmatpush1.msra.mxu0 0.0
        %1885 = vmatprep.subr.mxu0 0.0
        %1886 = vmatpush1.msra.mxu0 0.0
        %1887 = vmatprep.subr.mxu0 0.0
        %1888 = vmatpush1.msra.mxu0 0.0
        %1889 = vmatprep.subr.mxu0 0.0
        %1890 = vmatpush1.msra.mxu0 0.0
        %1891 = vmatprep.subr.mxu0 0.0
        %1892 = vmatpush1.msra.mxu0 0.0
        %1893 = vmatprep.subr.mxu0 0.0
        %1894 = vmatpush1.msra.mxu0 0.0
        %1895 = vmatprep.subr.mxu0 0.0
        %1896 = vmatpush1.msra.mxu0 0.0
        %1897 = vmatprep.subr.mxu0 0.0
        %1898 = vmatpush1.msra.mxu0 0.0
        %1899 = vmatprep.subr.mxu0 0.0
        %1900 = vmatpush1.msra.mxu0 0.0
        %1901 = vmatprep.subr.mxu0 0.0
        %1902 = vmatpush1.msra.mxu0 0.0
        %1903 = vmatprep.subr.mxu0 0.0
        %1904 = vmatpush1.msra.mxu0 0.0
        %1905 = vmatprep.subr.mxu0 0.0
        %1906 = vmatpush1.msra.mxu0 0.0
        %1907 = vmatprep.subr.mxu0 0.0
        %1908 = vmatpush1.msra.mxu0 0.0
        %1909 = vmatprep.subr.mxu0 0.0
        %1910 = vmatpush1.msra.mxu0 0.0
        %1911 = vmatprep.subr.mxu0 0.0
        %1912 = vmatpush1.msra.mxu0 0.0
        %1913 = vmatprep.subr.mxu0 0.0
        %1914 = vmatpush1.msra.mxu0 0.0
        %1915 = vmatprep.subr.mxu0 0.0
        %1916 = vmatpush1.msra.mxu0 0.0
        %1917 = vmatprep.subr.mxu0 0.0
        %1918 = vmatpush1.msra.mxu0 0.0
        %1919 = vmatprep.subr.mxu0 0.0
        %1920 = vmatpush1.msra.mxu0 0.0
        %1921 = vmatprep.subr.mxu0 0.0
        %1922 = vmatpush1.msra.mxu0 0.0
        %1923 = vmatprep.mubr.f32.mxu0 0.0
        %1924 = vmatmul.mubr.f32.gmra.mrb[0].mxu0 %v1780
        %v1925 = vpop.f32.mrb[0].mxu0
        %v1926 = vadd.f32 0.0, %v1925
        %v1927 = vpop.f32.mrb[0].mxu0
        %1928 = vdwg.mxu0
        %v1929 = vadd.f32 %v1584, %v1855
        %v1930 = vadd.f32 %v1585, %v1857
        %v1931 = vadd.f32 %v1586, %v1926
        %s1932 = scalar_lea.vmem %s6, 32
        %v1933 = vld [vmem:[%s1932] sm:$0xff]
        %v1936 = vcombine.high %v1759, %v1759
        %v1937 = vcombine.high %v1760, %v1760
        %1938 = vrot.lane.b32.xlu0 %v1759, 109
        %v1939 = vpop.permute.xlu0 %1938
        %1940 = vrot.lane.b32.xlu0 %v1936, 109
        %v1941 = vpop.permute.xlu0 %1940
        %1942 = vrot.lane.b32.xlu0 %v1760, 109
        %v1943 = vpop.permute.xlu0 %1942
        %1944 = vrot.lane.b32.xlu0 %v1937, 109
        %v1945 = vpop.permute.xlu0 %1944
        %v1946 = vsel %vm1775, %v1939, %v1941
        %v1947 = vsel %vm1775, %v1941, %v1943
        %v1948 = vsel %vm1775, %v1943, %v1945
        %v1950 = vsel %vm447, %v1933, 0
        %v1952 = vsel %vm417, %v1946, 0
        %v1954 = vsel %vm417, %v1947, 0
        %v1956 = vsel %vm417, %v1948, 0
        %1958 = vmatprep.subr.mxu0 %v1954
        %1959 = vmatpush1.msra.mxu0 %v1952
        %1960 = vmatprep.subr.mxu0 0.0
        %1961 = vmatpush1.msra.mxu0 0.0
        %1962 = vmatprep.subr.mxu0 0.0
        %1963 = vmatpush1.msra.mxu0 0.0
        %1964 = vmatprep.subr.mxu0 0.0
        %1965 = vmatpush1.msra.mxu0 0.0
        %1966 = vmatprep.subr.mxu0 0.0
        %1967 = vmatpush1.msra.mxu0 0.0
        %1968 = vmatprep.subr.mxu0 0.0
        %1969 = vmatpush1.msra.mxu0 0.0
        %1970 = vmatprep.subr.mxu0 0.0
        %1971 = vmatpush1.msra.mxu0 0.0
        %1972 = vmatprep.subr.mxu0 0.0
        %1973 = vmatpush1.msra.mxu0 0.0
        %1974 = vmatprep.subr.mxu0 0.0
        %1975 = vmatpush1.msra.mxu0 0.0
        %1976 = vmatprep.subr.mxu0 0.0
        %1977 = vmatpush1.msra.mxu0 0.0
        %1978 = vmatprep.subr.mxu0 0.0
        %1979 = vmatpush1.msra.mxu0 0.0
        %1980 = vmatprep.subr.mxu0 0.0
        %1981 = vmatpush1.msra.mxu0 0.0
        %1982 = vmatprep.subr.mxu0 0.0
        %1983 = vmatpush1.msra.mxu0 0.0
        %1984 = vmatprep.subr.mxu0 0.0
        %1985 = vmatpush1.msra.mxu0 0.0
        %1986 = vmatprep.subr.mxu0 0.0
        %1987 = vmatpush1.msra.mxu0 0.0
        %1988 = vmatprep.subr.mxu0 0.0
        %1989 = vmatpush1.msra.mxu0 0.0
        %1990 = vmatprep.subr.mxu0 0.0
        %1991 = vmatpush1.msra.mxu0 0.0
        %1992 = vmatprep.subr.mxu0 0.0
        %1993 = vmatpush1.msra.mxu0 0.0
        %1994 = vmatprep.subr.mxu0 0.0
        %1995 = vmatpush1.msra.mxu0 0.0
        %1996 = vmatprep.subr.mxu0 0.0
        %1997 = vmatpush1.msra.mxu0 0.0
        %1998 = vmatprep.subr.mxu0 0.0
        %1999 = vmatpush1.msra.mxu0 0.0
        %2000 = vmatprep.subr.mxu0 0.0
        %2001 = vmatpush1.msra.mxu0 0.0
        %2002 = vmatprep.subr.mxu0 0.0
        %2003 = vmatpush1.msra.mxu0 0.0
        %2004 = vmatprep.subr.mxu0 0.0
        %2005 = vmatpush1.msra.mxu0 0.0
        %2006 = vmatprep.subr.mxu0 0.0
        %2007 = vmatpush1.msra.mxu0 0.0
        %2008 = vmatprep.subr.mxu0 0.0
        %2009 = vmatpush1.msra.mxu0 0.0
        %2010 = vmatprep.subr.mxu0 0.0
        %2011 = vmatpush1.msra.mxu0 0.0
        %2012 = vmatprep.subr.mxu0 0.0
        %2013 = vmatpush1.msra.mxu0 0.0
        %2014 = vmatprep.subr.mxu0 0.0
        %2015 = vmatpush1.msra.mxu0 0.0
        %2016 = vmatprep.subr.mxu0 0.0
        %2017 = vmatpush1.msra.mxu0 0.0
        %2018 = vmatprep.subr.mxu0 0.0
        %2019 = vmatpush1.msra.mxu0 0.0
        %2020 = vmatprep.subr.mxu0 0.0
        %2021 = vmatpush1.msra.mxu0 0.0
        %2022 = vmatprep.mubr.f32.mxu0 0.0
        %2023 = vmatmul.mubr.f32.gmra.mrb[0].mxu0 %v1950
        %v2024 = vpop.f32.mrb[0].mxu0
        %v2025 = vadd.f32 0.0, %v2024
        %v2026 = vpop.f32.mrb[0].mxu0
        %v2027 = vadd.f32 0.0, %v2026
        %2028 = vdwg.mxu0
        %2029 = vmatprep.subr.mxu0 0.0
        %2030 = vmatpush1.msra.mxu0 %v1956
        %2031 = vmatprep.subr.mxu0 0.0
        %2032 = vmatpush1.msra.mxu0 0.0
        %2033 = vmatprep.subr.mxu0 0.0
        %2034 = vmatpush1.msra.mxu0 0.0
        %2035 = vmatprep.subr.mxu0 0.0
        %2036 = vmatpush1.msra.mxu0 0.0
        %2037 = vmatprep.subr.mxu0 0.0
        %2038 = vmatpush1.msra.mxu0 0.0
        %2039 = vmatprep.subr.mxu0 0.0
        %2040 = vmatpush1.msra.mxu0 0.0
        %2041 = vmatprep.subr.mxu0 0.0
        %2042 = vmatpush1.msra.mxu0 0.0
        %2043 = vmatprep.subr.mxu0 0.0
        %2044 = vmatpush1.msra.mxu0 0.0
        %2045 = vmatprep.subr.mxu0 0.0
        %2046 = vmatpush1.msra.mxu0 0.0
        %2047 = vmatprep.subr.mxu0 0.0
        %2048 = vmatpush1.msra.mxu0 0.0
        %2049 = vmatprep.subr.mxu0 0.0
        %2050 = vmatpush1.msra.mxu0 0.0
        %2051 = vmatprep.subr.mxu0 0.0
        %2052 = vmatpush1.msra.mxu0 0.0
        %2053 = vmatprep.subr.mxu0 0.0
        %2054 = vmatpush1.msra.mxu0 0.0
        %2055 = vmatprep.subr.mxu0 0.0
        %2056 = vmatpush1.msra.mxu0 0.0
        %2057 = vmatprep.subr.mxu0 0.0
        %2058 = vmatpush1.msra.mxu0 0.0
        %2059 = vmatprep.subr.mxu0 0.0
        %2060 = vmatpush1.msra.mxu0 0.0
        %2061 = vmatprep.subr.mxu0 0.0
        %2062 = vmatpush1.msra.mxu0 0.0
        %2063 = vmatprep.subr.mxu0 0.0
        %2064 = vmatpush1.msra.mxu0 0.0
        %2065 = vmatprep.subr.mxu0 0.0
        %2066 = vmatpush1.msra.mxu0 0.0
        %2067 = vmatprep.subr.mxu0 0.0
        %2068 = vmatpush1.msra.mxu0 0.0
        %2069 = vmatprep.subr.mxu0 0.0
        %2070 = vmatpush1.msra.mxu0 0.0
        %2071 = vmatprep.subr.mxu0 0.0
        %2072 = vmatpush1.msra.mxu0 0.0
        %2073 = vmatprep.subr.mxu0 0.0
        %2074 = vmatpush1.msra.mxu0 0.0
        %2075 = vmatprep.subr.mxu0 0.0
        %2076 = vmatpush1.msra.mxu0 0.0
        %2077 = vmatprep.subr.mxu0 0.0
        %2078 = vmatpush1.msra.mxu0 0.0
        %2079 = vmatprep.subr.mxu0 0.0
        %2080 = vmatpush1.msra.mxu0 0.0
        %2081 = vmatprep.subr.mxu0 0.0
        %2082 = vmatpush1.msra.mxu0 0.0
        %2083 = vmatprep.subr.mxu0 0.0
        %2084 = vmatpush1.msra.mxu0 0.0
        %2085 = vmatprep.subr.mxu0 0.0
        %2086 = vmatpush1.msra.mxu0 0.0
        %2087 = vmatprep.subr.mxu0 0.0
        %2088 = vmatpush1.msra.mxu0 0.0
        %2089 = vmatprep.subr.mxu0 0.0
        %2090 = vmatpush1.msra.mxu0 0.0
        %2091 = vmatprep.subr.mxu0 0.0
        %2092 = vmatpush1.msra.mxu0 0.0
        %2093 = vmatprep.mubr.f32.mxu0 0.0
        %2094 = vmatmul.mubr.f32.gmra.mrb[0].mxu0 %v1950
        %v2095 = vpop.f32.mrb[0].mxu0
        %v2096 = vadd.f32 0.0, %v2095
        %v2097 = vpop.f32.mrb[0].mxu0
        %2098 = vdwg.mxu0
        %v2099 = vadd.f32 %v1754, %v2025
        %v2100 = vadd.f32 %v1755, %v2027
        %v2101 = vadd.f32 %v1756, %v2096
        %v2102 = vld [vmem:[#allocation2] sm:$0xff]
        %v2103 = vld [vmem:[#allocation2 + $0x8] sm:$0xff]
        %v2104 = vld [vmem:[%s357] sm:$0xff]
        %v2105 = vld [vmem:[%s357 + $0x8] sm:$0xff]
        %s2106 = scalar_lea.vmem %s5, 40
        %v2107 = vld [vmem:[%s2106] sm:$0xff]
        %v2110 = vcombine.high %v2102, %v2102
        %v2111 = vcombine.high %v2103, %v2103
        %2112 = vrot.lane.b32.xlu0 %v2102, 108
        %v2113 = vpop.permute.xlu0 %2112
        %2114 = vrot.lane.b32.xlu0 %v2110, 108
        %v2115 = vpop.permute.xlu0 %2114
        %2116 = vrot.lane.b32.xlu0 %v2103, 108
        %v2117 = vpop.permute.xlu0 %2116
        %2118 = vrot.lane.b32.xlu0 %v2111, 108
        %v2119 = vpop.permute.xlu0 %2118
        %vm2120 = vcmask 883712
        %v2121 = vsel %vm2120, %v2113, %v2115
        %v2122 = vsel %vm2120, %v2115, %v2117
        %v2123 = vsel %vm2120, %v2117, %v2119
        %v2125 = vsel %vm447, %v2107, 0
        %v2127 = vsel %vm417, %v2121, 0
        %v2129 = vsel %vm417, %v2122, 0
        %v2131 = vsel %vm417, %v2123, 0
        %2133 = vmatprep.subr.mxu0 %v2129
        %2134 = vmatpush1.msra.mxu0 %v2127
        %2135 = vmatprep.subr.mxu0 0.0
        %2136 = vmatpush1.msra.mxu0 0.0
        %2137 = vmatprep.subr.mxu0 0.0
        %2138 = vmatpush1.msra.mxu0 0.0
        %2139 = vmatprep.subr.mxu0 0.0
        %2140 = vmatpush1.msra.mxu0 0.0
        %2141 = vmatprep.subr.mxu0 0.0
        %2142 = vmatpush1.msra.mxu0 0.0
        %2143 = vmatprep.subr.mxu0 0.0
        %2144 = vmatpush1.msra.mxu0 0.0
        %2145 = vmatprep.subr.mxu0 0.0
        %2146 = vmatpush1.msra.mxu0 0.0
        %2147 = vmatprep.subr.mxu0 0.0
        %2148 = vmatpush1.msra.mxu0 0.0
        %2149 = vmatprep.subr.mxu0 0.0
        %2150 = vmatpush1.msra.mxu0 0.0
        %2151 = vmatprep.subr.mxu0 0.0
        %2152 = vmatpush1.msra.mxu0 0.0
        %2153 = vmatprep.subr.mxu0 0.0
        %2154 = vmatpush1.msra.mxu0 0.0
        %2155 = vmatprep.subr.mxu0 0.0
        %2156 = vmatpush1.msra.mxu0 0.0
        %2157 = vmatprep.subr.mxu0 0.0
        %2158 = vmatpush1.msra.mxu0 0.0
        %2159 = vmatprep.subr.mxu0 0.0
        %2160 = vmatpush1.msra.mxu0 0.0
        %2161 = vmatprep.subr.mxu0 0.0
        %2162 = vmatpush1.msra.mxu0 0.0
        %2163 = vmatprep.subr.mxu0 0.0
        %2164 = vmatpush1.msra.mxu0 0.0
        %2165 = vmatprep.subr.mxu0 0.0
        %2166 = vmatpush1.msra.mxu0 0.0
        %2167 = vmatprep.subr.mxu0 0.0
        %2168 = vmatpush1.msra.mxu0 0.0
        %2169 = vmatprep.subr.mxu0 0.0
        %2170 = vmatpush1.msra.mxu0 0.0
        %2171 = vmatprep.subr.mxu0 0.0
        %2172 = vmatpush1.msra.mxu0 0.0
        %2173 = vmatprep.subr.mxu0 0.0
        %2174 = vmatpush1.msra.mxu0 0.0
        %2175 = vmatprep.subr.mxu0 0.0
        %2176 = vmatpush1.msra.mxu0 0.0
        %2177 = vmatprep.subr.mxu0 0.0
        %2178 = vmatpush1.msra.mxu0 0.0
        %2179 = vmatprep.subr.mxu0 0.0
        %2180 = vmatpush1.msra.mxu0 0.0
        %2181 = vmatprep.subr.mxu0 0.0
        %2182 = vmatpush1.msra.mxu0 0.0
        %2183 = vmatprep.subr.mxu0 0.0
        %2184 = vmatpush1.msra.mxu0 0.0
        %2185 = vmatprep.subr.mxu0 0.0
        %2186 = vmatpush1.msra.mxu0 0.0
        %2187 = vmatprep.subr.mxu0 0.0
        %2188 = vmatpush1.msra.mxu0 0.0
        %2189 = vmatprep.subr.mxu0 0.0
        %2190 = vmatpush1.msra.mxu0 0.0
        %2191 = vmatprep.subr.mxu0 0.0
        %2192 = vmatpush1.msra.mxu0 0.0
        %2193 = vmatprep.subr.mxu0 0.0
        %2194 = vmatpush1.msra.mxu0 0.0
        %2195 = vmatprep.subr.mxu0 0.0
        %2196 = vmatpush1.msra.mxu0 0.0
        %2197 = vmatprep.mubr.f32.mxu0 0.0
        %2198 = vmatmul.mubr.f32.gmra.mrb[0].mxu0 %v2125
        %v2199 = vpop.f32.mrb[0].mxu0
        %v2200 = vadd.f32 0.0, %v2199
        %v2201 = vpop.f32.mrb[0].mxu0
        %v2202 = vadd.f32 0.0, %v2201
        %2203 = vdwg.mxu0
        %2204 = vmatprep.subr.mxu0 0.0
        %2205 = vmatpush1.msra.mxu0 %v2131
        %2206 = vmatprep.subr.mxu0 0.0
        %2207 = vmatpush1.msra.mxu0 0.0
        %2208 = vmatprep.subr.mxu0 0.0
        %2209 = vmatpush1.msra.mxu0 0.0
        %2210 = vmatprep.subr.mxu0 0.0
        %2211 = vmatpush1.msra.mxu0 0.0
        %2212 = vmatprep.subr.mxu0 0.0
        %2213 = vmatpush1.msra.mxu0 0.0
        %2214 = vmatprep.subr.mxu0 0.0
        %2215 = vmatpush1.msra.mxu0 0.0
        %2216 = vmatprep.subr.mxu0 0.0
        %2217 = vmatpush1.msra.mxu0 0.0
        %2218 = vmatprep.subr.mxu0 0.0
        %2219 = vmatpush1.msra.mxu0 0.0
        %2220 = vmatprep.subr.mxu0 0.0
        %2221 = vmatpush1.msra.mxu0 0.0
        %2222 = vmatprep.subr.mxu0 0.0
        %2223 = vmatpush1.msra.mxu0 0.0
        %2224 = vmatprep.subr.mxu0 0.0
        %2225 = vmatpush1.msra.mxu0 0.0
        %2226 = vmatprep.subr.mxu0 0.0
        %2227 = vmatpush1.msra.mxu0 0.0
        %2228 = vmatprep.subr.mxu0 0.0
        %2229 = vmatpush1.msra.mxu0 0.0
        %2230 = vmatprep.subr.mxu0 0.0
        %2231 = vmatpush1.msra.mxu0 0.0
        %2232 = vmatprep.subr.mxu0 0.0
        %2233 = vmatpush1.msra.mxu0 0.0
        %2234 = vmatprep.subr.mxu0 0.0
        %2235 = vmatpush1.msra.mxu0 0.0
        %2236 = vmatprep.subr.mxu0 0.0
        %2237 = vmatpush1.msra.mxu0 0.0
        %2238 = vmatprep.subr.mxu0 0.0
        %2239 = vmatpush1.msra.mxu0 0.0
        %2240 = vmatprep.subr.mxu0 0.0
        %2241 = vmatpush1.msra.mxu0 0.0
        %2242 = vmatprep.subr.mxu0 0.0
        %2243 = vmatpush1.msra.mxu0 0.0
        %2244 = vmatprep.subr.mxu0 0.0
        %2245 = vmatpush1.msra.mxu0 0.0
        %2246 = vmatprep.subr.mxu0 0.0
        %2247 = vmatpush1.msra.mxu0 0.0
        %2248 = vmatprep.subr.mxu0 0.0
        %2249 = vmatpush1.msra.mxu0 0.0
        %2250 = vmatprep.subr.mxu0 0.0
        %2251 = vmatpush1.msra.mxu0 0.0
        %2252 = vmatprep.subr.mxu0 0.0
        %2253 = vmatpush1.msra.mxu0 0.0
        %2254 = vmatprep.subr.mxu0 0.0
        %2255 = vmatpush1.msra.mxu0 0.0
        %2256 = vmatprep.subr.mxu0 0.0
        %2257 = vmatpush1.msra.mxu0 0.0
        %2258 = vmatprep.subr.mxu0 0.0
        %2259 = vmatpush1.msra.mxu0 0.0
        %2260 = vmatprep.subr.mxu0 0.0
        %2261 = vmatpush1.msra.mxu0 0.0
        %2262 = vmatprep.subr.mxu0 0.0
        %2263 = vmatpush1.msra.mxu0 0.0
        %2264 = vmatprep.subr.mxu0 0.0
        %2265 = vmatpush1.msra.mxu0 0.0
        %2266 = vmatprep.subr.mxu0 0.0
        %2267 = vmatpush1.msra.mxu0 0.0
        %2268 = vmatprep.mubr.f32.mxu0 0.0
        %2269 = vmatmul.mubr.f32.gmra.mrb[0].mxu0 %v2125
        %v2270 = vpop.f32.mrb[0].mxu0
        %v2271 = vadd.f32 0.0, %v2270
        %v2272 = vpop.f32.mrb[0].mxu0
        %2273 = vdwg.mxu0
        %v2274 = vadd.f32 %v1929, %v2200
        %v2275 = vadd.f32 %v1930, %v2202
        %v2276 = vadd.f32 %v1931, %v2271
        %s2277 = scalar_lea.vmem %s6, 40
        %v2278 = vld [vmem:[%s2277] sm:$0xff]
        %v2281 = vcombine.high %v2104, %v2104
        %v2282 = vcombine.high %v2105, %v2105
        %2283 = vrot.lane.b32.xlu0 %v2104, 108
        %v2284 = vpop.permute.xlu0 %2283
        %2285 = vrot.lane.b32.xlu0 %v2281, 108
        %v2286 = vpop.permute.xlu0 %2285
        %2287 = vrot.lane.b32.xlu0 %v2105, 108
        %v2288 = vpop.permute.xlu0 %2287
        %2289 = vrot.lane.b32.xlu0 %v2282, 108
        %v2290 = vpop.permute.xlu0 %2289
        %v2291 = vsel %vm2120, %v2284, %v2286
        %v2292 = vsel %vm2120, %v2286, %v2288
        %v2293 = vsel %vm2120, %v2288, %v2290
        %v2295 = vsel %vm447, %v2278, 0
        %v2297 = vsel %vm417, %v2291, 0
        %v2299 = vsel %vm417, %v2292, 0
        %v2301 = vsel %vm417, %v2293, 0
        %2303 = vmatprep.subr.mxu0 %v2299
        %2304 = vmatpush1.msra.mxu0 %v2297
        %2305 = vmatprep.subr.mxu0 0.0
        %2306 = vmatpush1.msra.mxu0 0.0
        %2307 = vmatprep.subr.mxu0 0.0
        %2308 = vmatpush1.msra.mxu0 0.0
        %2309 = vmatprep.subr.mxu0 0.0
        %2310 = vmatpush1.msra.mxu0 0.0
        %2311 = vmatprep.subr.mxu0 0.0
        %2312 = vmatpush1.msra.mxu0 0.0
        %2313 = vmatprep.subr.mxu0 0.0
        %2314 = vmatpush1.msra.mxu0 0.0
        %2315 = vmatprep.subr.mxu0 0.0
        %2316 = vmatpush1.msra.mxu0 0.0
        %2317 = vmatprep.subr.mxu0 0.0
        %2318 = vmatpush1.msra.mxu0 0.0
        %2319 = vmatprep.subr.mxu0 0.0
        %2320 = vmatpush1.msra.mxu0 0.0
        %2321 = vmatprep.subr.mxu0 0.0
        %2322 = vmatpush1.msra.mxu0 0.0
        %2323 = vmatprep.subr.mxu0 0.0
        %2324 = vmatpush1.msra.mxu0 0.0
        %2325 = vmatprep.subr.mxu0 0.0
        %2326 = vmatpush1.msra.mxu0 0.0
        %2327 = vmatprep.subr.mxu0 0.0
        %2328 = vmatpush1.msra.mxu0 0.0
        %2329 = vmatprep.subr.mxu0 0.0
        %2330 = vmatpush1.msra.mxu0 0.0
        %2331 = vmatprep.subr.mxu0 0.0
        %2332 = vmatpush1.msra.mxu0 0.0
        %2333 = vmatprep.subr.mxu0 0.0
        %2334 = vmatpush1.msra.mxu0 0.0
        %2335 = vmatprep.subr.mxu0 0.0
        %2336 = vmatpush1.msra.mxu0 0.0
        %2337 = vmatprep.subr.mxu0 0.0
        %2338 = vmatpush1.msra.mxu0 0.0
        %2339 = vmatprep.subr.mxu0 0.0
        %2340 = vmatpush1.msra.mxu0 0.0
        %2341 = vmatprep.subr.mxu0 0.0
        %2342 = vmatpush1.msra.mxu0 0.0
        %2343 = vmatprep.subr.mxu0 0.0
        %2344 = vmatpush1.msra.mxu0 0.0
        %2345 = vmatprep.subr.mxu0 0.0
        %2346 = vmatpush1.msra.mxu0 0.0
        %2347 = vmatprep.subr.mxu0 0.0
        %2348 = vmatpush1.msra.mxu0 0.0
        %2349 = vmatprep.subr.mxu0 0.0
        %2350 = vmatpush1.msra.mxu0 0.0
        %2351 = vmatprep.subr.mxu0 0.0
        %2352 = vmatpush1.msra.mxu0 0.0
        %2353 = vmatprep.subr.mxu0 0.0
        %2354 = vmatpush1.msra.mxu0 0.0
        %2355 = vmatprep.subr.mxu0 0.0
        %2356 = vmatpush1.msra.mxu0 0.0
        %2357 = vmatprep.subr.mxu0 0.0
        %2358 = vmatpush1.msra.mxu0 0.0
        %2359 = vmatprep.subr.mxu0 0.0
        %2360 = vmatpush1.msra.mxu0 0.0
        %2361 = vmatprep.subr.mxu0 0.0
        %2362 = vmatpush1.msra.mxu0 0.0
        %2363 = vmatprep.subr.mxu0 0.0
        %2364 = vmatpush1.msra.mxu0 0.0
        %2365 = vmatprep.subr.mxu0 0.0
        %2366 = vmatpush1.msra.mxu0 0.0
        %2367 = vmatprep.mubr.f32.mxu0 0.0
        %2368 = vmatmul.mubr.f32.gmra.mrb[0].mxu0 %v2295
        %v2369 = vpop.f32.mrb[0].mxu0
        %v2370 = vadd.f32 0.0, %v2369
        %v2371 = vpop.f32.mrb[0].mxu0
        %v2372 = vadd.f32 0.0, %v2371
        %2373 = vdwg.mxu0
        %2374 = vmatprep.subr.mxu0 0.0
        %2375 = vmatpush1.msra.mxu0 %v2301
        %2376 = vmatprep.subr.mxu0 0.0
        %2377 = vmatpush1.msra.mxu0 0.0
        %2378 = vmatprep.subr.mxu0 0.0
        %2379 = vmatpush1.msra.mxu0 0.0
        %2380 = vmatprep.subr.mxu0 0.0
        %2381 = vmatpush1.msra.mxu0 0.0
        %2382 = vmatprep.subr.mxu0 0.0
        %2383 = vmatpush1.msra.mxu0 0.0
        %2384 = vmatprep.subr.mxu0 0.0
        %2385 = vmatpush1.msra.mxu0 0.0
        %2386 = vmatprep.subr.mxu0 0.0
        %2387 = vmatpush1.msra.mxu0 0.0
        %2388 = vmatprep.subr.mxu0 0.0
        %2389 = vmatpush1.msra.mxu0 0.0
        %2390 = vmatprep.subr.mxu0 0.0
        %2391 = vmatpush1.msra.mxu0 0.0
        %2392 = vmatprep.subr.mxu0 0.0
        %2393 = vmatpush1.msra.mxu0 0.0
        %2394 = vmatprep.subr.mxu0 0.0
        %2395 = vmatpush1.msra.mxu0 0.0
        %2396 = vmatprep.subr.mxu0 0.0
        %2397 = vmatpush1.msra.mxu0 0.0
        %2398 = vmatprep.subr.mxu0 0.0
        %2399 = vmatpush1.msra.mxu0 0.0
        %2400 = vmatprep.subr.mxu0 0.0
        %2401 = vmatpush1.msra.mxu0 0.0
        %2402 = vmatprep.subr.mxu0 0.0
        %2403 = vmatpush1.msra.mxu0 0.0
        %2404 = vmatprep.subr.mxu0 0.0
        %2405 = vmatpush1.msra.mxu0 0.0
        %2406 = vmatprep.subr.mxu0 0.0
        %2407 = vmatpush1.msra.mxu0 0.0
        %2408 = vmatprep.subr.mxu0 0.0
        %2409 = vmatpush1.msra.mxu0 0.0
        %2410 = vmatprep.subr.mxu0 0.0
        %2411 = vmatpush1.msra.mxu0 0.0
        %2412 = vmatprep.subr.mxu0 0.0
        %2413 = vmatpush1.msra.mxu0 0.0
        %2414 = vmatprep.subr.mxu0 0.0
        %2415 = vmatpush1.msra.mxu0 0.0
        %2416 = vmatprep.subr.mxu0 0.0
        %2417 = vmatpush1.msra.mxu0 0.0
        %2418 = vmatprep.subr.mxu0 0.0
        %2419 = vmatpush1.msra.mxu0 0.0
        %2420 = vmatprep.subr.mxu0 0.0
        %2421 = vmatpush1.msra.mxu0 0.0
        %2422 = vmatprep.subr.mxu0 0.0
        %2423 = vmatpush1.msra.mxu0 0.0
        %2424 = vmatprep.subr.mxu0 0.0
        %2425 = vmatpush1.msra.mxu0 0.0
        %2426 = vmatprep.subr.mxu0 0.0
        %2427 = vmatpush1.msra.mxu0 0.0
        %2428 = vmatprep.subr.mxu0 0.0
        %2429 = vmatpush1.msra.mxu0 0.0
        %2430 = vmatprep.subr.mxu0 0.0
        %2431 = vmatpush1.msra.mxu0 0.0
        %2432 = vmatprep.subr.mxu0 0.0
        %2433 = vmatpush1.msra.mxu0 0.0
        %2434 = vmatprep.subr.mxu0 0.0
        %2435 = vmatpush1.msra.mxu0 0.0
        %2436 = vmatprep.subr.mxu0 0.0
        %2437 = vmatpush1.msra.mxu0 0.0
        %2438 = vmatprep.mubr.f32.mxu0 0.0
        %2439 = vmatmul.mubr.f32.gmra.mrb[0].mxu0 %v2295
        %v2440 = vpop.f32.mrb[0].mxu0
        %v2441 = vadd.f32 0.0, %v2440
        %v2442 = vpop.f32.mrb[0].mxu0
        %2443 = vdwg.mxu0
        %v2444 = vadd.f32 %v2099, %v2370
        %v2445 = vadd.f32 %v2100, %v2372
        %v2446 = vadd.f32 %v2101, %v2441
        %v2447 = vld [vmem:[#allocation2] sm:$0xff]
        %v2448 = vld [vmem:[#allocation2 + $0x8] sm:$0xff]
        %v2449 = vld [vmem:[%s357] sm:$0xff]
        %v2450 = vld [vmem:[%s357 + $0x8] sm:$0xff]
        %s2451 = scalar_lea.vmem %s5, 48
        %v2452 = vld [vmem:[%s2451] sm:$0xff]
        %v2455 = vcombine.high %v2447, %v2447
        %v2456 = vcombine.high %v2448, %v2448
        %2457 = vrot.lane.b32.xlu0 %v2447, 92
        %v2458 = vpop.permute.xlu0 %2457
        %2459 = vrot.lane.b32.xlu0 %v2455, 92
        %v2460 = vpop.permute.xlu0 %2459
        %2461 = vrot.lane.b32.xlu0 %v2448, 92
        %v2462 = vpop.permute.xlu0 %2461
        %2463 = vrot.lane.b32.xlu0 %v2456, 92
        %v2464 = vpop.permute.xlu0 %2463
        %vm2465 = vcmask 752640
        %v2466 = vsel %vm2465, %v2458, %v2460
        %v2467 = vsel %vm2465, %v2460, %v2462
        %v2468 = vsel %vm2465, %v2462, %v2464
        %v2470 = vsel %vm447, %v2452, 0
        %v2472 = vsel %vm417, %v2466, 0
        %v2474 = vsel %vm417, %v2467, 0
        %v2476 = vsel %vm417, %v2468, 0
        %2478 = vmatprep.subr.mxu0 %v2474
        %2479 = vmatpush1.msra.mxu0 %v2472
        %2480 = vmatprep.subr.mxu0 0.0
        %2481 = vmatpush1.msra.mxu0 0.0
        %2482 = vmatprep.subr.mxu0 0.0
        %2483 = vmatpush1.msra.mxu0 0.0
        %2484 = vmatprep.subr.mxu0 0.0
        %2485 = vmatpush1.msra.mxu0 0.0
        %2486 = vmatprep.subr.mxu0 0.0
        %2487 = vmatpush1.msra.mxu0 0.0
        %2488 = vmatprep.subr.mxu0 0.0
        %2489 = vmatpush1.msra.mxu0 0.0
        %2490 = vmatprep.subr.mxu0 0.0
        %2491 = vmatpush1.msra.mxu0 0.0
        %2492 = vmatprep.subr.mxu0 0.0
        %2493 = vmatpush1.msra.mxu0 0.0
        %2494 = vmatprep.subr.mxu0 0.0
        %2495 = vmatpush1.msra.mxu0 0.0
        %2496 = vmatprep.subr.mxu0 0.0
        %2497 = vmatpush1.msra.mxu0 0.0
        %2498 = vmatprep.subr.mxu0 0.0
        %2499 = vmatpush1.msra.mxu0 0.0
        %2500 = vmatprep.subr.mxu0 0.0
        %2501 = vmatpush1.msra.mxu0 0.0
        %2502 = vmatprep.subr.mxu0 0.0
        %2503 = vmatpush1.msra.mxu0 0.0
        %2504 = vmatprep.subr.mxu0 0.0
        %2505 = vmatpush1.msra.mxu0 0.0
        %2506 = vmatprep.subr.mxu0 0.0
        %2507 = vmatpush1.msra.mxu0 0.0
        %2508 = vmatprep.subr.mxu0 0.0
        %2509 = vmatpush1.msra.mxu0 0.0
        %2510 = vmatprep.subr.mxu0 0.0
        %2511 = vmatpush1.msra.mxu0 0.0
        %2512 = vmatprep.subr.mxu0 0.0
        %2513 = vmatpush1.msra.mxu0 0.0
        %2514 = vmatprep.subr.mxu0 0.0
        %2515 = vmatpush1.msra.mxu0 0.0
        %2516 = vmatprep.subr.mxu0 0.0
        %2517 = vmatpush1.msra.mxu0 0.0
        %2518 = vmatprep.subr.mxu0 0.0
        %2519 = vmatpush1.msra.mxu0 0.0
        %2520 = vmatprep.subr.mxu0 0.0
        %2521 = vmatpush1.msra.mxu0 0.0
        %2522 = vmatprep.subr.mxu0 0.0
        %2523 = vmatpush1.msra.mxu0 0.0
        %2524 = vmatprep.subr.mxu0 0.0
        %2525 = vmatpush1.msra.mxu0 0.0
        %2526 = vmatprep.subr.mxu0 0.0
        %2527 = vmatpush1.msra.mxu0 0.0
        %2528 = vmatprep.subr.mxu0 0.0
        %2529 = vmatpush1.msra.mxu0 0.0
        %2530 = vmatprep.subr.mxu0 0.0
        %2531 = vmatpush1.msra.mxu0 0.0
        %2532 = vmatprep.subr.mxu0 0.0
        %2533 = vmatpush1.msra.mxu0 0.0
        %2534 = vmatprep.subr.mxu0 0.0
        %2535 = vmatpush1.msra.mxu0 0.0
        %2536 = vmatprep.subr.mxu0 0.0
        %2537 = vmatpush1.msra.mxu0 0.0
        %2538 = vmatprep.subr.mxu0 0.0
        %2539 = vmatpush1.msra.mxu0 0.0
        %2540 = vmatprep.subr.mxu0 0.0
        %2541 = vmatpush1.msra.mxu0 0.0
        %2542 = vmatprep.mubr.f32.mxu0 0.0
        %2543 = vmatmul.mubr.f32.gmra.mrb[0].mxu0 %v2470
        %v2544 = vpop.f32.mrb[0].mxu0
        %v2545 = vadd.f32 0.0, %v2544
        %v2546 = vpop.f32.mrb[0].mxu0
        %v2547 = vadd.f32 0.0, %v2546
        %2548 = vdwg.mxu0
        %2549 = vmatprep.subr.mxu0 0.0
        %2550 = vmatpush1.msra.mxu0 %v2476
        %2551 = vmatprep.subr.mxu0 0.0
        %2552 = vmatpush1.msra.mxu0 0.0
        %2553 = vmatprep.subr.mxu0 0.0
        %2554 = vmatpush1.msra.mxu0 0.0
        %2555 = vmatprep.subr.mxu0 0.0
        %2556 = vmatpush1.msra.mxu0 0.0
        %2557 = vmatprep.subr.mxu0 0.0
        %2558 = vmatpush1.msra.mxu0 0.0
        %2559 = vmatprep.subr.mxu0 0.0
        %2560 = vmatpush1.msra.mxu0 0.0
        %2561 = vmatprep.subr.mxu0 0.0
        %2562 = vmatpush1.msra.mxu0 0.0
        %2563 = vmatprep.subr.mxu0 0.0
        %2564 = vmatpush1.msra.mxu0 0.0
        %2565 = vmatprep.subr.mxu0 0.0
        %2566 = vmatpush1.msra.mxu0 0.0
        %2567 = vmatprep.subr.mxu0 0.0
        %2568 = vmatpush1.msra.mxu0 0.0
        %2569 = vmatprep.subr.mxu0 0.0
        %2570 = vmatpush1.msra.mxu0 0.0
        %2571 = vmatprep.subr.mxu0 0.0
        %2572 = vmatpush1.msra.mxu0 0.0
        %2573 = vmatprep.subr.mxu0 0.0
        %2574 = vmatpush1.msra.mxu0 0.0
        %2575 = vmatprep.subr.mxu0 0.0
        %2576 = vmatpush1.msra.mxu0 0.0
        %2577 = vmatprep.subr.mxu0 0.0
        %2578 = vmatpush1.msra.mxu0 0.0
        %2579 = vmatprep.subr.mxu0 0.0
        %2580 = vmatpush1.msra.mxu0 0.0
        %2581 = vmatprep.subr.mxu0 0.0
        %2582 = vmatpush1.msra.mxu0 0.0
        %2583 = vmatprep.subr.mxu0 0.0
        %2584 = vmatpush1.msra.mxu0 0.0
        %2585 = vmatprep.subr.mxu0 0.0
        %2586 = vmatpush1.msra.mxu0 0.0
        %2587 = vmatprep.subr.mxu0 0.0
        %2588 = vmatpush1.msra.mxu0 0.0
        %2589 = vmatprep.subr.mxu0 0.0
        %2590 = vmatpush1.msra.mxu0 0.0
        %2591 = vmatprep.subr.mxu0 0.0
        %2592 = vmatpush1.msra.mxu0 0.0
        %2593 = vmatprep.subr.mxu0 0.0
        %2594 = vmatpush1.msra.mxu0 0.0
        %2595 = vmatprep.subr.mxu0 0.0
        %2596 = vmatpush1.msra.mxu0 0.0
        %2597 = vmatprep.subr.mxu0 0.0
        %2598 = vmatpush1.msra.mxu0 0.0
        %2599 = vmatprep.subr.mxu0 0.0
        %2600 = vmatpush1.msra.mxu0 0.0
        %2601 = vmatprep.subr.mxu0 0.0
        %2602 = vmatpush1.msra.mxu0 0.0
        %2603 = vmatprep.subr.mxu0 0.0
        %2604 = vmatpush1.msra.mxu0 0.0
        %2605 = vmatprep.subr.mxu0 0.0
        %2606 = vmatpush1.msra.mxu0 0.0
        %2607 = vmatprep.subr.mxu0 0.0
        %2608 = vmatpush1.msra.mxu0 0.0
        %2609 = vmatprep.subr.mxu0 0.0
        %2610 = vmatpush1.msra.mxu0 0.0
        %2611 = vmatprep.subr.mxu0 0.0
        %2612 = vmatpush1.msra.mxu0 0.0
        %2613 = vmatprep.mubr.f32.mxu0 0.0
        %2614 = vmatmul.mubr.f32.gmra.mrb[0].mxu0 %v2470
        %v2615 = vpop.f32.mrb[0].mxu0
        %v2616 = vadd.f32 0.0, %v2615
        %v2617 = vpop.f32.mrb[0].mxu0
        %2618 = vdwg.mxu0
        %v2619 = vadd.f32 %v2274, %v2545
        %v2620 = vadd.f32 %v2275, %v2547
        %v2621 = vadd.f32 %v2276, %v2616
        %s2622 = scalar_lea.vmem %s6, 48
        %v2623 = vld [vmem:[%s2622] sm:$0xff]
        %v2626 = vcombine.high %v2449, %v2449
        %v2627 = vcombine.high %v2450, %v2450
        %2628 = vrot.lane.b32.xlu0 %v2449, 92
        %v2629 = vpop.permute.xlu0 %2628
        %2630 = vrot.lane.b32.xlu0 %v2626, 92
        %v2631 = vpop.permute.xlu0 %2630
        %2632 = vrot.lane.b32.xlu0 %v2450, 92
        %v2633 = vpop.permute.xlu0 %2632
        %2634 = vrot.lane.b32.xlu0 %v2627, 92
        %v2635 = vpop.permute.xlu0 %2634
        %v2636 = vsel %vm2465, %v2629, %v2631
        %v2637 = vsel %vm2465, %v2631, %v2633
        %v2638 = vsel %vm2465, %v2633, %v2635
        %v2640 = vsel %vm447, %v2623, 0
        %v2642 = vsel %vm417, %v2636, 0
        %v2644 = vsel %vm417, %v2637, 0
        %v2646 = vsel %vm417, %v2638, 0
        %2648 = vmatprep.subr.mxu0 %v2644
        %2649 = vmatpush1.msra.mxu0 %v2642
        %2650 = vmatprep.subr.mxu0 0.0
        %2651 = vmatpush1.msra.mxu0 0.0
        %2652 = vmatprep.subr.mxu0 0.0
        %2653 = vmatpush1.msra.mxu0 0.0
        %2654 = vmatprep.subr.mxu0 0.0
        %2655 = vmatpush1.msra.mxu0 0.0
        %2656 = vmatprep.subr.mxu0 0.0
        %2657 = vmatpush1.msra.mxu0 0.0
        %2658 = vmatprep.subr.mxu0 0.0
        %2659 = vmatpush1.msra.mxu0 0.0
        %2660 = vmatprep.subr.mxu0 0.0
        %2661 = vmatpush1.msra.mxu0 0.0
        %2662 = vmatprep.subr.mxu0 0.0
        %2663 = vmatpush1.msra.mxu0 0.0
        %2664 = vmatprep.subr.mxu0 0.0
        %2665 = vmatpush1.msra.mxu0 0.0
        %2666 = vmatprep.subr.mxu0 0.0
        %2667 = vmatpush1.msra.mxu0 0.0
        %2668 = vmatprep.subr.mxu0 0.0
        %2669 = vmatpush1.msra.mxu0 0.0
        %2670 = vmatprep.subr.mxu0 0.0
        %2671 = vmatpush1.msra.mxu0 0.0
        %2672 = vmatprep.subr.mxu0 0.0
        %2673 = vmatpush1.msra.mxu0 0.0
        %2674 = vmatprep.subr.mxu0 0.0
        %2675 = vmatpush1.msra.mxu0 0.0
        %2676 = vmatprep.subr.mxu0 0.0
        %2677 = vmatpush1.msra.mxu0 0.0
        %2678 = vmatprep.subr.mxu0 0.0
        %2679 = vmatpush1.msra.mxu0 0.0
        %2680 = vmatprep.subr.mxu0 0.0
        %2681 = vmatpush1.msra.mxu0 0.0
        %2682 = vmatprep.subr.mxu0 0.0
        %2683 = vmatpush1.msra.mxu0 0.0
        %2684 = vmatprep.subr.mxu0 0.0
        %2685 = vmatpush1.msra.mxu0 0.0
        %2686 = vmatprep.subr.mxu0 0.0
        %2687 = vmatpush1.msra.mxu0 0.0
        %2688 = vmatprep.subr.mxu0 0.0
        %2689 = vmatpush1.msra.mxu0 0.0
        %2690 = vmatprep.subr.mxu0 0.0
        %2691 = vmatpush1.msra.mxu0 0.0
        %2692 = vmatprep.subr.mxu0 0.0
        %2693 = vmatpush1.msra.mxu0 0.0
        %2694 = vmatprep.subr.mxu0 0.0
        %2695 = vmatpush1.msra.mxu0 0.0
        %2696 = vmatprep.subr.mxu0 0.0
        %2697 = vmatpush1.msra.mxu0 0.0
        %2698 = vmatprep.subr.mxu0 0.0
        %2699 = vmatpush1.msra.mxu0 0.0
        %2700 = vmatprep.subr.mxu0 0.0
        %2701 = vmatpush1.msra.mxu0 0.0
        %2702 = vmatprep.subr.mxu0 0.0
        %2703 = vmatpush1.msra.mxu0 0.0
        %2704 = vmatprep.subr.mxu0 0.0
        %2705 = vmatpush1.msra.mxu0 0.0
        %2706 = vmatprep.subr.mxu0 0.0
        %2707 = vmatpush1.msra.mxu0 0.0
        %2708 = vmatprep.subr.mxu0 0.0
        %2709 = vmatpush1.msra.mxu0 0.0
        %2710 = vmatprep.subr.mxu0 0.0
        %2711 = vmatpush1.msra.mxu0 0.0
        %2712 = vmatprep.mubr.f32.mxu0 0.0
        %2713 = vmatmul.mubr.f32.gmra.mrb[0].mxu0 %v2640
        %v2714 = vpop.f32.mrb[0].mxu0
        %v2715 = vadd.f32 0.0, %v2714
        %v2716 = vpop.f32.mrb[0].mxu0
        %v2717 = vadd.f32 0.0, %v2716
        %2718 = vdwg.mxu0
        %2719 = vmatprep.subr.mxu0 0.0
        %2720 = vmatpush1.msra.mxu0 %v2646
        %2721 = vmatprep.subr.mxu0 0.0
        %2722 = vmatpush1.msra.mxu0 0.0
        %2723 = vmatprep.subr.mxu0 0.0
        %2724 = vmatpush1.msra.mxu0 0.0
        %2725 = vmatprep.subr.mxu0 0.0
        %2726 = vmatpush1.msra.mxu0 0.0
        %2727 = vmatprep.subr.mxu0 0.0
        %2728 = vmatpush1.msra.mxu0 0.0
        %2729 = vmatprep.subr.mxu0 0.0
        %2730 = vmatpush1.msra.mxu0 0.0
        %2731 = vmatprep.subr.mxu0 0.0
        %2732 = vmatpush1.msra.mxu0 0.0
        %2733 = vmatprep.subr.mxu0 0.0
        %2734 = vmatpush1.msra.mxu0 0.0
        %2735 = vmatprep.subr.mxu0 0.0
        %2736 = vmatpush1.msra.mxu0 0.0
        %2737 = vmatprep.subr.mxu0 0.0
        %2738 = vmatpush1.msra.mxu0 0.0
        %2739 = vmatprep.subr.mxu0 0.0
        %2740 = vmatpush1.msra.mxu0 0.0
        %2741 = vmatprep.subr.mxu0 0.0
        %2742 = vmatpush1.msra.mxu0 0.0
        %2743 = vmatprep.subr.mxu0 0.0
        %2744 = vmatpush1.msra.mxu0 0.0
        %2745 = vmatprep.subr.mxu0 0.0
        %2746 = vmatpush1.msra.mxu0 0.0
        %2747 = vmatprep.subr.mxu0 0.0
        %2748 = vmatpush1.msra.mxu0 0.0
        %2749 = vmatprep.subr.mxu0 0.0
        %2750 = vmatpush1.msra.mxu0 0.0
        %2751 = vmatprep.subr.mxu0 0.0
        %2752 = vmatpush1.msra.mxu0 0.0
        %2753 = vmatprep.subr.mxu0 0.0
        %2754 = vmatpush1.msra.mxu0 0.0
        %2755 = vmatprep.subr.mxu0 0.0
        %2756 = vmatpush1.msra.mxu0 0.0
        %2757 = vmatprep.subr.mxu0 0.0
        %2758 = vmatpush1.msra.mxu0 0.0
        %2759 = vmatprep.subr.mxu0 0.0
        %2760 = vmatpush1.msra.mxu0 0.0
        %2761 = vmatprep.subr.mxu0 0.0
        %2762 = vmatpush1.msra.mxu0 0.0
        %2763 = vmatprep.subr.mxu0 0.0
        %2764 = vmatpush1.msra.mxu0 0.0
        %2765 = vmatprep.subr.mxu0 0.0
        %2766 = vmatpush1.msra.mxu0 0.0
        %2767 = vmatprep.subr.mxu0 0.0
        %2768 = vmatpush1.msra.mxu0 0.0
        %2769 = vmatprep.subr.mxu0 0.0
        %2770 = vmatpush1.msra.mxu0 0.0
        %2771 = vmatprep.subr.mxu0 0.0
        %2772 = vmatpush1.msra.mxu0 0.0
        %2773 = vmatprep.subr.mxu0 0.0
        %2774 = vmatpush1.msra.mxu0 0.0
        %2775 = vmatprep.subr.mxu0 0.0
        %2776 = vmatpush1.msra.mxu0 0.0
        %2777 = vmatprep.subr.mxu0 0.0
        %2778 = vmatpush1.msra.mxu0 0.0
        %2779 = vmatprep.subr.mxu0 0.0
        %2780 = vmatpush1.msra.mxu0 0.0
        %2781 = vmatprep.subr.mxu0 0.0
        %2782 = vmatpush1.msra.mxu0 0.0
        %2783 = vmatprep.mubr.f32.mxu0 0.0
        %2784 = vmatmul.mubr.f32.gmra.mrb[0].mxu0 %v2640
        %v2785 = vpop.f32.mrb[0].mxu0
        %v2786 = vadd.f32 0.0, %v2785
        %v2787 = vpop.f32.mrb[0].mxu0
        %2788 = vdwg.mxu0
        %v2789 = vadd.f32 %v2444, %v2715
        %v2790 = vadd.f32 %v2445, %v2717
        %v2791 = vadd.f32 %v2446, %v2786
        %v2792 = vld [vmem:[#allocation2] sm:$0xff]
        %v2793 = vld [vmem:[#allocation2 + $0x8] sm:$0xff]
        %v2794 = vld [vmem:[%s357] sm:$0xff]
        %v2795 = vld [vmem:[%s357 + $0x8] sm:$0xff]
        %s2796 = scalar_lea.vmem %s5, 56
        %v2797 = vld [vmem:[%s2796] sm:$0xff]
        %v2800 = vcombine.high %v2792, %v2792
        %v2801 = vcombine.high %v2793, %v2793
        %2802 = vrot.lane.b32.xlu0 %v2792, 91
        %v2803 = vpop.permute.xlu0 %2802
        %2804 = vrot.lane.b32.xlu0 %v2800, 91
        %v2805 = vpop.permute.xlu0 %2804
        %2806 = vrot.lane.b32.xlu0 %v2793, 91
        %v2807 = vpop.permute.xlu0 %2806
        %2808 = vrot.lane.b32.xlu0 %v2801, 91
        %v2809 = vpop.permute.xlu0 %2808
        %vm2810 = vcmask 744448
        %v2811 = vsel %vm2810, %v2803, %v2805
        %v2812 = vsel %vm2810, %v2805, %v2807
        %v2813 = vsel %vm2810, %v2807, %v2809
        %v2815 = vsel %vm447, %v2797, 0
        %v2817 = vsel %vm417, %v2811, 0
        %v2819 = vsel %vm417, %v2812, 0
        %v2821 = vsel %vm417, %v2813, 0
        %2823 = vmatprep.subr.mxu0 %v2819
        %2824 = vmatpush1.msra.mxu0 %v2817
        %2825 = vmatprep.subr.mxu0 0.0
        %2826 = vmatpush1.msra.mxu0 0.0
        %2827 = vmatprep.subr.mxu0 0.0
        %2828 = vmatpush1.msra.mxu0 0.0
        %2829 = vmatprep.subr.mxu0 0.0
        %2830 = vmatpush1.msra.mxu0 0.0
        %2831 = vmatprep.subr.mxu0 0.0
        %2832 = vmatpush1.msra.mxu0 0.0
        %2833 = vmatprep.subr.mxu0 0.0
        %2834 = vmatpush1.msra.mxu0 0.0
        %2835 = vmatprep.subr.mxu0 0.0
        %2836 = vmatpush1.msra.mxu0 0.0
        %2837 = vmatprep.subr.mxu0 0.0
        %2838 = vmatpush1.msra.mxu0 0.0
        %2839 = vmatprep.subr.mxu0 0.0
        %2840 = vmatpush1.msra.mxu0 0.0
        %2841 = vmatprep.subr.mxu0 0.0
        %2842 = vmatpush1.msra.mxu0 0.0
        %2843 = vmatprep.subr.mxu0 0.0
        %2844 = vmatpush1.msra.mxu0 0.0
        %2845 = vmatprep.subr.mxu0 0.0
        %2846 = vmatpush1.msra.mxu0 0.0
        %2847 = vmatprep.subr.mxu0 0.0
        %2848 = vmatpush1.msra.mxu0 0.0
        %2849 = vmatprep.subr.mxu0 0.0
        %2850 = vmatpush1.msra.mxu0 0.0
        %2851 = vmatprep.subr.mxu0 0.0
        %2852 = vmatpush1.msra.mxu0 0.0
        %2853 = vmatprep.subr.mxu0 0.0
        %2854 = vmatpush1.msra.mxu0 0.0
        %2855 = vmatprep.subr.mxu0 0.0
        %2856 = vmatpush1.msra.mxu0 0.0
        %2857 = vmatprep.subr.mxu0 0.0
        %2858 = vmatpush1.msra.mxu0 0.0
        %2859 = vmatprep.subr.mxu0 0.0
        %2860 = vmatpush1.msra.mxu0 0.0
        %2861 = vmatprep.subr.mxu0 0.0
        %2862 = vmatpush1.msra.mxu0 0.0
        %2863 = vmatprep.subr.mxu0 0.0
        %2864 = vmatpush1.msra.mxu0 0.0
        %2865 = vmatprep.subr.mxu0 0.0
        %2866 = vmatpush1.msra.mxu0 0.0
        %2867 = vmatprep.subr.mxu0 0.0
        %2868 = vmatpush1.msra.mxu0 0.0
        %2869 = vmatprep.subr.mxu0 0.0
        %2870 = vmatpush1.msra.mxu0 0.0
        %2871 = vmatprep.subr.mxu0 0.0
        %2872 = vmatpush1.msra.mxu0 0.0
        %2873 = vmatprep.subr.mxu0 0.0
        %2874 = vmatpush1.msra.mxu0 0.0
        %2875 = vmatprep.subr.mxu0 0.0
        %2876 = vmatpush1.msra.mxu0 0.0
        %2877 = vmatprep.subr.mxu0 0.0
        %2878 = vmatpush1.msra.mxu0 0.0
        %2879 = vmatprep.subr.mxu0 0.0
        %2880 = vmatpush1.msra.mxu0 0.0
        %2881 = vmatprep.subr.mxu0 0.0
        %2882 = vmatpush1.msra.mxu0 0.0
        %2883 = vmatprep.subr.mxu0 0.0
        %2884 = vmatpush1.msra.mxu0 0.0
        %2885 = vmatprep.subr.mxu0 0.0
        %2886 = vmatpush1.msra.mxu0 0.0
        %2887 = vmatprep.mubr.f32.mxu0 0.0
        %2888 = vmatmul.mubr.f32.gmra.mrb[0].mxu0 %v2815
        %v2889 = vpop.f32.mrb[0].mxu0
        %v2890 = vadd.f32 0.0, %v2889
        %v2891 = vpop.f32.mrb[0].mxu0
        %v2892 = vadd.f32 0.0, %v2891
        %2893 = vdwg.mxu0
        %2894 = vmatprep.subr.mxu0 0.0
        %2895 = vmatpush1.msra.mxu0 %v2821
        %2896 = vmatprep.subr.mxu0 0.0
        %2897 = vmatpush1.msra.mxu0 0.0
        %2898 = vmatprep.subr.mxu0 0.0
        %2899 = vmatpush1.msra.mxu0 0.0
        %2900 = vmatprep.subr.mxu0 0.0
        %2901 = vmatpush1.msra.mxu0 0.0
        %2902 = vmatprep.subr.mxu0 0.0
        %2903 = vmatpush1.msra.mxu0 0.0
        %2904 = vmatprep.subr.mxu0 0.0
        %2905 = vmatpush1.msra.mxu0 0.0
        %2906 = vmatprep.subr.mxu0 0.0
        %2907 = vmatpush1.msra.mxu0 0.0
        %2908 = vmatprep.subr.mxu0 0.0
        %2909 = vmatpush1.msra.mxu0 0.0
        %2910 = vmatprep.subr.mxu0 0.0
        %2911 = vmatpush1.msra.mxu0 0.0
        %2912 = vmatprep.subr.mxu0 0.0
        %2913 = vmatpush1.msra.mxu0 0.0
        %2914 = vmatprep.subr.mxu0 0.0
        %2915 = vmatpush1.msra.mxu0 0.0
        %2916 = vmatprep.subr.mxu0 0.0
        %2917 = vmatpush1.msra.mxu0 0.0
        %2918 = vmatprep.subr.mxu0 0.0
        %2919 = vmatpush1.msra.mxu0 0.0
        %2920 = vmatprep.subr.mxu0 0.0
        %2921 = vmatpush1.msra.mxu0 0.0
        %2922 = vmatprep.subr.mxu0 0.0
        %2923 = vmatpush1.msra.mxu0 0.0
        %2924 = vmatprep.subr.mxu0 0.0
        %2925 = vmatpush1.msra.mxu0 0.0
        %2926 = vmatprep.subr.mxu0 0.0
        %2927 = vmatpush1.msra.mxu0 0.0
        %2928 = vmatprep.subr.mxu0 0.0
        %2929 = vmatpush1.msra.mxu0 0.0
        %2930 = vmatprep.subr.mxu0 0.0
        %2931 = vmatpush1.msra.mxu0 0.0
        %2932 = vmatprep.subr.mxu0 0.0
        %2933 = vmatpush1.msra.mxu0 0.0
        %2934 = vmatprep.subr.mxu0 0.0
        %2935 = vmatpush1.msra.mxu0 0.0
        %2936 = vmatprep.subr.mxu0 0.0
        %2937 = vmatpush1.msra.mxu0 0.0
        %2938 = vmatprep.subr.mxu0 0.0
        %2939 = vmatpush1.msra.mxu0 0.0
        %2940 = vmatprep.subr.mxu0 0.0
        %2941 = vmatpush1.msra.mxu0 0.0
        %2942 = vmatprep.subr.mxu0 0.0
        %2943 = vmatpush1.msra.mxu0 0.0
        %2944 = vmatprep.subr.mxu0 0.0
        %2945 = vmatpush1.msra.mxu0 0.0
        %2946 = vmatprep.subr.mxu0 0.0
        %2947 = vmatpush1.msra.mxu0 0.0
        %2948 = vmatprep.subr.mxu0 0.0
        %2949 = vmatpush1.msra.mxu0 0.0
        %2950 = vmatprep.subr.mxu0 0.0
        %2951 = vmatpush1.msra.mxu0 0.0
        %2952 = vmatprep.subr.mxu0 0.0
        %2953 = vmatpush1.msra.mxu0 0.0
        %2954 = vmatprep.subr.mxu0 0.0
        %2955 = vmatpush1.msra.mxu0 0.0
        %2956 = vmatprep.subr.mxu0 0.0
        %2957 = vmatpush1.msra.mxu0 0.0
        %2958 = vmatprep.mubr.f32.mxu0 0.0
        %2959 = vmatmul.mubr.f32.gmra.mrb[0].mxu0 %v2815
        %v2960 = vpop.f32.mrb[0].mxu0
        %v2961 = vadd.f32 0.0, %v2960
        %v2962 = vpop.f32.mrb[0].mxu0
        %2963 = vdwg.mxu0
        %v2964 = vadd.f32 %v2619, %v2890
        %v2965 = vadd.f32 %v2620, %v2892
        %v2966 = vadd.f32 %v2621, %v2961
        %s2967 = scalar_lea.vmem %s6, 56
        %v2968 = vld [vmem:[%s2967] sm:$0xff]
        %v2971 = vcombine.high %v2794, %v2794
        %v2972 = vcombine.high %v2795, %v2795
        %2973 = vrot.lane.b32.xlu0 %v2794, 91
        %v2974 = vpop.permute.xlu0 %2973
        %2975 = vrot.lane.b32.xlu0 %v2971, 91
        %v2976 = vpop.permute.xlu0 %2975
        %2977 = vrot.lane.b32.xlu0 %v2795, 91
        %v2978 = vpop.permute.xlu0 %2977
        %2979 = vrot.lane.b32.xlu0 %v2972, 91
        %v2980 = vpop.permute.xlu0 %2979
        %v2981 = vsel %vm2810, %v2974, %v2976
        %v2982 = vsel %vm2810, %v2976, %v2978
        %v2983 = vsel %vm2810, %v2978, %v2980
        %v2985 = vsel %vm447, %v2968, 0
        %v2987 = vsel %vm417, %v2981, 0
        %v2989 = vsel %vm417, %v2982, 0
        %v2991 = vsel %vm417, %v2983, 0
        %2993 = vmatprep.subr.mxu0 %v2989
        %2994 = vmatpush1.msra.mxu0 %v2987
        %2995 = vmatprep.subr.mxu0 0.0
        %2996 = vmatpush1.msra.mxu0 0.0
        %2997 = vmatprep.subr.mxu0 0.0
        %2998 = vmatpush1.msra.mxu0 0.0
        %2999 = vmatprep.subr.mxu0 0.0
        %3000 = vmatpush1.msra.mxu0 0.0
        %3001 = vmatprep.subr.mxu0 0.0
        %3002 = vmatpush1.msra.mxu0 0.0
        %3003 = vmatprep.subr.mxu0 0.0
        %3004 = vmatpush1.msra.mxu0 0.0
        %3005 = vmatprep.subr.mxu0 0.0
        %3006 = vmatpush1.msra.mxu0 0.0
        %3007 = vmatprep.subr.mxu0 0.0
        %3008 = vmatpush1.msra.mxu0 0.0
        %3009 = vmatprep.subr.mxu0 0.0
        %3010 = vmatpush1.msra.mxu0 0.0
        %3011 = vmatprep.subr.mxu0 0.0
        %3012 = vmatpush1.msra.mxu0 0.0
        %3013 = vmatprep.subr.mxu0 0.0
        %3014 = vmatpush1.msra.mxu0 0.0
        %3015 = vmatprep.subr.mxu0 0.0
        %3016 = vmatpush1.msra.mxu0 0.0
        %3017 = vmatprep.subr.mxu0 0.0
        %3018 = vmatpush1.msra.mxu0 0.0
        %3019 = vmatprep.subr.mxu0 0.0
        %3020 = vmatpush1.msra.mxu0 0.0
        %3021 = vmatprep.subr.mxu0 0.0
        %3022 = vmatpush1.msra.mxu0 0.0
        %3023 = vmatprep.subr.mxu0 0.0
        %3024 = vmatpush1.msra.mxu0 0.0
        %3025 = vmatprep.subr.mxu0 0.0
        %3026 = vmatpush1.msra.mxu0 0.0
        %3027 = vmatprep.subr.mxu0 0.0
        %3028 = vmatpush1.msra.mxu0 0.0
        %3029 = vmatprep.subr.mxu0 0.0
        %3030 = vmatpush1.msra.mxu0 0.0
        %3031 = vmatprep.subr.mxu0 0.0
        %3032 = vmatpush1.msra.mxu0 0.0
        %3033 = vmatprep.subr.mxu0 0.0
        %3034 = vmatpush1.msra.mxu0 0.0
        %3035 = vmatprep.subr.mxu0 0.0
        %3036 = vmatpush1.msra.mxu0 0.0
        %3037 = vmatprep.subr.mxu0 0.0
        %3038 = vmatpush1.msra.mxu0 0.0
        %3039 = vmatprep.subr.mxu0 0.0
        %3040 = vmatpush1.msra.mxu0 0.0
        %3041 = vmatprep.subr.mxu0 0.0
        %3042 = vmatpush1.msra.mxu0 0.0
        %3043 = vmatprep.subr.mxu0 0.0
        %3044 = vmatpush1.msra.mxu0 0.0
        %3045 = vmatprep.subr.mxu0 0.0
        %3046 = vmatpush1.msra.mxu0 0.0
        %3047 = vmatprep.subr.mxu0 0.0
        %3048 = vmatpush1.msra.mxu0 0.0
        %3049 = vmatprep.subr.mxu0 0.0
        %3050 = vmatpush1.msra.mxu0 0.0
        %3051 = vmatprep.subr.mxu0 0.0
        %3052 = vmatpush1.msra.mxu0 0.0
        %3053 = vmatprep.subr.mxu0 0.0
        %3054 = vmatpush1.msra.mxu0 0.0
        %3055 = vmatprep.subr.mxu0 0.0
        %3056 = vmatpush1.msra.mxu0 0.0
        %3057 = vmatprep.mubr.f32.mxu0 0.0
        %3058 = vmatmul.mubr.f32.gmra.mrb[0].mxu0 %v2985
        %v3059 = vpop.f32.mrb[0].mxu0
        %v3060 = vadd.f32 0.0, %v3059
        %v3061 = vpop.f32.mrb[0].mxu0
        %v3062 = vadd.f32 0.0, %v3061
        %3063 = vdwg.mxu0
        %3064 = vmatprep.subr.mxu0 0.0
        %3065 = vmatpush1.msra.mxu0 %v2991
        %3066 = vmatprep.subr.mxu0 0.0
        %3067 = vmatpush1.msra.mxu0 0.0
        %3068 = vmatprep.subr.mxu0 0.0
        %3069 = vmatpush1.msra.mxu0 0.0
        %3070 = vmatprep.subr.mxu0 0.0
        %3071 = vmatpush1.msra.mxu0 0.0
        %3072 = vmatprep.subr.mxu0 0.0
        %3073 = vmatpush1.msra.mxu0 0.0
        %3074 = vmatprep.subr.mxu0 0.0
        %3075 = vmatpush1.msra.mxu0 0.0
        %3076 = vmatprep.subr.mxu0 0.0
        %3077 = vmatpush1.msra.mxu0 0.0
        %3078 = vmatprep.subr.mxu0 0.0
        %3079 = vmatpush1.msra.mxu0 0.0
        %3080 = vmatprep.subr.mxu0 0.0
        %3081 = vmatpush1.msra.mxu0 0.0
        %3082 = vmatprep.subr.mxu0 0.0
        %3083 = vmatpush1.msra.mxu0 0.0
        %3084 = vmatprep.subr.mxu0 0.0
        %3085 = vmatpush1.msra.mxu0 0.0
        %3086 = vmatprep.subr.mxu0 0.0
        %3087 = vmatpush1.msra.mxu0 0.0
        %3088 = vmatprep.subr.mxu0 0.0
        %3089 = vmatpush1.msra.mxu0 0.0
        %3090 = vmatprep.subr.mxu0 0.0
        %3091 = vmatpush1.msra.mxu0 0.0
        %3092 = vmatprep.subr.mxu0 0.0
        %3093 = vmatpush1.msra.mxu0 0.0
        %3094 = vmatprep.subr.mxu0 0.0
        %3095 = vmatpush1.msra.mxu0 0.0
        %3096 = vmatprep.subr.mxu0 0.0
        %3097 = vmatpush1.msra.mxu0 0.0
        %3098 = vmatprep.subr.mxu0 0.0
        %3099 = vmatpush1.msra.mxu0 0.0
        %3100 = vmatprep.subr.mxu0 0.0
        %3101 = vmatpush1.msra.mxu0 0.0
        %3102 = vmatprep.subr.mxu0 0.0
        %3103 = vmatpush1.msra.mxu0 0.0
        %3104 = vmatprep.subr.mxu0 0.0
        %3105 = vmatpush1.msra.mxu0 0.0
        %3106 = vmatprep.subr.mxu0 0.0
        %3107 = vmatpush1.msra.mxu0 0.0
        %3108 = vmatprep.subr.mxu0 0.0
        %3109 = vmatpush1.msra.mxu0 0.0
        %3110 = vmatprep.subr.mxu0 0.0
        %3111 = vmatpush1.msra.mxu0 0.0
        %3112 = vmatprep.subr.mxu0 0.0
        %3113 = vmatpush1.msra.mxu0 0.0
        %3114 = vmatprep.subr.mxu0 0.0
        %3115 = vmatpush1.msra.mxu0 0.0
        %3116 = vmatprep.subr.mxu0 0.0
        %3117 = vmatpush1.msra.mxu0 0.0
        %3118 = vmatprep.subr.mxu0 0.0
        %3119 = vmatpush1.msra.mxu0 0.0
        %3120 = vmatprep.subr.mxu0 0.0
        %3121 = vmatpush1.msra.mxu0 0.0
        %3122 = vmatprep.subr.mxu0 0.0
        %3123 = vmatpush1.msra.mxu0 0.0
        %3124 = vmatprep.subr.mxu0 0.0
        %3125 = vmatpush1.msra.mxu0 0.0
        %3126 = vmatprep.subr.mxu0 0.0
        %3127 = vmatpush1.msra.mxu0 0.0
        %3128 = vmatprep.mubr.f32.mxu0 0.0
        %3129 = vmatmul.mubr.f32.gmra.mrb[0].mxu0 %v2985
        %v3130 = vpop.f32.mrb[0].mxu0
        %v3131 = vadd.f32 0.0, %v3130
        %v3132 = vpop.f32.mrb[0].mxu0
        %3133 = vdwg.mxu0
        %v3134 = vadd.f32 %v2789, %v3060
        %v3135 = vadd.f32 %v2790, %v3062
        %v3136 = vadd.f32 %v2791, %v3131
        %v3137 = vld [vmem:[#allocation2] sm:$0xff]
        %v3138 = vld [vmem:[#allocation2 + $0x8] sm:$0xff]
        %v3139 = vld [vmem:[%s357] sm:$0xff]
        %v3140 = vld [vmem:[%s357 + $0x8] sm:$0xff]
        %s3141 = scalar_lea.vmem %s5, 64
        %v3142 = vld [vmem:[%s3141] sm:$0xff]
        %v3145 = vcombine.high %v3137, %v3137
        %v3146 = vcombine.high %v3138, %v3138
        %3147 = vrot.lane.b32.xlu0 %v3137, 90
        %v3148 = vpop.permute.xlu0 %3147
        %3149 = vrot.lane.b32.xlu0 %v3145, 90
        %v3150 = vpop.permute.xlu0 %3149
        %3151 = vrot.lane.b32.xlu0 %v3138, 90
        %v3152 = vpop.permute.xlu0 %3151
        %3153 = vrot.lane.b32.xlu0 %v3146, 90
        %v3154 = vpop.permute.xlu0 %3153
        %vm3155 = vcmask 736256
        %v3156 = vsel %vm3155, %v3148, %v3150
        %v3157 = vsel %vm3155, %v3150, %v3152
        %v3158 = vsel %vm3155, %v3152, %v3154
        %v3160 = vsel %vm447, %v3142, 0
        %v3162 = vsel %vm417, %v3156, 0
        %v3164 = vsel %vm417, %v3157, 0
        %v3166 = vsel %vm417, %v3158, 0
        %3168 = vmatprep.subr.mxu0 %v3164
        %3169 = vmatpush1.msra.mxu0 %v3162
        %3170 = vmatprep.subr.mxu0 0.0
        %3171 = vmatpush1.msra.mxu0 0.0
        %3172 = vmatprep.subr.mxu0 0.0
        %3173 = vmatpush1.msra.mxu0 0.0
        %3174 = vmatprep.subr.mxu0 0.0
        %3175 = vmatpush1.msra.mxu0 0.0
        %3176 = vmatprep.subr.mxu0 0.0
        %3177 = vmatpush1.msra.mxu0 0.0
        %3178 = vmatprep.subr.mxu0 0.0
        %3179 = vmatpush1.msra.mxu0 0.0
        %3180 = vmatprep.subr.mxu0 0.0
        %3181 = vmatpush1.msra.mxu0 0.0
        %3182 = vmatprep.subr.mxu0 0.0
        %3183 = vmatpush1.msra.mxu0 0.0
        %3184 = vmatprep.subr.mxu0 0.0
        %3185 = vmatpush1.msra.mxu0 0.0
        %3186 = vmatprep.subr.mxu0 0.0
        %3187 = vmatpush1.msra.mxu0 0.0
        %3188 = vmatprep.subr.mxu0 0.0
        %3189 = vmatpush1.msra.mxu0 0.0
        %3190 = vmatprep.subr.mxu0 0.0
        %3191 = vmatpush1.msra.mxu0 0.0
        %3192 = vmatprep.subr.mxu0 0.0
        %3193 = vmatpush1.msra.mxu0 0.0
        %3194 = vmatprep.subr.mxu0 0.0
        %3195 = vmatpush1.msra.mxu0 0.0
        %3196 = vmatprep.subr.mxu0 0.0
        %3197 = vmatpush1.msra.mxu0 0.0
        %3198 = vmatprep.subr.mxu0 0.0
        %3199 = vmatpush1.msra.mxu0 0.0
        %3200 = vmatprep.subr.mxu0 0.0
        %3201 = vmatpush1.msra.mxu0 0.0
        %3202 = vmatprep.subr.mxu0 0.0
        %3203 = vmatpush1.msra.mxu0 0.0
        %3204 = vmatprep.subr.mxu0 0.0
        %3205 = vmatpush1.msra.mxu0 0.0
        %3206 = vmatprep.subr.mxu0 0.0
        %3207 = vmatpush1.msra.mxu0 0.0
        %3208 = vmatprep.subr.mxu0 0.0
        %3209 = vmatpush1.msra.mxu0 0.0
        %3210 = vmatprep.subr.mxu0 0.0
        %3211 = vmatpush1.msra.mxu0 0.0
        %3212 = vmatprep.subr.mxu0 0.0
        %3213 = vmatpush1.msra.mxu0 0.0
        %3214 = vmatprep.subr.mxu0 0.0
        %3215 = vmatpush1.msra.mxu0 0.0
        %3216 = vmatprep.subr.mxu0 0.0
        %3217 = vmatpush1.msra.mxu0 0.0
        %3218 = vmatprep.subr.mxu0 0.0
        %3219 = vmatpush1.msra.mxu0 0.0
        %3220 = vmatprep.subr.mxu0 0.0
        %3221 = vmatpush1.msra.mxu0 0.0
        %3222 = vmatprep.subr.mxu0 0.0
        %3223 = vmatpush1.msra.mxu0 0.0
        %3224 = vmatprep.subr.mxu0 0.0
        %3225 = vmatpush1.msra.mxu0 0.0
        %3226 = vmatprep.subr.mxu0 0.0
        %3227 = vmatpush1.msra.mxu0 0.0
        %3228 = vmatprep.subr.mxu0 0.0
        %3229 = vmatpush1.msra.mxu0 0.0
        %3230 = vmatprep.subr.mxu0 0.0
        %3231 = vmatpush1.msra.mxu0 0.0
        %3232 = vmatprep.mubr.f32.mxu0 0.0
        %3233 = vmatmul.mubr.f32.gmra.mrb[0].mxu0 %v3160
        %v3234 = vpop.f32.mrb[0].mxu0
        %v3235 = vadd.f32 0.0, %v3234
        %v3236 = vpop.f32.mrb[0].mxu0
        %v3237 = vadd.f32 0.0, %v3236
        %3238 = vdwg.mxu0
        %3239 = vmatprep.subr.mxu0 0.0
        %3240 = vmatpush1.msra.mxu0 %v3166
        %3241 = vmatprep.subr.mxu0 0.0
        %3242 = vmatpush1.msra.mxu0 0.0
        %3243 = vmatprep.subr.mxu0 0.0
        %3244 = vmatpush1.msra.mxu0 0.0
        %3245 = vmatprep.subr.mxu0 0.0
        %3246 = vmatpush1.msra.mxu0 0.0
        %3247 = vmatprep.subr.mxu0 0.0
        %3248 = vmatpush1.msra.mxu0 0.0
        %3249 = vmatprep.subr.mxu0 0.0
        %3250 = vmatpush1.msra.mxu0 0.0
        %3251 = vmatprep.subr.mxu0 0.0
        %3252 = vmatpush1.msra.mxu0 0.0
        %3253 = vmatprep.subr.mxu0 0.0
        %3254 = vmatpush1.msra.mxu0 0.0
        %3255 = vmatprep.subr.mxu0 0.0
        %3256 = vmatpush1.msra.mxu0 0.0
        %3257 = vmatprep.subr.mxu0 0.0
        %3258 = vmatpush1.msra.mxu0 0.0
        %3259 = vmatprep.subr.mxu0 0.0
        %3260 = vmatpush1.msra.mxu0 0.0
        %3261 = vmatprep.subr.mxu0 0.0
        %3262 = vmatpush1.msra.mxu0 0.0
        %3263 = vmatprep.subr.mxu0 0.0
        %3264 = vmatpush1.msra.mxu0 0.0
        %3265 = vmatprep.subr.mxu0 0.0
        %3266 = vmatpush1.msra.mxu0 0.0
        %3267 = vmatprep.subr.mxu0 0.0
        %3268 = vmatpush1.msra.mxu0 0.0
        %3269 = vmatprep.subr.mxu0 0.0
        %3270 = vmatpush1.msra.mxu0 0.0
        %3271 = vmatprep.subr.mxu0 0.0
        %3272 = vmatpush1.msra.mxu0 0.0
        %3273 = vmatprep.subr.mxu0 0.0
        %3274 = vmatpush1.msra.mxu0 0.0
        %3275 = vmatprep.subr.mxu0 0.0
        %3276 = vmatpush1.msra.mxu0 0.0
        %3277 = vmatprep.subr.mxu0 0.0
        %3278 = vmatpush1.msra.mxu0 0.0
        %3279 = vmatprep.subr.mxu0 0.0
        %3280 = vmatpush1.msra.mxu0 0.0
        %3281 = vmatprep.subr.mxu0 0.0
        %3282 = vmatpush1.msra.mxu0 0.0
        %3283 = vmatprep.subr.mxu0 0.0
        %3284 = vmatpush1.msra.mxu0 0.0
        %3285 = vmatprep.subr.mxu0 0.0
        %3286 = vmatpush1.msra.mxu0 0.0
        %3287 = vmatprep.subr.mxu0 0.0
        %3288 = vmatpush1.msra.mxu0 0.0
        %3289 = vmatprep.subr.mxu0 0.0
        %3290 = vmatpush1.msra.mxu0 0.0
        %3291 = vmatprep.subr.mxu0 0.0
        %3292 = vmatpush1.msra.mxu0 0.0
        %3293 = vmatprep.subr.mxu0 0.0
        %3294 = vmatpush1.msra.mxu0 0.0
        %3295 = vmatprep.subr.mxu0 0.0
        %3296 = vmatpush1.msra.mxu0 0.0
        %3297 = vmatprep.subr.mxu0 0.0
        %3298 = vmatpush1.msra.mxu0 0.0
        %3299 = vmatprep.subr.mxu0 0.0
        %3300 = vmatpush1.msra.mxu0 0.0
        %3301 = vmatprep.subr.mxu0 0.0
        %3302 = vmatpush1.msra.mxu0 0.0
        %3303 = vmatprep.mubr.f32.mxu0 0.0
        %3304 = vmatmul.mubr.f32.gmra.mrb[0].mxu0 %v3160
        %v3305 = vpop.f32.mrb[0].mxu0
        %v3306 = vadd.f32 0.0, %v3305
        %v3307 = vpop.f32.mrb[0].mxu0
        %3308 = vdwg.mxu0
        %v3309 = vadd.f32 %v2964, %v3235
        %v3310 = vadd.f32 %v2965, %v3237
        %v3311 = vadd.f32 %v2966, %v3306
        %s3312 = scalar_lea.vmem %s6, 64
        %v3313 = vld [vmem:[%s3312] sm:$0xff]
        %v3316 = vcombine.high %v3139, %v3139
        %v3317 = vcombine.high %v3140, %v3140
        %3318 = vrot.lane.b32.xlu0 %v3139, 90
        %v3319 = vpop.permute.xlu0 %3318
        %3320 = vrot.lane.b32.xlu0 %v3316, 90
        %v3321 = vpop.permute.xlu0 %3320
        %3322 = vrot.lane.b32.xlu0 %v3140, 90
        %v3323 = vpop.permute.xlu0 %3322
        %3324 = vrot.lane.b32.xlu0 %v3317, 90
        %v3325 = vpop.permute.xlu0 %3324
        %v3326 = vsel %vm3155, %v3319, %v3321
        %v3327 = vsel %vm3155, %v3321, %v3323
        %v3328 = vsel %vm3155, %v3323, %v3325
        %v3330 = vsel %vm447, %v3313, 0
        %v3332 = vsel %vm417, %v3326, 0
        %v3334 = vsel %vm417, %v3327, 0
        %v3336 = vsel %vm417, %v3328, 0
        %3338 = vmatprep.subr.mxu0 %v3334
        %3339 = vmatpush1.msra.mxu0 %v3332
        %3340 = vmatprep.subr.mxu0 0.0
        %3341 = vmatpush1.msra.mxu0 0.0
        %3342 = vmatprep.subr.mxu0 0.0
        %3343 = vmatpush1.msra.mxu0 0.0
        %3344 = vmatprep.subr.mxu0 0.0
        %3345 = vmatpush1.msra.mxu0 0.0
        %3346 = vmatprep.subr.mxu0 0.0
        %3347 = vmatpush1.msra.mxu0 0.0
        %3348 = vmatprep.subr.mxu0 0.0
        %3349 = vmatpush1.msra.mxu0 0.0
        %3350 = vmatprep.subr.mxu0 0.0
        %3351 = vmatpush1.msra.mxu0 0.0
        %3352 = vmatprep.subr.mxu0 0.0
        %3353 = vmatpush1.msra.mxu0 0.0
        %3354 = vmatprep.subr.mxu0 0.0
        %3355 = vmatpush1.msra.mxu0 0.0
        %3356 = vmatprep.subr.mxu0 0.0
        %3357 = vmatpush1.msra.mxu0 0.0
        %3358 = vmatprep.subr.mxu0 0.0
        %3359 = vmatpush1.msra.mxu0 0.0
        %3360 = vmatprep.subr.mxu0 0.0
        %3361 = vmatpush1.msra.mxu0 0.0
        %3362 = vmatprep.subr.mxu0 0.0
        %3363 = vmatpush1.msra.mxu0 0.0
        %3364 = vmatprep.subr.mxu0 0.0
        %3365 = vmatpush1.msra.mxu0 0.0
        %3366 = vmatprep.subr.mxu0 0.0
        %3367 = vmatpush1.msra.mxu0 0.0
        %3368 = vmatprep.subr.mxu0 0.0
        %3369 = vmatpush1.msra.mxu0 0.0
        %3370 = vmatprep.subr.mxu0 0.0
        %3371 = vmatpush1.msra.mxu0 0.0
        %3372 = vmatprep.subr.mxu0 0.0
        %3373 = vmatpush1.msra.mxu0 0.0
        %3374 = vmatprep.subr.mxu0 0.0
        %3375 = vmatpush1.msra.mxu0 0.0
        %3376 = vmatprep.subr.mxu0 0.0
        %3377 = vmatpush1.msra.mxu0 0.0
        %3378 = vmatprep.subr.mxu0 0.0
        %3379 = vmatpush1.msra.mxu0 0.0
        %3380 = vmatprep.subr.mxu0 0.0
        %3381 = vmatpush1.msra.mxu0 0.0
        %3382 = vmatprep.subr.mxu0 0.0
        %3383 = vmatpush1.msra.mxu0 0.0
        %3384 = vmatprep.subr.mxu0 0.0
        %3385 = vmatpush1.msra.mxu0 0.0
        %3386 = vmatprep.subr.mxu0 0.0
        %3387 = vmatpush1.msra.mxu0 0.0
        %3388 = vmatprep.subr.mxu0 0.0
        %3389 = vmatpush1.msra.mxu0 0.0
        %3390 = vmatprep.subr.mxu0 0.0
        %3391 = vmatpush1.msra.mxu0 0.0
        %3392 = vmatprep.subr.mxu0 0.0
        %3393 = vmatpush1.msra.mxu0 0.0
        %3394 = vmatprep.subr.mxu0 0.0
        %3395 = vmatpush1.msra.mxu0 0.0
        %3396 = vmatprep.subr.mxu0 0.0
        %3397 = vmatpush1.msra.mxu0 0.0
        %3398 = vmatprep.subr.mxu0 0.0
        %3399 = vmatpush1.msra.mxu0 0.0
        %3400 = vmatprep.subr.mxu0 0.0
        %3401 = vmatpush1.msra.mxu0 0.0
        %3402 = vmatprep.mubr.f32.mxu0 0.0
        %3403 = vmatmul.mubr.f32.gmra.mrb[0].mxu0 %v3330
        %v3404 = vpop.f32.mrb[0].mxu0
        %v3405 = vadd.f32 0.0, %v3404
        %v3406 = vpop.f32.mrb[0].mxu0
        %v3407 = vadd.f32 0.0, %v3406
        %3408 = vdwg.mxu0
        %3409 = vmatprep.subr.mxu0 0.0
        %3410 = vmatpush1.msra.mxu0 %v3336
        %3411 = vmatprep.subr.mxu0 0.0
        %3412 = vmatpush1.msra.mxu0 0.0
        %3413 = vmatprep.subr.mxu0 0.0
        %3414 = vmatpush1.msra.mxu0 0.0
        %3415 = vmatprep.subr.mxu0 0.0
        %3416 = vmatpush1.msra.mxu0 0.0
        %3417 = vmatprep.subr.mxu0 0.0
        %3418 = vmatpush1.msra.mxu0 0.0
        %3419 = vmatprep.subr.mxu0 0.0
        %3420 = vmatpush1.msra.mxu0 0.0
        %3421 = vmatprep.subr.mxu0 0.0
        %3422 = vmatpush1.msra.mxu0 0.0
        %3423 = vmatprep.subr.mxu0 0.0
        %3424 = vmatpush1.msra.mxu0 0.0
        %3425 = vmatprep.subr.mxu0 0.0
        %3426 = vmatpush1.msra.mxu0 0.0
        %3427 = vmatprep.subr.mxu0 0.0
        %3428 = vmatpush1.msra.mxu0 0.0
        %3429 = vmatprep.subr.mxu0 0.0
        %3430 = vmatpush1.msra.mxu0 0.0
        %3431 = vmatprep.subr.mxu0 0.0
        %3432 = vmatpush1.msra.mxu0 0.0
        %3433 = vmatprep.subr.mxu0 0.0
        %3434 = vmatpush1.msra.mxu0 0.0
        %3435 = vmatprep.subr.mxu0 0.0
        %3436 = vmatpush1.msra.mxu0 0.0
        %3437 = vmatprep.subr.mxu0 0.0
        %3438 = vmatpush1.msra.mxu0 0.0
        %3439 = vmatprep.subr.mxu0 0.0
        %3440 = vmatpush1.msra.mxu0 0.0
        %3441 = vmatprep.subr.mxu0 0.0
        %3442 = vmatpush1.msra.mxu0 0.0
        %3443 = vmatprep.subr.mxu0 0.0
        %3444 = vmatpush1.msra.mxu0 0.0
        %3445 = vmatprep.subr.mxu0 0.0
        %3446 = vmatpush1.msra.mxu0 0.0
        %3447 = vmatprep.subr.mxu0 0.0
        %3448 = vmatpush1.msra.mxu0 0.0
        %3449 = vmatprep.subr.mxu0 0.0
        %3450 = vmatpush1.msra.mxu0 0.0
        %3451 = vmatprep.subr.mxu0 0.0
        %3452 = vmatpush1.msra.mxu0 0.0
        %3453 = vmatprep.subr.mxu0 0.0
        %3454 = vmatpush1.msra.mxu0 0.0
        %3455 = vmatprep.subr.mxu0 0.0
        %3456 = vmatpush1.msra.mxu0 0.0
        %3457 = vmatprep.subr.mxu0 0.0
        %3458 = vmatpush1.msra.mxu0 0.0
        %3459 = vmatprep.subr.mxu0 0.0
        %3460 = vmatpush1.msra.mxu0 0.0
        %3461 = vmatprep.subr.mxu0 0.0
        %3462 = vmatpush1.msra.mxu0 0.0
        %3463 = vmatprep.subr.mxu0 0.0
        %3464 = vmatpush1.msra.mxu0 0.0
        %3465 = vmatprep.subr.mxu0 0.0
        %3466 = vmatpush1.msra.mxu0 0.0
        %3467 = vmatprep.subr.mxu0 0.0
        %3468 = vmatpush1.msra.mxu0 0.0
        %3469 = vmatprep.subr.mxu0 0.0
        %3470 = vmatpush1.msra.mxu0 0.0
        %3471 = vmatprep.subr.mxu0 0.0
        %3472 = vmatpush1.msra.mxu0 0.0
        %3473 = vmatprep.mubr.f32.mxu0 0.0
        %3474 = vmatmul.mubr.f32.gmra.mrb[0].mxu0 %v3330
        %v3475 = vpop.f32.mrb[0].mxu0
        %v3476 = vadd.f32 0.0, %v3475
        %v3477 = vpop.f32.mrb[0].mxu0
        %3478 = vdwg.mxu0
        %v3479 = vadd.f32 %v3134, %v3405
        %v3480 = vadd.f32 %v3135, %v3407
        %v3481 = vadd.f32 %v3136, %v3476
        %v3482 = vld [vmem:[%s8] sm:$0xff]
        %3484 = vset.pattern.permute.xlu0 0
        %3485 = vperm.xlu0 %3484, %v3482
        %v3486 = vpop.permute.xlu0 %3485
        %v3488 = vadd.f32 %v3309, %v3486
        %v3489 = vadd.f32 %v3310, %v3486
        %v3490 = vadd.f32 %v3311, %v3486
        %v3491 = vmax.f32 %v3488, 0.0
        %v3492 = vmax.f32 %v3489, 0.0
        %v3493 = vmax.f32 %v3490, 0.0
        %v3494 = vld [vmem:[%s2] sm:$0x7]
        %v3496 = vlaneseq
        %v3497 = vshrl.u32 %v3496, 7
        %v3498 = vsub.s32 0, %v3497
        %v3499 = vrot.slane %v3494, %v3498
        %v3500 = vlaneseq
        %v3501 = vshrl.u32 %v3500, 7
        %v3502 = vsub.s32 1, %v3501
        %v3503 = vrot.slane %v3494, %v3502
        %v3504 = vlaneseq
        %v3505 = vshrl.u32 %v3504, 7
        %v3506 = vsub.s32 2, %v3505
        %v3507 = vrot.slane %v3494, %v3506
        %v3511 = vmul.f32 %v3491, %v3499
        %v3512 = vmul.f32 %v3492, %v3503
        %v3513 = vmul.f32 %v3493, %v3507
        %3514 = vst [vmem:[#allocation3] sm:$0xff] 0.0
        %3515 = vst [vmem:[#allocation3 + $0x8] sm:$0xff] 0.0
        %3516 = vst [vmem:[#allocation3 + $0x10] sm:$0xff] 0.0
        %vm3517 = vcmask 310272
        %3518 = vst.msk [vmem:[#allocation3 + $0x18] sm:$0xff] %vm3517, 0.0
        %3522 = vrot.lane.b32.xlu0 %v3511, 19
        %v3523 = vpop.permute.xlu0 %3522
        %3524 = vrot.lane.b32.xlu0 %v3512, 19
        %v3525 = vpop.permute.xlu0 %3524
        %3526 = vrot.lane.b32.xlu0 %v3513, 19
        %v3527 = vpop.permute.xlu0 %3526
        %vm3528 = vcmask 154624
        %v3529 = vsel %vm3528, %v3523, %v3525
        %v3530 = vsel %vm3528, %v3525, %v3527
        %vm3535 = vcmask 1047704
        %3536 = vst.msk [vmem:[#allocation3] sm:$0xff] %vm3535, %v3523
        %3537 = vst [vmem:[#allocation3 + $0x8] sm:$0xff] %v3529
        %3538 = vst [vmem:[#allocation3 + $0x10] sm:$0xff] %v3530
        %3539 = vst.msk [vmem:[#allocation3 + $0x18] sm:$0xff] %vm3528, %v3527
        %v3540 = vld [vmem:[%s7] sm:$0xff]
        %v3541 = vld [vmem:[#allocation3] sm:$0xff]
        %v3542 = vld [vmem:[#allocation3 + $0x8] sm:$0xff]
        %v3543 = vld [vmem:[#allocation3 + $0x10] sm:$0xff]
        %vm3544 = vcmask 64512
        %v3546 = vsel %vm3544, %v3540, 0
        %3548 = vmatprep.subr.mxu0 %v3542
        %3549 = vmatpush1.msra.mxu0 %v3541
        %3550 = vmatprep.subr.mxu0 0.0
        %3551 = vmatpush1.msra.mxu0 0.0
        %3552 = vmatprep.subr.mxu0 0.0
        %3553 = vmatpush1.msra.mxu0 0.0
        %3554 = vmatprep.subr.mxu0 0.0
        %3555 = vmatpush1.msra.mxu0 0.0
        %3556 = vmatprep.subr.mxu0 0.0
        %3557 = vmatpush1.msra.mxu0 0.0
        %3558 = vmatprep.subr.mxu0 0.0
        %3559 = vmatpush1.msra.mxu0 0.0
        %3560 = vmatprep.subr.mxu0 0.0
        %3561 = vmatpush1.msra.mxu0 0.0
        %3562 = vmatprep.subr.mxu0 0.0
        %3563 = vmatpush1.msra.mxu0 0.0
        %3564 = vmatprep.subr.mxu0 0.0
        %3565 = vmatpush1.msra.mxu0 0.0
        %3566 = vmatprep.subr.mxu0 0.0
        %3567 = vmatpush1.msra.mxu0 0.0
        %3568 = vmatprep.subr.mxu0 0.0
        %3569 = vmatpush1.msra.mxu0 0.0
        %3570 = vmatprep.subr.mxu0 0.0
        %3571 = vmatpush1.msra.mxu0 0.0
        %3572 = vmatprep.subr.mxu0 0.0
        %3573 = vmatpush1.msra.mxu0 0.0
        %3574 = vmatprep.subr.mxu0 0.0
        %3575 = vmatpush1.msra.mxu0 0.0
        %3576 = vmatprep.subr.mxu0 0.0
        %3577 = vmatpush1.msra.mxu0 0.0
        %3578 = vmatprep.subr.mxu0 0.0
        %3579 = vmatpush1.msra.mxu0 0.0
        %3580 = vmatprep.subr.mxu0 0.0
        %3581 = vmatpush1.msra.mxu0 0.0
        %3582 = vmatprep.subr.mxu0 0.0
        %3583 = vmatpush1.msra.mxu0 0.0
        %3584 = vmatprep.subr.mxu0 0.0
        %3585 = vmatpush1.msra.mxu0 0.0
        %3586 = vmatprep.subr.mxu0 0.0
        %3587 = vmatpush1.msra.mxu0 0.0
        %3588 = vmatprep.subr.mxu0 0.0
        %3589 = vmatpush1.msra.mxu0 0.0
        %3590 = vmatprep.subr.mxu0 0.0
        %3591 = vmatpush1.msra.mxu0 0.0
        %3592 = vmatprep.subr.mxu0 0.0
        %3593 = vmatpush1.msra.mxu0 0.0
        %3594 = vmatprep.subr.mxu0 0.0
        %3595 = vmatpush1.msra.mxu0 0.0
        %3596 = vmatprep.subr.mxu0 0.0
        %3597 = vmatpush1.msra.mxu0 0.0
        %3598 = vmatprep.subr.mxu0 0.0
        %3599 = vmatpush1.msra.mxu0 0.0
        %3600 = vmatprep.subr.mxu0 0.0
        %3601 = vmatpush1.msra.mxu0 0.0
        %3602 = vmatprep.subr.mxu0 0.0
        %3603 = vmatpush1.msra.mxu0 0.0
        %3604 = vmatprep.subr.mxu0 0.0
        %3605 = vmatpush1.msra.mxu0 0.0
        %3606 = vmatprep.subr.mxu0 0.0
        %3607 = vmatpush1.msra.mxu0 0.0
        %3608 = vmatprep.subr.mxu0 0.0
        %3609 = vmatpush1.msra.mxu0 0.0
        %3610 = vmatprep.subr.mxu0 0.0
        %3611 = vmatpush1.msra.mxu0 0.0
        %3612 = vmatprep.mubr.f32.mxu0 0.0
        %3613 = vmatmul.mubr.f32.gmra.mrb[0].mxu0 %v3546
        %v3614 = vpop.f32.mrb[0].mxu0
        %v3615 = vadd.f32 0.0, %v3614
        %v3616 = vpop.f32.mrb[0].mxu0
        %v3617 = vadd.f32 0.0, %v3616
        %3618 = vdwg.mxu0
        %3619 = vmatprep.subr.mxu0 0.0
        %3620 = vmatpush1.msra.mxu0 %v3543
        %3621 = vmatprep.subr.mxu0 0.0
        %3622 = vmatpush1.msra.mxu0 0.0
        %3623 = vmatprep.subr.mxu0 0.0
        %3624 = vmatpush1.msra.mxu0 0.0
        %3625 = vmatprep.subr.mxu0 0.0
        %3626 = vmatpush1.msra.mxu0 0.0
        %3627 = vmatprep.subr.mxu0 0.0
        %3628 = vmatpush1.msra.mxu0 0.0
        %3629 = vmatprep.subr.mxu0 0.0
        %3630 = vmatpush1.msra.mxu0 0.0
        %3631 = vmatprep.subr.mxu0 0.0
        %3632 = vmatpush1.msra.mxu0 0.0
        %3633 = vmatprep.subr.mxu0 0.0
        %3634 = vmatpush1.msra.mxu0 0.0
        %3635 = vmatprep.subr.mxu0 0.0
        %3636 = vmatpush1.msra.mxu0 0.0
        %3637 = vmatprep.subr.mxu0 0.0
        %3638 = vmatpush1.msra.mxu0 0.0
        %3639 = vmatprep.subr.mxu0 0.0
        %3640 = vmatpush1.msra.mxu0 0.0
        %3641 = vmatprep.subr.mxu0 0.0
        %3642 = vmatpush1.msra.mxu0 0.0
        %3643 = vmatprep.subr.mxu0 0.0
        %3644 = vmatpush1.msra.mxu0 0.0
        %3645 = vmatprep.subr.mxu0 0.0
        %3646 = vmatpush1.msra.mxu0 0.0
        %3647 = vmatprep.subr.mxu0 0.0
        %3648 = vmatpush1.msra.mxu0 0.0
        %3649 = vmatprep.subr.mxu0 0.0
        %3650 = vmatpush1.msra.mxu0 0.0
        %3651 = vmatprep.subr.mxu0 0.0
        %3652 = vmatpush1.msra.mxu0 0.0
        %3653 = vmatprep.subr.mxu0 0.0
        %3654 = vmatpush1.msra.mxu0 0.0
        %3655 = vmatprep.subr.mxu0 0.0
        %3656 = vmatpush1.msra.mxu0 0.0
        %3657 = vmatprep.subr.mxu0 0.0
        %3658 = vmatpush1.msra.mxu0 0.0
        %3659 = vmatprep.subr.mxu0 0.0
        %3660 = vmatpush1.msra.mxu0 0.0
        %3661 = vmatprep.subr.mxu0 0.0
        %3662 = vmatpush1.msra.mxu0 0.0
        %3663 = vmatprep.subr.mxu0 0.0
        %3664 = vmatpush1.msra.mxu0 0.0
        %3665 = vmatprep.subr.mxu0 0.0
        %3666 = vmatpush1.msra.mxu0 0.0
        %3667 = vmatprep.subr.mxu0 0.0
        %3668 = vmatpush1.msra.mxu0 0.0
        %3669 = vmatprep.subr.mxu0 0.0
        %3670 = vmatpush1.msra.mxu0 0.0
        %3671 = vmatprep.subr.mxu0 0.0
        %3672 = vmatpush1.msra.mxu0 0.0
        %3673 = vmatprep.subr.mxu0 0.0
        %3674 = vmatpush1.msra.mxu0 0.0
        %3675 = vmatprep.subr.mxu0 0.0
        %3676 = vmatpush1.msra.mxu0 0.0
        %3677 = vmatprep.subr.mxu0 0.0
        %3678 = vmatpush1.msra.mxu0 0.0
        %3679 = vmatprep.subr.mxu0 0.0
        %3680 = vmatpush1.msra.mxu0 0.0
        %3681 = vmatprep.subr.mxu0 0.0
        %3682 = vmatpush1.msra.mxu0 0.0
        %3683 = vmatprep.mubr.f32.mxu0 0.0
        %3684 = vmatmul.mubr.f32.gmra.mrb[0].mxu0 %v3546
        %v3685 = vpop.f32.mrb[0].mxu0
        %v3686 = vadd.f32 0.0, %v3685
        %v3687 = vpop.f32.mrb[0].mxu0
        %3688 = vdwg.mxu0
        %v3689 = vadd.f32 %v3479, %v3615
        %v3690 = vadd.f32 %v3480, %v3617
        %v3691 = vadd.f32 %v3481, %v3686
        %s3692 = scalar_lea.vmem %s7, 8
        %v3693 = vld [vmem:[%s3692] sm:$0xff]
        %v3694 = vld [vmem:[#allocation3] sm:$0xff]
        %v3695 = vld [vmem:[#allocation3 + $0x8] sm:$0xff]
        %v3696 = vld [vmem:[#allocation3 + $0x10] sm:$0xff]
        %v3697 = vld [vmem:[#allocation3 + $0x18] sm:$0xff]
        %3702 = vrot.lane.b32.xlu0 %v3694, 127
        %v3703 = vpop.permute.xlu0 %3702
        %3704 = vrot.lane.b32.xlu0 %v3695, 127
        %v3705 = vpop.permute.xlu0 %3704
        %3706 = vrot.lane.b32.xlu0 %v3696, 127
        %v3707 = vpop.permute.xlu0 %3706
        %3708 = vrot.lane.b32.xlu0 %v3697, 127
        %v3709 = vpop.permute.xlu0 %3708
        %v3710 = vsel %vm443, %v3703, %v3705
        %v3711 = vsel %vm443, %v3705, %v3707
        %v3712 = vsel %vm443, %v3707, %v3709
        %v3717 = vsel %vm3544, %v3693, 0
        %3719 = vmatprep.subr.mxu0 %v3711
        %3720 = vmatpush1.msra.mxu0 %v3710
        %3721 = vmatprep.subr.mxu0 0.0
        %3722 = vmatpush1.msra.mxu0 0.0
        %3723 = vmatprep.subr.mxu0 0.0
        %3724 = vmatpush1.msra.mxu0 0.0
        %3725 = vmatprep.subr.mxu0 0.0
        %3726 = vmatpush1.msra.mxu0 0.0
        %3727 = vmatprep.subr.mxu0 0.0
        %3728 = vmatpush1.msra.mxu0 0.0
        %3729 = vmatprep.subr.mxu0 0.0
        %3730 = vmatpush1.msra.mxu0 0.0
        %3731 = vmatprep.subr.mxu0 0.0
        %3732 = vmatpush1.msra.mxu0 0.0
        %3733 = vmatprep.subr.mxu0 0.0
        %3734 = vmatpush1.msra.mxu0 0.0
        %3735 = vmatprep.subr.mxu0 0.0
        %3736 = vmatpush1.msra.mxu0 0.0
        %3737 = vmatprep.subr.mxu0 0.0
        %3738 = vmatpush1.msra.mxu0 0.0
        %3739 = vmatprep.subr.mxu0 0.0
        %3740 = vmatpush1.msra.mxu0 0.0
        %3741 = vmatprep.subr.mxu0 0.0
        %3742 = vmatpush1.msra.mxu0 0.0
        %3743 = vmatprep.subr.mxu0 0.0
        %3744 = vmatpush1.msra.mxu0 0.0
        %3745 = vmatprep.subr.mxu0 0.0
        %3746 = vmatpush1.msra.mxu0 0.0
        %3747 = vmatprep.subr.mxu0 0.0
        %3748 = vmatpush1.msra.mxu0 0.0
        %3749 = vmatprep.subr.mxu0 0.0
        %3750 = vmatpush1.msra.mxu0 0.0
        %3751 = vmatprep.subr.mxu0 0.0
        %3752 = vmatpush1.msra.mxu0 0.0
        %3753 = vmatprep.subr.mxu0 0.0
        %3754 = vmatpush1.msra.mxu0 0.0
        %3755 = vmatprep.subr.mxu0 0.0
        %3756 = vmatpush1.msra.mxu0 0.0
        %3757 = vmatprep.subr.mxu0 0.0
        %3758 = vmatpush1.msra.mxu0 0.0
        %3759 = vmatprep.subr.mxu0 0.0
        %3760 = vmatpush1.msra.mxu0 0.0
        %3761 = vmatprep.subr.mxu0 0.0
        %3762 = vmatpush1.msra.mxu0 0.0
        %3763 = vmatprep.subr.mxu0 0.0
        %3764 = vmatpush1.msra.mxu0 0.0
        %3765 = vmatprep.subr.mxu0 0.0
        %3766 = vmatpush1.msra.mxu0 0.0
        %3767 = vmatprep.subr.mxu0 0.0
        %3768 = vmatpush1.msra.mxu0 0.0
        %3769 = vmatprep.subr.mxu0 0.0
        %3770 = vmatpush1.msra.mxu0 0.0
        %3771 = vmatprep.subr.mxu0 0.0
        %3772 = vmatpush1.msra.mxu0 0.0
        %3773 = vmatprep.subr.mxu0 0.0
        %3774 = vmatpush1.msra.mxu0 0.0
        %3775 = vmatprep.subr.mxu0 0.0
        %3776 = vmatpush1.msra.mxu0 0.0
        %3777 = vmatprep.subr.mxu0 0.0
        %3778 = vmatpush1.msra.mxu0 0.0
        %3779 = vmatprep.subr.mxu0 0.0
        %3780 = vmatpush1.msra.mxu0 0.0
        %3781 = vmatprep.subr.mxu0 0.0
        %3782 = vmatpush1.msra.mxu0 0.0
        %3783 = vmatprep.mubr.f32.mxu0 0.0
        %3784 = vmatmul.mubr.f32.gmra.mrb[0].mxu0 %v3717
        %v3785 = vpop.f32.mrb[0].mxu0
        %v3786 = vadd.f32 0.0, %v3785
        %v3787 = vpop.f32.mrb[0].mxu0
        %v3788 = vadd.f32 0.0, %v3787
        %3789 = vdwg.mxu0
        %3790 = vmatprep.subr.mxu0 0.0
        %3791 = vmatpush1.msra.mxu0 %v3712
        %3792 = vmatprep.subr.mxu0 0.0
        %3793 = vmatpush1.msra.mxu0 0.0
        %3794 = vmatprep.subr.mxu0 0.0
        %3795 = vmatpush1.msra.mxu0 0.0
        %3796 = vmatprep.subr.mxu0 0.0
        %3797 = vmatpush1.msra.mxu0 0.0
        %3798 = vmatprep.subr.mxu0 0.0
        %3799 = vmatpush1.msra.mxu0 0.0
        %3800 = vmatprep.subr.mxu0 0.0
        %3801 = vmatpush1.msra.mxu0 0.0
        %3802 = vmatprep.subr.mxu0 0.0
        %3803 = vmatpush1.msra.mxu0 0.0
        %3804 = vmatprep.subr.mxu0 0.0
        %3805 = vmatpush1.msra.mxu0 0.0
        %3806 = vmatprep.subr.mxu0 0.0
        %3807 = vmatpush1.msra.mxu0 0.0
        %3808 = vmatprep.subr.mxu0 0.0
        %3809 = vmatpush1.msra.mxu0 0.0
        %3810 = vmatprep.subr.mxu0 0.0
        %3811 = vmatpush1.msra.mxu0 0.0
        %3812 = vmatprep.subr.mxu0 0.0
        %3813 = vmatpush1.msra.mxu0 0.0
        %3814 = vmatprep.subr.mxu0 0.0
        %3815 = vmatpush1.msra.mxu0 0.0
        %3816 = vmatprep.subr.mxu0 0.0
        %3817 = vmatpush1.msra.mxu0 0.0
        %3818 = vmatprep.subr.mxu0 0.0
        %3819 = vmatpush1.msra.mxu0 0.0
        %3820 = vmatprep.subr.mxu0 0.0
        %3821 = vmatpush1.msra.mxu0 0.0
        %3822 = vmatprep.subr.mxu0 0.0
        %3823 = vmatpush1.msra.mxu0 0.0
        %3824 = vmatprep.subr.mxu0 0.0
        %3825 = vmatpush1.msra.mxu0 0.0
        %3826 = vmatprep.subr.mxu0 0.0
        %3827 = vmatpush1.msra.mxu0 0.0
        %3828 = vmatprep.subr.mxu0 0.0
        %3829 = vmatpush1.msra.mxu0 0.0
        %3830 = vmatprep.subr.mxu0 0.0
        %3831 = vmatpush1.msra.mxu0 0.0
        %3832 = vmatprep.subr.mxu0 0.0
        %3833 = vmatpush1.msra.mxu0 0.0
        %3834 = vmatprep.subr.mxu0 0.0
        %3835 = vmatpush1.msra.mxu0 0.0
        %3836 = vmatprep.subr.mxu0 0.0
        %3837 = vmatpush1.msra.mxu0 0.0
        %3838 = vmatprep.subr.mxu0 0.0
        %3839 = vmatpush1.msra.mxu0 0.0
        %3840 = vmatprep.subr.mxu0 0.0
        %3841 = vmatpush1.msra.mxu0 0.0
        %3842 = vmatprep.subr.mxu0 0.0
        %3843 = vmatpush1.msra.mxu0 0.0
        %3844 = vmatprep.subr.mxu0 0.0
        %3845 = vmatpush1.msra.mxu0 0.0
        %3846 = vmatprep.subr.mxu0 0.0
        %3847 = vmatpush1.msra.mxu0 0.0
        %3848 = vmatprep.subr.mxu0 0.0
        %3849 = vmatpush1.msra.mxu0 0.0
        %3850 = vmatprep.subr.mxu0 0.0
        %3851 = vmatpush1.msra.mxu0 0.0
        %3852 = vmatprep.subr.mxu0 0.0
        %3853 = vmatpush1.msra.mxu0 0.0
        %3854 = vmatprep.mubr.f32.mxu0 0.0
        %3855 = vmatmul.mubr.f32.gmra.mrb[0].mxu0 %v3717
        %v3856 = vpop.f32.mrb[0].mxu0
        %v3857 = vadd.f32 0.0, %v3856
        %v3858 = vpop.f32.mrb[0].mxu0
        %3859 = vdwg.mxu0
        %v3860 = vadd.f32 %v3689, %v3786
        %v3861 = vadd.f32 %v3690, %v3788
        %v3862 = vadd.f32 %v3691, %v3857
        %s3863 = scalar_lea.vmem %s7, 16
        %v3864 = vld [vmem:[%s3863] sm:$0xff]
        %3865 = vrot.lane.b32.xlu0 %v3694, 126
        %v3866 = vpop.permute.xlu0 %3865
        %3867 = vrot.lane.b32.xlu0 %v3695, 126
        %v3868 = vpop.permute.xlu0 %3867
        %3869 = vrot.lane.b32.xlu0 %v3696, 126
        %v3870 = vpop.permute.xlu0 %3869
        %3871 = vrot.lane.b32.xlu0 %v3697, 126
        %v3872 = vpop.permute.xlu0 %3871
        %v3873 = vsel %vm1085, %v3866, %v3868
        %v3874 = vsel %vm1085, %v3868, %v3870
        %v3875 = vsel %vm1085, %v3870, %v3872
        %v3880 = vsel %vm3544, %v3864, 0
        %3882 = vmatprep.subr.mxu0 %v3874
        %3883 = vmatpush1.msra.mxu0 %v3873
        %3884 = vmatprep.subr.mxu0 0.0
        %3885 = vmatpush1.msra.mxu0 0.0
        %3886 = vmatprep.subr.mxu0 0.0
        %3887 = vmatpush1.msra.mxu0 0.0
        %3888 = vmatprep.subr.mxu0 0.0
        %3889 = vmatpush1.msra.mxu0 0.0
        %3890 = vmatprep.subr.mxu0 0.0
        %3891 = vmatpush1.msra.mxu0 0.0
        %3892 = vmatprep.subr.mxu0 0.0
        %3893 = vmatpush1.msra.mxu0 0.0
        %3894 = vmatprep.subr.mxu0 0.0
        %3895 = vmatpush1.msra.mxu0 0.0
        %3896 = vmatprep.subr.mxu0 0.0
        %3897 = vmatpush1.msra.mxu0 0.0
        %3898 = vmatprep.subr.mxu0 0.0
        %3899 = vmatpush1.msra.mxu0 0.0
        %3900 = vmatprep.subr.mxu0 0.0
        %3901 = vmatpush1.msra.mxu0 0.0
        %3902 = vmatprep.subr.mxu0 0.0
        %3903 = vmatpush1.msra.mxu0 0.0
        %3904 = vmatprep.subr.mxu0 0.0
        %3905 = vmatpush1.msra.mxu0 0.0
        %3906 = vmatprep.subr.mxu0 0.0
        %3907 = vmatpush1.msra.mxu0 0.0
        %3908 = vmatprep.subr.mxu0 0.0
        %3909 = vmatpush1.msra.mxu0 0.0
        %3910 = vmatprep.subr.mxu0 0.0
        %3911 = vmatpush1.msra.mxu0 0.0
        %3912 = vmatprep.subr.mxu0 0.0
        %3913 = vmatpush1.msra.mxu0 0.0
        %3914 = vmatprep.subr.mxu0 0.0
        %3915 = vmatpush1.msra.mxu0 0.0
        %3916 = vmatprep.subr.mxu0 0.0
        %3917 = vmatpush1.msra.mxu0 0.0
        %3918 = vmatprep.subr.mxu0 0.0
        %3919 = vmatpush1.msra.mxu0 0.0
        %3920 = vmatprep.subr.mxu0 0.0
        %3921 = vmatpush1.msra.mxu0 0.0
        %3922 = vmatprep.subr.mxu0 0.0
        %3923 = vmatpush1.msra.mxu0 0.0
        %3924 = vmatprep.subr.mxu0 0.0
        %3925 = vmatpush1.msra.mxu0 0.0
        %3926 = vmatprep.subr.mxu0 0.0
        %3927 = vmatpush1.msra.mxu0 0.0
        %3928 = vmatprep.subr.mxu0 0.0
        %3929 = vmatpush1.msra.mxu0 0.0
        %3930 = vmatprep.subr.mxu0 0.0
        %3931 = vmatpush1.msra.mxu0 0.0
        %3932 = vmatprep.subr.mxu0 0.0
        %3933 = vmatpush1.msra.mxu0 0.0
        %3934 = vmatprep.subr.mxu0 0.0
        %3935 = vmatpush1.msra.mxu0 0.0
        %3936 = vmatprep.subr.mxu0 0.0
        %3937 = vmatpush1.msra.mxu0 0.0
        %3938 = vmatprep.subr.mxu0 0.0
        %3939 = vmatpush1.msra.mxu0 0.0
        %3940 = vmatprep.subr.mxu0 0.0
        %3941 = vmatpush1.msra.mxu0 0.0
        %3942 = vmatprep.subr.mxu0 0.0
        %3943 = vmatpush1.msra.mxu0 0.0
        %3944 = vmatprep.subr.mxu0 0.0
        %3945 = vmatpush1.msra.mxu0 0.0
        %3946 = vmatprep.mubr.f32.mxu0 0.0
        %3947 = vmatmul.mubr.f32.gmra.mrb[0].mxu0 %v3880
        %v3948 = vpop.f32.mrb[0].mxu0
        %v3949 = vadd.f32 0.0, %v3948
        %v3950 = vpop.f32.mrb[0].mxu0
        %v3951 = vadd.f32 0.0, %v3950
        %3952 = vdwg.mxu0
        %3953 = vmatprep.subr.mxu0 0.0
        %3954 = vmatpush1.msra.mxu0 %v3875
        %3955 = vmatprep.subr.mxu0 0.0
        %3956 = vmatpush1.msra.mxu0 0.0
        %3957 = vmatprep.subr.mxu0 0.0
        %3958 = vmatpush1.msra.mxu0 0.0
        %3959 = vmatprep.subr.mxu0 0.0
        %3960 = vmatpush1.msra.mxu0 0.0
        %3961 = vmatprep.subr.mxu0 0.0
        %3962 = vmatpush1.msra.mxu0 0.0
        %3963 = vmatprep.subr.mxu0 0.0
        %3964 = vmatpush1.msra.mxu0 0.0
        %3965 = vmatprep.subr.mxu0 0.0
        %3966 = vmatpush1.msra.mxu0 0.0
        %3967 = vmatprep.subr.mxu0 0.0
        %3968 = vmatpush1.msra.mxu0 0.0
        %3969 = vmatprep.subr.mxu0 0.0
        %3970 = vmatpush1.msra.mxu0 0.0
        %3971 = vmatprep.subr.mxu0 0.0
        %3972 = vmatpush1.msra.mxu0 0.0
        %3973 = vmatprep.subr.mxu0 0.0
        %3974 = vmatpush1.msra.mxu0 0.0
        %3975 = vmatprep.subr.mxu0 0.0
        %3976 = vmatpush1.msra.mxu0 0.0
        %3977 = vmatprep.subr.mxu0 0.0
        %3978 = vmatpush1.msra.mxu0 0.0
        %3979 = vmatprep.subr.mxu0 0.0
        %3980 = vmatpush1.msra.mxu0 0.0
        %3981 = vmatprep.subr.mxu0 0.0
        %3982 = vmatpush1.msra.mxu0 0.0
        %3983 = vmatprep.subr.mxu0 0.0
        %3984 = vmatpush1.msra.mxu0 0.0
        %3985 = vmatprep.subr.mxu0 0.0
        %3986 = vmatpush1.msra.mxu0 0.0
        %3987 = vmatprep.subr.mxu0 0.0
        %3988 = vmatpush1.msra.mxu0 0.0
        %3989 = vmatprep.subr.mxu0 0.0
        %3990 = vmatpush1.msra.mxu0 0.0
        %3991 = vmatprep.subr.mxu0 0.0
        %3992 = vmatpush1.msra.mxu0 0.0
        %3993 = vmatprep.subr.mxu0 0.0
        %3994 = vmatpush1.msra.mxu0 0.0
        %3995 = vmatprep.subr.mxu0 0.0
        %3996 = vmatpush1.msra.mxu0 0.0
        %3997 = vmatprep.subr.mxu0 0.0
        %3998 = vmatpush1.msra.mxu0 0.0
        %3999 = vmatprep.subr.mxu0 0.0
        %4000 = vmatpush1.msra.mxu0 0.0
        %4001 = vmatprep.subr.mxu0 0.0
        %4002 = vmatpush1.msra.mxu0 0.0
        %4003 = vmatprep.subr.mxu0 0.0
        %4004 = vmatpush1.msra.mxu0 0.0
        %4005 = vmatprep.subr.mxu0 0.0
        %4006 = vmatpush1.msra.mxu0 0.0
        %4007 = vmatprep.subr.mxu0 0.0
        %4008 = vmatpush1.msra.mxu0 0.0
        %4009 = vmatprep.subr.mxu0 0.0
        %4010 = vmatpush1.msra.mxu0 0.0
        %4011 = vmatprep.subr.mxu0 0.0
        %4012 = vmatpush1.msra.mxu0 0.0
        %4013 = vmatprep.subr.mxu0 0.0
        %4014 = vmatpush1.msra.mxu0 0.0
        %4015 = vmatprep.subr.mxu0 0.0
        %4016 = vmatpush1.msra.mxu0 0.0
        %4017 = vmatprep.mubr.f32.mxu0 0.0
        %4018 = vmatmul.mubr.f32.gmra.mrb[0].mxu0 %v3880
        %v4019 = vpop.f32.mrb[0].mxu0
        %v4020 = vadd.f32 0.0, %v4019
        %v4021 = vpop.f32.mrb[0].mxu0
        %4022 = vdwg.mxu0
        %v4023 = vadd.f32 %v3860, %v3949
        %v4024 = vadd.f32 %v3861, %v3951
        %v4025 = vadd.f32 %v3862, %v4020
        %s4026 = scalar_lea.vmem %s7, 24
        %v4027 = vld [vmem:[%s4026] sm:$0xff]
        %4028 = vrot.lane.b32.xlu0 %v3694, 110
        %v4029 = vpop.permute.xlu0 %4028
        %4030 = vrot.lane.b32.xlu0 %v3695, 110
        %v4031 = vpop.permute.xlu0 %4030
        %4032 = vrot.lane.b32.xlu0 %v3696, 110
        %v4033 = vpop.permute.xlu0 %4032
        %4034 = vrot.lane.b32.xlu0 %v3697, 110
        %v4035 = vpop.permute.xlu0 %4034
        %v4036 = vsel %vm1430, %v4029, %v4031
        %v4037 = vsel %vm1430, %v4031, %v4033
        %v4038 = vsel %vm1430, %v4033, %v4035
        %v4043 = vsel %vm3544, %v4027, 0
        %4045 = vmatprep.subr.mxu0 %v4037
        %4046 = vmatpush1.msra.mxu0 %v4036
        %4047 = vmatprep.subr.mxu0 0.0
        %4048 = vmatpush1.msra.mxu0 0.0
        %4049 = vmatprep.subr.mxu0 0.0
        %4050 = vmatpush1.msra.mxu0 0.0
        %4051 = vmatprep.subr.mxu0 0.0
        %4052 = vmatpush1.msra.mxu0 0.0
        %4053 = vmatprep.subr.mxu0 0.0
        %4054 = vmatpush1.msra.mxu0 0.0
        %4055 = vmatprep.subr.mxu0 0.0
        %4056 = vmatpush1.msra.mxu0 0.0
        %4057 = vmatprep.subr.mxu0 0.0
        %4058 = vmatpush1.msra.mxu0 0.0
        %4059 = vmatprep.subr.mxu0 0.0
        %4060 = vmatpush1.msra.mxu0 0.0
        %4061 = vmatprep.subr.mxu0 0.0
        %4062 = vmatpush1.msra.mxu0 0.0
        %4063 = vmatprep.subr.mxu0 0.0
        %4064 = vmatpush1.msra.mxu0 0.0
        %4065 = vmatprep.subr.mxu0 0.0
        %4066 = vmatpush1.msra.mxu0 0.0
        %4067 = vmatprep.subr.mxu0 0.0
        %4068 = vmatpush1.msra.mxu0 0.0
        %4069 = vmatprep.subr.mxu0 0.0
        %4070 = vmatpush1.msra.mxu0 0.0
        %4071 = vmatprep.subr.mxu0 0.0
        %4072 = vmatpush1.msra.mxu0 0.0
        %4073 = vmatprep.subr.mxu0 0.0
        %4074 = vmatpush1.msra.mxu0 0.0
        %4075 = vmatprep.subr.mxu0 0.0
        %4076 = vmatpush1.msra.mxu0 0.0
        %4077 = vmatprep.subr.mxu0 0.0
        %4078 = vmatpush1.msra.mxu0 0.0
        %4079 = vmatprep.subr.mxu0 0.0
        %4080 = vmatpush1.msra.mxu0 0.0
        %4081 = vmatprep.subr.mxu0 0.0
        %4082 = vmatpush1.msra.mxu0 0.0
        %4083 = vmatprep.subr.mxu0 0.0
        %4084 = vmatpush1.msra.mxu0 0.0
        %4085 = vmatprep.subr.mxu0 0.0
        %4086 = vmatpush1.msra.mxu0 0.0
        %4087 = vmatprep.subr.mxu0 0.0
        %4088 = vmatpush1.msra.mxu0 0.0
        %4089 = vmatprep.subr.mxu0 0.0
        %4090 = vmatpush1.msra.mxu0 0.0
        %4091 = vmatprep.subr.mxu0 0.0
        %4092 = vmatpush1.msra.mxu0 0.0
        %4093 = vmatprep.subr.mxu0 0.0
        %4094 = vmatpush1.msra.mxu0 0.0
        %4095 = vmatprep.subr.mxu0 0.0
        %4096 = vmatpush1.msra.mxu0 0.0
        %4097 = vmatprep.subr.mxu0 0.0
        %4098 = vmatpush1.msra.mxu0 0.0
        %4099 = vmatprep.subr.mxu0 0.0
        %4100 = vmatpush1.msra.mxu0 0.0
        %4101 = vmatprep.subr.mxu0 0.0
        %4102 = vmatpush1.msra.mxu0 0.0
        %4103 = vmatprep.subr.mxu0 0.0
        %4104 = vmatpush1.msra.mxu0 0.0
        %4105 = vmatprep.subr.mxu0 0.0
        %4106 = vmatpush1.msra.mxu0 0.0
        %4107 = vmatprep.subr.mxu0 0.0
        %4108 = vmatpush1.msra.mxu0 0.0
        %4109 = vmatprep.mubr.f32.mxu0 0.0
        %4110 = vmatmul.mubr.f32.gmra.mrb[0].mxu0 %v4043
        %v4111 = vpop.f32.mrb[0].mxu0
        %v4112 = vadd.f32 0.0, %v4111
        %v4113 = vpop.f32.mrb[0].mxu0
        %v4114 = vadd.f32 0.0, %v4113
        %4115 = vdwg.mxu0
        %4116 = vmatprep.subr.mxu0 0.0
        %4117 = vmatpush1.msra.mxu0 %v4038
        %4118 = vmatprep.subr.mxu0 0.0
        %4119 = vmatpush1.msra.mxu0 0.0
        %4120 = vmatprep.subr.mxu0 0.0
        %4121 = vmatpush1.msra.mxu0 0.0
        %4122 = vmatprep.subr.mxu0 0.0
        %4123 = vmatpush1.msra.mxu0 0.0
        %4124 = vmatprep.subr.mxu0 0.0
        %4125 = vmatpush1.msra.mxu0 0.0
        %4126 = vmatprep.subr.mxu0 0.0
        %4127 = vmatpush1.msra.mxu0 0.0
        %4128 = vmatprep.subr.mxu0 0.0
        %4129 = vmatpush1.msra.mxu0 0.0
        %4130 = vmatprep.subr.mxu0 0.0
        %4131 = vmatpush1.msra.mxu0 0.0
        %4132 = vmatprep.subr.mxu0 0.0
        %4133 = vmatpush1.msra.mxu0 0.0
        %4134 = vmatprep.subr.mxu0 0.0
        %4135 = vmatpush1.msra.mxu0 0.0
        %4136 = vmatprep.subr.mxu0 0.0
        %4137 = vmatpush1.msra.mxu0 0.0
        %4138 = vmatprep.subr.mxu0 0.0
        %4139 = vmatpush1.msra.mxu0 0.0
        %4140 = vmatprep.subr.mxu0 0.0
        %4141 = vmatpush1.msra.mxu0 0.0
        %4142 = vmatprep.subr.mxu0 0.0
        %4143 = vmatpush1.msra.mxu0 0.0
        %4144 = vmatprep.subr.mxu0 0.0
        %4145 = vmatpush1.msra.mxu0 0.0
        %4146 = vmatprep.subr.mxu0 0.0
        %4147 = vmatpush1.msra.mxu0 0.0
        %4148 = vmatprep.subr.mxu0 0.0
        %4149 = vmatpush1.msra.mxu0 0.0
        %4150 = vmatprep.subr.mxu0 0.0
        %4151 = vmatpush1.msra.mxu0 0.0
        %4152 = vmatprep.subr.mxu0 0.0
        %4153 = vmatpush1.msra.mxu0 0.0
        %4154 = vmatprep.subr.mxu0 0.0
        %4155 = vmatpush1.msra.mxu0 0.0
        %4156 = vmatprep.subr.mxu0 0.0
        %4157 = vmatpush1.msra.mxu0 0.0
        %4158 = vmatprep.subr.mxu0 0.0
        %4159 = vmatpush1.msra.mxu0 0.0
        %4160 = vmatprep.subr.mxu0 0.0
        %4161 = vmatpush1.msra.mxu0 0.0
        %4162 = vmatprep.subr.mxu0 0.0
        %4163 = vmatpush1.msra.mxu0 0.0
        %4164 = vmatprep.subr.mxu0 0.0
        %4165 = vmatpush1.msra.mxu0 0.0
        %4166 = vmatprep.subr.mxu0 0.0
        %4167 = vmatpush1.msra.mxu0 0.0
        %4168 = vmatprep.subr.mxu0 0.0
        %4169 = vmatpush1.msra.mxu0 0.0
        %4170 = vmatprep.subr.mxu0 0.0
        %4171 = vmatpush1.msra.mxu0 0.0
        %4172 = vmatprep.subr.mxu0 0.0
        %4173 = vmatpush1.msra.mxu0 0.0
        %4174 = vmatprep.subr.mxu0 0.0
        %4175 = vmatpush1.msra.mxu0 0.0
        %4176 = vmatprep.subr.mxu0 0.0
        %4177 = vmatpush1.msra.mxu0 0.0
        %4178 = vmatprep.subr.mxu0 0.0
        %4179 = vmatpush1.msra.mxu0 0.0
        %4180 = vmatprep.mubr.f32.mxu0 0.0
        %4181 = vmatmul.mubr.f32.gmra.mrb[0].mxu0 %v4043
        %v4182 = vpop.f32.mrb[0].mxu0
        %v4183 = vadd.f32 0.0, %v4182
        %v4184 = vpop.f32.mrb[0].mxu0
        %4185 = vdwg.mxu0
        %v4186 = vadd.f32 %v4023, %v4112
        %v4187 = vadd.f32 %v4024, %v4114
        %v4188 = vadd.f32 %v4025, %v4183
        %s4189 = scalar_lea.vmem %s7, 32
        %v4190 = vld [vmem:[%s4189] sm:$0xff]
        %4191 = vrot.lane.b32.xlu0 %v3694, 109
        %v4192 = vpop.permute.xlu0 %4191
        %4193 = vrot.lane.b32.xlu0 %v3695, 109
        %v4194 = vpop.permute.xlu0 %4193
        %4195 = vrot.lane.b32.xlu0 %v3696, 109
        %v4196 = vpop.permute.xlu0 %4195
        %4197 = vrot.lane.b32.xlu0 %v3697, 109
        %v4198 = vpop.permute.xlu0 %4197
        %v4199 = vsel %vm1775, %v4192, %v4194
        %v4200 = vsel %vm1775, %v4194, %v4196
        %v4201 = vsel %vm1775, %v4196, %v4198
        %v4206 = vsel %vm3544, %v4190, 0
        %4208 = vmatprep.subr.mxu0 %v4200
        %4209 = vmatpush1.msra.mxu0 %v4199
        %4210 = vmatprep.subr.mxu0 0.0
        %4211 = vmatpush1.msra.mxu0 0.0
        %4212 = vmatprep.subr.mxu0 0.0
        %4213 = vmatpush1.msra.mxu0 0.0
        %4214 = vmatprep.subr.mxu0 0.0
        %4215 = vmatpush1.msra.mxu0 0.0
        %4216 = vmatprep.subr.mxu0 0.0
        %4217 = vmatpush1.msra.mxu0 0.0
        %4218 = vmatprep.subr.mxu0 0.0
        %4219 = vmatpush1.msra.mxu0 0.0
        %4220 = vmatprep.subr.mxu0 0.0
        %4221 = vmatpush1.msra.mxu0 0.0
        %4222 = vmatprep.subr.mxu0 0.0
        %4223 = vmatpush1.msra.mxu0 0.0
        %4224 = vmatprep.subr.mxu0 0.0
        %4225 = vmatpush1.msra.mxu0 0.0
        %4226 = vmatprep.subr.mxu0 0.0
        %4227 = vmatpush1.msra.mxu0 0.0
        %4228 = vmatprep.subr.mxu0 0.0
        %4229 = vmatpush1.msra.mxu0 0.0
        %4230 = vmatprep.subr.mxu0 0.0
        %4231 = vmatpush1.msra.mxu0 0.0
        %4232 = vmatprep.subr.mxu0 0.0
        %4233 = vmatpush1.msra.mxu0 0.0
        %4234 = vmatprep.subr.mxu0 0.0
        %4235 = vmatpush1.msra.mxu0 0.0
        %4236 = vmatprep.subr.mxu0 0.0
        %4237 = vmatpush1.msra.mxu0 0.0
        %4238 = vmatprep.subr.mxu0 0.0
        %4239 = vmatpush1.msra.mxu0 0.0
        %4240 = vmatprep.subr.mxu0 0.0
        %4241 = vmatpush1.msra.mxu0 0.0
        %4242 = vmatprep.subr.mxu0 0.0
        %4243 = vmatpush1.msra.mxu0 0.0
        %4244 = vmatprep.subr.mxu0 0.0
        %4245 = vmatpush1.msra.mxu0 0.0
        %4246 = vmatprep.subr.mxu0 0.0
        %4247 = vmatpush1.msra.mxu0 0.0
        %4248 = vmatprep.subr.mxu0 0.0
        %4249 = vmatpush1.msra.mxu0 0.0
        %4250 = vmatprep.subr.mxu0 0.0
        %4251 = vmatpush1.msra.mxu0 0.0
        %4252 = vmatprep.subr.mxu0 0.0
        %4253 = vmatpush1.msra.mxu0 0.0
        %4254 = vmatprep.subr.mxu0 0.0
        %4255 = vmatpush1.msra.mxu0 0.0
        %4256 = vmatprep.subr.mxu0 0.0
        %4257 = vmatpush1.msra.mxu0 0.0
        %4258 = vmatprep.subr.mxu0 0.0
        %4259 = vmatpush1.msra.mxu0 0.0
        %4260 = vmatprep.subr.mxu0 0.0
        %4261 = vmatpush1.msra.mxu0 0.0
        %4262 = vmatprep.subr.mxu0 0.0
        %4263 = vmatpush1.msra.mxu0 0.0
        %4264 = vmatprep.subr.mxu0 0.0
        %4265 = vmatpush1.msra.mxu0 0.0
        %4266 = vmatprep.subr.mxu0 0.0
        %4267 = vmatpush1.msra.mxu0 0.0
        %4268 = vmatprep.subr.mxu0 0.0
        %4269 = vmatpush1.msra.mxu0 0.0
        %4270 = vmatprep.subr.mxu0 0.0
        %4271 = vmatpush1.msra.mxu0 0.0
        %4272 = vmatprep.mubr.f32.mxu0 0.0
        %4273 = vmatmul.mubr.f32.gmra.mrb[0].mxu0 %v4206
        %v4274 = vpop.f32.mrb[0].mxu0
        %v4275 = vadd.f32 0.0, %v4274
        %v4276 = vpop.f32.mrb[0].mxu0
        %v4277 = vadd.f32 0.0, %v4276
        %4278 = vdwg.mxu0
        %4279 = vmatprep.subr.mxu0 0.0
        %4280 = vmatpush1.msra.mxu0 %v4201
        %4281 = vmatprep.subr.mxu0 0.0
        %4282 = vmatpush1.msra.mxu0 0.0
        %4283 = vmatprep.subr.mxu0 0.0
        %4284 = vmatpush1.msra.mxu0 0.0
        %4285 = vmatprep.subr.mxu0 0.0
        %4286 = vmatpush1.msra.mxu0 0.0
        %4287 = vmatprep.subr.mxu0 0.0
        %4288 = vmatpush1.msra.mxu0 0.0
        %4289 = vmatprep.subr.mxu0 0.0
        %4290 = vmatpush1.msra.mxu0 0.0
        %4291 = vmatprep.subr.mxu0 0.0
        %4292 = vmatpush1.msra.mxu0 0.0
        %4293 = vmatprep.subr.mxu0 0.0
        %4294 = vmatpush1.msra.mxu0 0.0
        %4295 = vmatprep.subr.mxu0 0.0
        %4296 = vmatpush1.msra.mxu0 0.0
        %4297 = vmatprep.subr.mxu0 0.0
        %4298 = vmatpush1.msra.mxu0 0.0
        %4299 = vmatprep.subr.mxu0 0.0
        %4300 = vmatpush1.msra.mxu0 0.0
        %4301 = vmatprep.subr.mxu0 0.0
        %4302 = vmatpush1.msra.mxu0 0.0
        %4303 = vmatprep.subr.mxu0 0.0
        %4304 = vmatpush1.msra.mxu0 0.0
        %4305 = vmatprep.subr.mxu0 0.0
        %4306 = vmatpush1.msra.mxu0 0.0
        %4307 = vmatprep.subr.mxu0 0.0
        %4308 = vmatpush1.msra.mxu0 0.0
        %4309 = vmatprep.subr.mxu0 0.0
        %4310 = vmatpush1.msra.mxu0 0.0
        %4311 = vmatprep.subr.mxu0 0.0
        %4312 = vmatpush1.msra.mxu0 0.0
        %4313 = vmatprep.subr.mxu0 0.0
        %4314 = vmatpush1.msra.mxu0 0.0
        %4315 = vmatprep.subr.mxu0 0.0
        %4316 = vmatpush1.msra.mxu0 0.0
        %4317 = vmatprep.subr.mxu0 0.0
        %4318 = vmatpush1.msra.mxu0 0.0
        %4319 = vmatprep.subr.mxu0 0.0
        %4320 = vmatpush1.msra.mxu0 0.0
        %4321 = vmatprep.subr.mxu0 0.0
        %4322 = vmatpush1.msra.mxu0 0.0
        %4323 = vmatprep.subr.mxu0 0.0
        %4324 = vmatpush1.msra.mxu0 0.0
        %4325 = vmatprep.subr.mxu0 0.0
        %4326 = vmatpush1.msra.mxu0 0.0
        %4327 = vmatprep.subr.mxu0 0.0
        %4328 = vmatpush1.msra.mxu0 0.0
        %4329 = vmatprep.subr.mxu0 0.0
        %4330 = vmatpush1.msra.mxu0 0.0
        %4331 = vmatprep.subr.mxu0 0.0
        %4332 = vmatpush1.msra.mxu0 0.0
        %4333 = vmatprep.subr.mxu0 0.0
        %4334 = vmatpush1.msra.mxu0 0.0
        %4335 = vmatprep.subr.mxu0 0.0
        %4336 = vmatpush1.msra.mxu0 0.0
        %4337 = vmatprep.subr.mxu0 0.0
        %4338 = vmatpush1.msra.mxu0 0.0
        %4339 = vmatprep.subr.mxu0 0.0
        %4340 = vmatpush1.msra.mxu0 0.0
        %4341 = vmatprep.subr.mxu0 0.0
        %4342 = vmatpush1.msra.mxu0 0.0
        %4343 = vmatprep.mubr.f32.mxu0 0.0
        %4344 = vmatmul.mubr.f32.gmra.mrb[0].mxu0 %v4206
        %v4345 = vpop.f32.mrb[0].mxu0
        %v4346 = vadd.f32 0.0, %v4345
        %v4347 = vpop.f32.mrb[0].mxu0
        %4348 = vdwg.mxu0
        %v4349 = vadd.f32 %v4186, %v4275
        %v4350 = vadd.f32 %v4187, %v4277
        %v4351 = vadd.f32 %v4188, %v4346
        %s4352 = scalar_lea.vmem %s7, 40
        %v4353 = vld [vmem:[%s4352] sm:$0xff]
        %4354 = vrot.lane.b32.xlu0 %v3694, 108
        %v4355 = vpop.permute.xlu0 %4354
        %4356 = vrot.lane.b32.xlu0 %v3695, 108
        %v4357 = vpop.permute.xlu0 %4356
        %4358 = vrot.lane.b32.xlu0 %v3696, 108
        %v4359 = vpop.permute.xlu0 %4358
        %4360 = vrot.lane.b32.xlu0 %v3697, 108
        %v4361 = vpop.permute.xlu0 %4360
        %v4362 = vsel %vm2120, %v4355, %v4357
        %v4363 = vsel %vm2120, %v4357, %v4359
        %v4364 = vsel %vm2120, %v4359, %v4361
        %v4369 = vsel %vm3544, %v4353, 0
        %4371 = vmatprep.subr.mxu0 %v4363
        %4372 = vmatpush1.msra.mxu0 %v4362
        %4373 = vmatprep.subr.mxu0 0.0
        %4374 = vmatpush1.msra.mxu0 0.0
        %4375 = vmatprep.subr.mxu0 0.0
        %4376 = vmatpush1.msra.mxu0 0.0
        %4377 = vmatprep.subr.mxu0 0.0
        %4378 = vmatpush1.msra.mxu0 0.0
        %4379 = vmatprep.subr.mxu0 0.0
        %4380 = vmatpush1.msra.mxu0 0.0
        %4381 = vmatprep.subr.mxu0 0.0
        %4382 = vmatpush1.msra.mxu0 0.0
        %4383 = vmatprep.subr.mxu0 0.0
        %4384 = vmatpush1.msra.mxu0 0.0
        %4385 = vmatprep.subr.mxu0 0.0
        %4386 = vmatpush1.msra.mxu0 0.0
        %4387 = vmatprep.subr.mxu0 0.0
        %4388 = vmatpush1.msra.mxu0 0.0
        %4389 = vmatprep.subr.mxu0 0.0
        %4390 = vmatpush1.msra.mxu0 0.0
        %4391 = vmatprep.subr.mxu0 0.0
        %4392 = vmatpush1.msra.mxu0 0.0
        %4393 = vmatprep.subr.mxu0 0.0
        %4394 = vmatpush1.msra.mxu0 0.0
        %4395 = vmatprep.subr.mxu0 0.0
        %4396 = vmatpush1.msra.mxu0 0.0
        %4397 = vmatprep.subr.mxu0 0.0
        %4398 = vmatpush1.msra.mxu0 0.0
        %4399 = vmatprep.subr.mxu0 0.0
        %4400 = vmatpush1.msra.mxu0 0.0
        %4401 = vmatprep.subr.mxu0 0.0
        %4402 = vmatpush1.msra.mxu0 0.0
        %4403 = vmatprep.subr.mxu0 0.0
        %4404 = vmatpush1.msra.mxu0 0.0
        %4405 = vmatprep.subr.mxu0 0.0
        %4406 = vmatpush1.msra.mxu0 0.0
        %4407 = vmatprep.subr.mxu0 0.0
        %4408 = vmatpush1.msra.mxu0 0.0
        %4409 = vmatprep.subr.mxu0 0.0
        %4410 = vmatpush1.msra.mxu0 0.0
        %4411 = vmatprep.subr.mxu0 0.0
        %4412 = vmatpush1.msra.mxu0 0.0
        %4413 = vmatprep.subr.mxu0 0.0
        %4414 = vmatpush1.msra.mxu0 0.0
        %4415 = vmatprep.subr.mxu0 0.0
        %4416 = vmatpush1.msra.mxu0 0.0
        %4417 = vmatprep.subr.mxu0 0.0
        %4418 = vmatpush1.msra.mxu0 0.0
        %4419 = vmatprep.subr.mxu0 0.0
        %4420 = vmatpush1.msra.mxu0 0.0
        %4421 = vmatprep.subr.mxu0 0.0
        %4422 = vmatpush1.msra.mxu0 0.0
        %4423 = vmatprep.subr.mxu0 0.0
        %4424 = vmatpush1.msra.mxu0 0.0
        %4425 = vmatprep.subr.mxu0 0.0
        %4426 = vmatpush1.msra.mxu0 0.0
        %4427 = vmatprep.subr.mxu0 0.0
        %4428 = vmatpush1.msra.mxu0 0.0
        %4429 = vmatprep.subr.mxu0 0.0
        %4430 = vmatpush1.msra.mxu0 0.0
        %4431 = vmatprep.subr.mxu0 0.0
        %4432 = vmatpush1.msra.mxu0 0.0
        %4433 = vmatprep.subr.mxu0 0.0
        %4434 = vmatpush1.msra.mxu0 0.0
        %4435 = vmatprep.mubr.f32.mxu0 0.0
        %4436 = vmatmul.mubr.f32.gmra.mrb[0].mxu0 %v4369
        %v4437 = vpop.f32.mrb[0].mxu0
        %v4438 = vadd.f32 0.0, %v4437
        %v4439 = vpop.f32.mrb[0].mxu0
        %v4440 = vadd.f32 0.0, %v4439
        %4441 = vdwg.mxu0
        %4442 = vmatprep.subr.mxu0 0.0
        %4443 = vmatpush1.msra.mxu0 %v4364
        %4444 = vmatprep.subr.mxu0 0.0
        %4445 = vmatpush1.msra.mxu0 0.0
        %4446 = vmatprep.subr.mxu0 0.0
        %4447 = vmatpush1.msra.mxu0 0.0
        %4448 = vmatprep.subr.mxu0 0.0
        %4449 = vmatpush1.msra.mxu0 0.0
        %4450 = vmatprep.subr.mxu0 0.0
        %4451 = vmatpush1.msra.mxu0 0.0
        %4452 = vmatprep.subr.mxu0 0.0
        %4453 = vmatpush1.msra.mxu0 0.0
        %4454 = vmatprep.subr.mxu0 0.0
        %4455 = vmatpush1.msra.mxu0 0.0
        %4456 = vmatprep.subr.mxu0 0.0
        %4457 = vmatpush1.msra.mxu0 0.0
        %4458 = vmatprep.subr.mxu0 0.0
        %4459 = vmatpush1.msra.mxu0 0.0
        %4460 = vmatprep.subr.mxu0 0.0
        %4461 = vmatpush1.msra.mxu0 0.0
        %4462 = vmatprep.subr.mxu0 0.0
        %4463 = vmatpush1.msra.mxu0 0.0
        %4464 = vmatprep.subr.mxu0 0.0
        %4465 = vmatpush1.msra.mxu0 0.0
        %4466 = vmatprep.subr.mxu0 0.0
        %4467 = vmatpush1.msra.mxu0 0.0
        %4468 = vmatprep.subr.mxu0 0.0
        %4469 = vmatpush1.msra.mxu0 0.0
        %4470 = vmatprep.subr.mxu0 0.0
        %4471 = vmatpush1.msra.mxu0 0.0
        %4472 = vmatprep.subr.mxu0 0.0
        %4473 = vmatpush1.msra.mxu0 0.0
        %4474 = vmatprep.subr.mxu0 0.0
        %4475 = vmatpush1.msra.mxu0 0.0
        %4476 = vmatprep.subr.mxu0 0.0
        %4477 = vmatpush1.msra.mxu0 0.0
        %4478 = vmatprep.subr.mxu0 0.0
        %4479 = vmatpush1.msra.mxu0 0.0
        %4480 = vmatprep.subr.mxu0 0.0
        %4481 = vmatpush1.msra.mxu0 0.0
        %4482 = vmatprep.subr.mxu0 0.0
        %4483 = vmatpush1.msra.mxu0 0.0
        %4484 = vmatprep.subr.mxu0 0.0
        %4485 = vmatpush1.msra.mxu0 0.0
        %4486 = vmatprep.subr.mxu0 0.0
        %4487 = vmatpush1.msra.mxu0 0.0
        %4488 = vmatprep.subr.mxu0 0.0
        %4489 = vmatpush1.msra.mxu0 0.0
        %4490 = vmatprep.subr.mxu0 0.0
        %4491 = vmatpush1.msra.mxu0 0.0
        %4492 = vmatprep.subr.mxu0 0.0
        %4493 = vmatpush1.msra.mxu0 0.0
        %4494 = vmatprep.subr.mxu0 0.0
        %4495 = vmatpush1.msra.mxu0 0.0
        %4496 = vmatprep.subr.mxu0 0.0
        %4497 = vmatpush1.msra.mxu0 0.0
        %4498 = vmatprep.subr.mxu0 0.0
        %4499 = vmatpush1.msra.mxu0 0.0
        %4500 = vmatprep.subr.mxu0 0.0
        %4501 = vmatpush1.msra.mxu0 0.0
        %4502 = vmatprep.subr.mxu0 0.0
        %4503 = vmatpush1.msra.mxu0 0.0
        %4504 = vmatprep.subr.mxu0 0.0
        %4505 = vmatpush1.msra.mxu0 0.0
        %4506 = vmatprep.mubr.f32.mxu0 0.0
        %4507 = vmatmul.mubr.f32.gmra.mrb[0].mxu0 %v4369
        %v4508 = vpop.f32.mrb[0].mxu0
        %v4509 = vadd.f32 0.0, %v4508
        %v4510 = vpop.f32.mrb[0].mxu0
        %4511 = vdwg.mxu0
        %v4512 = vadd.f32 %v4349, %v4438
        %v4513 = vadd.f32 %v4350, %v4440
        %v4514 = vadd.f32 %v4351, %v4509
        %s4515 = scalar_lea.vmem %s7, 48
        %v4516 = vld [vmem:[%s4515] sm:$0xff]
        %4517 = vrot.lane.b32.xlu0 %v3694, 92
        %v4518 = vpop.permute.xlu0 %4517
        %4519 = vrot.lane.b32.xlu0 %v3695, 92
        %v4520 = vpop.permute.xlu0 %4519
        %4521 = vrot.lane.b32.xlu0 %v3696, 92
        %v4522 = vpop.permute.xlu0 %4521
        %4523 = vrot.lane.b32.xlu0 %v3697, 92
        %v4524 = vpop.permute.xlu0 %4523
        %v4525 = vsel %vm2465, %v4518, %v4520
        %v4526 = vsel %vm2465, %v4520, %v4522
        %v4527 = vsel %vm2465, %v4522, %v4524
        %v4532 = vsel %vm3544, %v4516, 0
        %4534 = vmatprep.subr.mxu0 %v4526
        %4535 = vmatpush1.msra.mxu0 %v4525
        %4536 = vmatprep.subr.mxu0 0.0
        %4537 = vmatpush1.msra.mxu0 0.0
        %4538 = vmatprep.subr.mxu0 0.0
        %4539 = vmatpush1.msra.mxu0 0.0
        %4540 = vmatprep.subr.mxu0 0.0
        %4541 = vmatpush1.msra.mxu0 0.0
        %4542 = vmatprep.subr.mxu0 0.0
        %4543 = vmatpush1.msra.mxu0 0.0
        %4544 = vmatprep.subr.mxu0 0.0
        %4545 = vmatpush1.msra.mxu0 0.0
        %4546 = vmatprep.subr.mxu0 0.0
        %4547 = vmatpush1.msra.mxu0 0.0
        %4548 = vmatprep.subr.mxu0 0.0
        %4549 = vmatpush1.msra.mxu0 0.0
        %4550 = vmatprep.subr.mxu0 0.0
        %4551 = vmatpush1.msra.mxu0 0.0
        %4552 = vmatprep.subr.mxu0 0.0
        %4553 = vmatpush1.msra.mxu0 0.0
        %4554 = vmatprep.subr.mxu0 0.0
        %4555 = vmatpush1.msra.mxu0 0.0
        %4556 = vmatprep.subr.mxu0 0.0
        %4557 = vmatpush1.msra.mxu0 0.0
        %4558 = vmatprep.subr.mxu0 0.0
        %4559 = vmatpush1.msra.mxu0 0.0
        %4560 = vmatprep.subr.mxu0 0.0
        %4561 = vmatpush1.msra.mxu0 0.0
        %4562 = vmatprep.subr.mxu0 0.0
        %4563 = vmatpush1.msra.mxu0 0.0
        %4564 = vmatprep.subr.mxu0 0.0
        %4565 = vmatpush1.msra.mxu0 0.0
        %4566 = vmatprep.subr.mxu0 0.0
        %4567 = vmatpush1.msra.mxu0 0.0
        %4568 = vmatprep.subr.mxu0 0.0
        %4569 = vmatpush1.msra.mxu0 0.0
        %4570 = vmatprep.subr.mxu0 0.0
        %4571 = vmatpush1.msra.mxu0 0.0
        %4572 = vmatprep.subr.mxu0 0.0
        %4573 = vmatpush1.msra.mxu0 0.0
        %4574 = vmatprep.subr.mxu0 0.0
        %4575 = vmatpush1.msra.mxu0 0.0
        %4576 = vmatprep.subr.mxu0 0.0
        %4577 = vmatpush1.msra.mxu0 0.0
        %4578 = vmatprep.subr.mxu0 0.0
        %4579 = vmatpush1.msra.mxu0 0.0
        %4580 = vmatprep.subr.mxu0 0.0
        %4581 = vmatpush1.msra.mxu0 0.0
        %4582 = vmatprep.subr.mxu0 0.0
        %4583 = vmatpush1.msra.mxu0 0.0
        %4584 = vmatprep.subr.mxu0 0.0
        %4585 = vmatpush1.msra.mxu0 0.0
        %4586 = vmatprep.subr.mxu0 0.0
        %4587 = vmatpush1.msra.mxu0 0.0
        %4588 = vmatprep.subr.mxu0 0.0
        %4589 = vmatpush1.msra.mxu0 0.0
        %4590 = vmatprep.subr.mxu0 0.0
        %4591 = vmatpush1.msra.mxu0 0.0
        %4592 = vmatprep.subr.mxu0 0.0
        %4593 = vmatpush1.msra.mxu0 0.0
        %4594 = vmatprep.subr.mxu0 0.0
        %4595 = vmatpush1.msra.mxu0 0.0
        %4596 = vmatprep.subr.mxu0 0.0
        %4597 = vmatpush1.msra.mxu0 0.0
        %4598 = vmatprep.mubr.f32.mxu0 0.0
        %4599 = vmatmul.mubr.f32.gmra.mrb[0].mxu0 %v4532
        %v4600 = vpop.f32.mrb[0].mxu0
        %v4601 = vadd.f32 0.0, %v4600
        %v4602 = vpop.f32.mrb[0].mxu0
        %v4603 = vadd.f32 0.0, %v4602
        %4604 = vdwg.mxu0
        %4605 = vmatprep.subr.mxu0 0.0
        %4606 = vmatpush1.msra.mxu0 %v4527
        %4607 = vmatprep.subr.mxu0 0.0
        %4608 = vmatpush1.msra.mxu0 0.0
        %4609 = vmatprep.subr.mxu0 0.0
        %4610 = vmatpush1.msra.mxu0 0.0
        %4611 = vmatprep.subr.mxu0 0.0
        %4612 = vmatpush1.msra.mxu0 0.0
        %4613 = vmatprep.subr.mxu0 0.0
        %4614 = vmatpush1.msra.mxu0 0.0
        %4615 = vmatprep.subr.mxu0 0.0
        %4616 = vmatpush1.msra.mxu0 0.0
        %4617 = vmatprep.subr.mxu0 0.0
        %4618 = vmatpush1.msra.mxu0 0.0
        %4619 = vmatprep.subr.mxu0 0.0
        %4620 = vmatpush1.msra.mxu0 0.0
        %4621 = vmatprep.subr.mxu0 0.0
        %4622 = vmatpush1.msra.mxu0 0.0
        %4623 = vmatprep.subr.mxu0 0.0
        %4624 = vmatpush1.msra.mxu0 0.0
        %4625 = vmatprep.subr.mxu0 0.0
        %4626 = vmatpush1.msra.mxu0 0.0
        %4627 = vmatprep.subr.mxu0 0.0
        %4628 = vmatpush1.msra.mxu0 0.0
        %4629 = vmatprep.subr.mxu0 0.0
        %4630 = vmatpush1.msra.mxu0 0.0
        %4631 = vmatprep.subr.mxu0 0.0
        %4632 = vmatpush1.msra.mxu0 0.0
        %4633 = vmatprep.subr.mxu0 0.0
        %4634 = vmatpush1.msra.mxu0 0.0
        %4635 = vmatprep.subr.mxu0 0.0
        %4636 = vmatpush1.msra.mxu0 0.0
        %4637 = vmatprep.subr.mxu0 0.0
        %4638 = vmatpush1.msra.mxu0 0.0
        %4639 = vmatprep.subr.mxu0 0.0
        %4640 = vmatpush1.msra.mxu0 0.0
        %4641 = vmatprep.subr.mxu0 0.0
        %4642 = vmatpush1.msra.mxu0 0.0
        %4643 = vmatprep.subr.mxu0 0.0
        %4644 = vmatpush1.msra.mxu0 0.0
        %4645 = vmatprep.subr.mxu0 0.0
        %4646 = vmatpush1.msra.mxu0 0.0
        %4647 = vmatprep.subr.mxu0 0.0
        %4648 = vmatpush1.msra.mxu0 0.0
        %4649 = vmatprep.subr.mxu0 0.0
        %4650 = vmatpush1.msra.mxu0 0.0
        %4651 = vmatprep.subr.mxu0 0.0
        %4652 = vmatpush1.msra.mxu0 0.0
        %4653 = vmatprep.subr.mxu0 0.0
        %4654 = vmatpush1.msra.mxu0 0.0
        %4655 = vmatprep.subr.mxu0 0.0
        %4656 = vmatpush1.msra.mxu0 0.0
        %4657 = vmatprep.subr.mxu0 0.0
        %4658 = vmatpush1.msra.mxu0 0.0
        %4659 = vmatprep.subr.mxu0 0.0
        %4660 = vmatpush1.msra.mxu0 0.0
        %4661 = vmatprep.subr.mxu0 0.0
        %4662 = vmatpush1.msra.mxu0 0.0
        %4663 = vmatprep.subr.mxu0 0.0
        %4664 = vmatpush1.msra.mxu0 0.0
        %4665 = vmatprep.subr.mxu0 0.0
        %4666 = vmatpush1.msra.mxu0 0.0
        %4667 = vmatprep.subr.mxu0 0.0
        %4668 = vmatpush1.msra.mxu0 0.0
        %4669 = vmatprep.mubr.f32.mxu0 0.0
        %4670 = vmatmul.mubr.f32.gmra.mrb[0].mxu0 %v4532
        %v4671 = vpop.f32.mrb[0].mxu0
        %v4672 = vadd.f32 0.0, %v4671
        %v4673 = vpop.f32.mrb[0].mxu0
        %4674 = vdwg.mxu0
        %v4675 = vadd.f32 %v4512, %v4601
        %v4676 = vadd.f32 %v4513, %v4603
        %v4677 = vadd.f32 %v4514, %v4672
        %s4678 = scalar_lea.vmem %s7, 56
        %v4679 = vld [vmem:[%s4678] sm:$0xff]
        %4680 = vrot.lane.b32.xlu0 %v3694, 91
        %v4681 = vpop.permute.xlu0 %4680
        %4682 = vrot.lane.b32.xlu0 %v3695, 91
        %v4683 = vpop.permute.xlu0 %4682
        %4684 = vrot.lane.b32.xlu0 %v3696, 91
        %v4685 = vpop.permute.xlu0 %4684
        %4686 = vrot.lane.b32.xlu0 %v3697, 91
        %v4687 = vpop.permute.xlu0 %4686
        %v4688 = vsel %vm2810, %v4681, %v4683
        %v4689 = vsel %vm2810, %v4683, %v4685
        %v4690 = vsel %vm2810, %v4685, %v4687
        %v4695 = vsel %vm3544, %v4679, 0
        %4697 = vmatprep.subr.mxu0 %v4689
        %4698 = vmatpush1.msra.mxu0 %v4688
        %4699 = vmatprep.subr.mxu0 0.0
        %4700 = vmatpush1.msra.mxu0 0.0
        %4701 = vmatprep.subr.mxu0 0.0
        %4702 = vmatpush1.msra.mxu0 0.0
        %4703 = vmatprep.subr.mxu0 0.0
        %4704 = vmatpush1.msra.mxu0 0.0
        %4705 = vmatprep.subr.mxu0 0.0
        %4706 = vmatpush1.msra.mxu0 0.0
        %4707 = vmatprep.subr.mxu0 0.0
        %4708 = vmatpush1.msra.mxu0 0.0
        %4709 = vmatprep.subr.mxu0 0.0
        %4710 = vmatpush1.msra.mxu0 0.0
        %4711 = vmatprep.subr.mxu0 0.0
        %4712 = vmatpush1.msra.mxu0 0.0
        %4713 = vmatprep.subr.mxu0 0.0
        %4714 = vmatpush1.msra.mxu0 0.0
        %4715 = vmatprep.subr.mxu0 0.0
        %4716 = vmatpush1.msra.mxu0 0.0
        %4717 = vmatprep.subr.mxu0 0.0
        %4718 = vmatpush1.msra.mxu0 0.0
        %4719 = vmatprep.subr.mxu0 0.0
        %4720 = vmatpush1.msra.mxu0 0.0
        %4721 = vmatprep.subr.mxu0 0.0
        %4722 = vmatpush1.msra.mxu0 0.0
        %4723 = vmatprep.subr.mxu0 0.0
        %4724 = vmatpush1.msra.mxu0 0.0
        %4725 = vmatprep.subr.mxu0 0.0
        %4726 = vmatpush1.msra.mxu0 0.0
        %4727 = vmatprep.subr.mxu0 0.0
        %4728 = vmatpush1.msra.mxu0 0.0
        %4729 = vmatprep.subr.mxu0 0.0
        %4730 = vmatpush1.msra.mxu0 0.0
        %4731 = vmatprep.subr.mxu0 0.0
        %4732 = vmatpush1.msra.mxu0 0.0
        %4733 = vmatprep.subr.mxu0 0.0
        %4734 = vmatpush1.msra.mxu0 0.0
        %4735 = vmatprep.subr.mxu0 0.0
        %4736 = vmatpush1.msra.mxu0 0.0
        %4737 = vmatprep.subr.mxu0 0.0
        %4738 = vmatpush1.msra.mxu0 0.0
        %4739 = vmatprep.subr.mxu0 0.0
        %4740 = vmatpush1.msra.mxu0 0.0
        %4741 = vmatprep.subr.mxu0 0.0
        %4742 = vmatpush1.msra.mxu0 0.0
        %4743 = vmatprep.subr.mxu0 0.0
        %4744 = vmatpush1.msra.mxu0 0.0
        %4745 = vmatprep.subr.mxu0 0.0
        %4746 = vmatpush1.msra.mxu0 0.0
        %4747 = vmatprep.subr.mxu0 0.0
        %4748 = vmatpush1.msra.mxu0 0.0
        %4749 = vmatprep.subr.mxu0 0.0
        %4750 = vmatpush1.msra.mxu0 0.0
        %4751 = vmatprep.subr.mxu0 0.0
        %4752 = vmatpush1.msra.mxu0 0.0
        %4753 = vmatprep.subr.mxu0 0.0
        %4754 = vmatpush1.msra.mxu0 0.0
        %4755 = vmatprep.subr.mxu0 0.0
        %4756 = vmatpush1.msra.mxu0 0.0
        %4757 = vmatprep.subr.mxu0 0.0
        %4758 = vmatpush1.msra.mxu0 0.0
        %4759 = vmatprep.subr.mxu0 0.0
        %4760 = vmatpush1.msra.mxu0 0.0
        %4761 = vmatprep.mubr.f32.mxu0 0.0
        %4762 = vmatmul.mubr.f32.gmra.mrb[0].mxu0 %v4695
        %v4763 = vpop.f32.mrb[0].mxu0
        %v4764 = vadd.f32 0.0, %v4763
        %v4765 = vpop.f32.mrb[0].mxu0
        %v4766 = vadd.f32 0.0, %v4765
        %4767 = vdwg.mxu0
        %4768 = vmatprep.subr.mxu0 0.0
        %4769 = vmatpush1.msra.mxu0 %v4690
        %4770 = vmatprep.subr.mxu0 0.0
        %4771 = vmatpush1.msra.mxu0 0.0
        %4772 = vmatprep.subr.mxu0 0.0
        %4773 = vmatpush1.msra.mxu0 0.0
        %4774 = vmatprep.subr.mxu0 0.0
        %4775 = vmatpush1.msra.mxu0 0.0
        %4776 = vmatprep.subr.mxu0 0.0
        %4777 = vmatpush1.msra.mxu0 0.0
        %4778 = vmatprep.subr.mxu0 0.0
        %4779 = vmatpush1.msra.mxu0 0.0
        %4780 = vmatprep.subr.mxu0 0.0
        %4781 = vmatpush1.msra.mxu0 0.0
        %4782 = vmatprep.subr.mxu0 0.0
        %4783 = vmatpush1.msra.mxu0 0.0
        %4784 = vmatprep.subr.mxu0 0.0
        %4785 = vmatpush1.msra.mxu0 0.0
        %4786 = vmatprep.subr.mxu0 0.0
        %4787 = vmatpush1.msra.mxu0 0.0
        %4788 = vmatprep.subr.mxu0 0.0
        %4789 = vmatpush1.msra.mxu0 0.0
        %4790 = vmatprep.subr.mxu0 0.0
        %4791 = vmatpush1.msra.mxu0 0.0
        %4792 = vmatprep.subr.mxu0 0.0
        %4793 = vmatpush1.msra.mxu0 0.0
        %4794 = vmatprep.subr.mxu0 0.0
        %4795 = vmatpush1.msra.mxu0 0.0
        %4796 = vmatprep.subr.mxu0 0.0
        %4797 = vmatpush1.msra.mxu0 0.0
        %4798 = vmatprep.subr.mxu0 0.0
        %4799 = vmatpush1.msra.mxu0 0.0
        %4800 = vmatprep.subr.mxu0 0.0
        %4801 = vmatpush1.msra.mxu0 0.0
        %4802 = vmatprep.subr.mxu0 0.0
        %4803 = vmatpush1.msra.mxu0 0.0
        %4804 = vmatprep.subr.mxu0 0.0
        %4805 = vmatpush1.msra.mxu0 0.0
        %4806 = vmatprep.subr.mxu0 0.0
        %4807 = vmatpush1.msra.mxu0 0.0
        %4808 = vmatprep.subr.mxu0 0.0
        %4809 = vmatpush1.msra.mxu0 0.0
        %4810 = vmatprep.subr.mxu0 0.0
        %4811 = vmatpush1.msra.mxu0 0.0
        %4812 = vmatprep.subr.mxu0 0.0
        %4813 = vmatpush1.msra.mxu0 0.0
        %4814 = vmatprep.subr.mxu0 0.0
        %4815 = vmatpush1.msra.mxu0 0.0
        %4816 = vmatprep.subr.mxu0 0.0
        %4817 = vmatpush1.msra.mxu0 0.0
        %4818 = vmatprep.subr.mxu0 0.0
        %4819 = vmatpush1.msra.mxu0 0.0
        %4820 = vmatprep.subr.mxu0 0.0
        %4821 = vmatpush1.msra.mxu0 0.0
        %4822 = vmatprep.subr.mxu0 0.0
        %4823 = vmatpush1.msra.mxu0 0.0
        %4824 = vmatprep.subr.mxu0 0.0
        %4825 = vmatpush1.msra.mxu0 0.0
        %4826 = vmatprep.subr.mxu0 0.0
        %4827 = vmatpush1.msra.mxu0 0.0
        %4828 = vmatprep.subr.mxu0 0.0
        %4829 = vmatpush1.msra.mxu0 0.0
        %4830 = vmatprep.subr.mxu0 0.0
        %4831 = vmatpush1.msra.mxu0 0.0
        %4832 = vmatprep.mubr.f32.mxu0 0.0
        %4833 = vmatmul.mubr.f32.gmra.mrb[0].mxu0 %v4695
        %v4834 = vpop.f32.mrb[0].mxu0
        %v4835 = vadd.f32 0.0, %v4834
        %v4836 = vpop.f32.mrb[0].mxu0
        %4837 = vdwg.mxu0
        %v4838 = vadd.f32 %v4675, %v4764
        %v4839 = vadd.f32 %v4676, %v4766
        %v4840 = vadd.f32 %v4677, %v4835
        %s4841 = scalar_lea.vmem %s7, 64
        %v4842 = vld [vmem:[%s4841] sm:$0xff]
        %4843 = vrot.lane.b32.xlu0 %v3694, 90
        %v4844 = vpop.permute.xlu0 %4843
        %4845 = vrot.lane.b32.xlu0 %v3695, 90
        %v4846 = vpop.permute.xlu0 %4845
        %4847 = vrot.lane.b32.xlu0 %v3696, 90
        %v4848 = vpop.permute.xlu0 %4847
        %4849 = vrot.lane.b32.xlu0 %v3697, 90
        %v4850 = vpop.permute.xlu0 %4849
        %v4851 = vsel %vm3155, %v4844, %v4846
        %v4852 = vsel %vm3155, %v4846, %v4848
        %v4853 = vsel %vm3155, %v4848, %v4850
        %v4858 = vsel %vm3544, %v4842, 0
        %4860 = vmatprep.subr.mxu0 %v4852
        %4861 = vmatpush1.msra.mxu0 %v4851
        %4862 = vmatprep.subr.mxu0 0.0
        %4863 = vmatpush1.msra.mxu0 0.0
        %4864 = vmatprep.subr.mxu0 0.0
        %4865 = vmatpush1.msra.mxu0 0.0
        %4866 = vmatprep.subr.mxu0 0.0
        %4867 = vmatpush1.msra.mxu0 0.0
        %4868 = vmatprep.subr.mxu0 0.0
        %4869 = vmatpush1.msra.mxu0 0.0
        %4870 = vmatprep.subr.mxu0 0.0
        %4871 = vmatpush1.msra.mxu0 0.0
        %4872 = vmatprep.subr.mxu0 0.0
        %4873 = vmatpush1.msra.mxu0 0.0
        %4874 = vmatprep.subr.mxu0 0.0
        %4875 = vmatpush1.msra.mxu0 0.0
        %4876 = vmatprep.subr.mxu0 0.0
        %4877 = vmatpush1.msra.mxu0 0.0
        %4878 = vmatprep.subr.mxu0 0.0
        %4879 = vmatpush1.msra.mxu0 0.0
        %4880 = vmatprep.subr.mxu0 0.0
        %4881 = vmatpush1.msra.mxu0 0.0
        %4882 = vmatprep.subr.mxu0 0.0
        %4883 = vmatpush1.msra.mxu0 0.0
        %4884 = vmatprep.subr.mxu0 0.0
        %4885 = vmatpush1.msra.mxu0 0.0
        %4886 = vmatprep.subr.mxu0 0.0
        %4887 = vmatpush1.msra.mxu0 0.0
        %4888 = vmatprep.subr.mxu0 0.0
        %4889 = vmatpush1.msra.mxu0 0.0
        %4890 = vmatprep.subr.mxu0 0.0
        %4891 = vmatpush1.msra.mxu0 0.0
        %4892 = vmatprep.subr.mxu0 0.0
        %4893 = vmatpush1.msra.mxu0 0.0
        %4894 = vmatprep.subr.mxu0 0.0
        %4895 = vmatpush1.msra.mxu0 0.0
        %4896 = vmatprep.subr.mxu0 0.0
        %4897 = vmatpush1.msra.mxu0 0.0
        %4898 = vmatprep.subr.mxu0 0.0
        %4899 = vmatpush1.msra.mxu0 0.0
        %4900 = vmatprep.subr.mxu0 0.0
        %4901 = vmatpush1.msra.mxu0 0.0
        %4902 = vmatprep.subr.mxu0 0.0
        %4903 = vmatpush1.msra.mxu0 0.0
        %4904 = vmatprep.subr.mxu0 0.0
        %4905 = vmatpush1.msra.mxu0 0.0
        %4906 = vmatprep.subr.mxu0 0.0
        %4907 = vmatpush1.msra.mxu0 0.0
        %4908 = vmatprep.subr.mxu0 0.0
        %4909 = vmatpush1.msra.mxu0 0.0
        %4910 = vmatprep.subr.mxu0 0.0
        %4911 = vmatpush1.msra.mxu0 0.0
        %4912 = vmatprep.subr.mxu0 0.0
        %4913 = vmatpush1.msra.mxu0 0.0
        %4914 = vmatprep.subr.mxu0 0.0
        %4915 = vmatpush1.msra.mxu0 0.0
        %4916 = vmatprep.subr.mxu0 0.0
        %4917 = vmatpush1.msra.mxu0 0.0
        %4918 = vmatprep.subr.mxu0 0.0
        %4919 = vmatpush1.msra.mxu0 0.0
        %4920 = vmatprep.subr.mxu0 0.0
        %4921 = vmatpush1.msra.mxu0 0.0
        %4922 = vmatprep.subr.mxu0 0.0
        %4923 = vmatpush1.msra.mxu0 0.0
        %4924 = vmatprep.mubr.f32.mxu0 0.0
        %4925 = vmatmul.mubr.f32.gmra.mrb[0].mxu0 %v4858
        %v4926 = vpop.f32.mrb[0].mxu0
        %v4927 = vadd.f32 0.0, %v4926
        %v4928 = vpop.f32.mrb[0].mxu0
        %v4929 = vadd.f32 0.0, %v4928
        %4930 = vdwg.mxu0
        %4931 = vmatprep.subr.mxu0 0.0
        %4932 = vmatpush1.msra.mxu0 %v4853
        %4933 = vmatprep.subr.mxu0 0.0
        %4934 = vmatpush1.msra.mxu0 0.0
        %4935 = vmatprep.subr.mxu0 0.0
        %4936 = vmatpush1.msra.mxu0 0.0
        %4937 = vmatprep.subr.mxu0 0.0
        %4938 = vmatpush1.msra.mxu0 0.0
        %4939 = vmatprep.subr.mxu0 0.0
        %4940 = vmatpush1.msra.mxu0 0.0
        %4941 = vmatprep.subr.mxu0 0.0
        %4942 = vmatpush1.msra.mxu0 0.0
        %4943 = vmatprep.subr.mxu0 0.0
        %4944 = vmatpush1.msra.mxu0 0.0
        %4945 = vmatprep.subr.mxu0 0.0
        %4946 = vmatpush1.msra.mxu0 0.0
        %4947 = vmatprep.subr.mxu0 0.0
        %4948 = vmatpush1.msra.mxu0 0.0
        %4949 = vmatprep.subr.mxu0 0.0
        %4950 = vmatpush1.msra.mxu0 0.0
        %4951 = vmatprep.subr.mxu0 0.0
        %4952 = vmatpush1.msra.mxu0 0.0
        %4953 = vmatprep.subr.mxu0 0.0
        %4954 = vmatpush1.msra.mxu0 0.0
        %4955 = vmatprep.subr.mxu0 0.0
        %4956 = vmatpush1.msra.mxu0 0.0
        %4957 = vmatprep.subr.mxu0 0.0
        %4958 = vmatpush1.msra.mxu0 0.0
        %4959 = vmatprep.subr.mxu0 0.0
        %4960 = vmatpush1.msra.mxu0 0.0
        %4961 = vmatprep.subr.mxu0 0.0
        %4962 = vmatpush1.msra.mxu0 0.0
        %4963 = vmatprep.subr.mxu0 0.0
        %4964 = vmatpush1.msra.mxu0 0.0
        %4965 = vmatprep.subr.mxu0 0.0
        %4966 = vmatpush1.msra.mxu0 0.0
        %4967 = vmatprep.subr.mxu0 0.0
        %4968 = vmatpush1.msra.mxu0 0.0
        %4969 = vmatprep.subr.mxu0 0.0
        %4970 = vmatpush1.msra.mxu0 0.0
        %4971 = vmatprep.subr.mxu0 0.0
        %4972 = vmatpush1.msra.mxu0 0.0
        %4973 = vmatprep.subr.mxu0 0.0
        %4974 = vmatpush1.msra.mxu0 0.0
        %4975 = vmatprep.subr.mxu0 0.0
        %4976 = vmatpush1.msra.mxu0 0.0
        %4977 = vmatprep.subr.mxu0 0.0
        %4978 = vmatpush1.msra.mxu0 0.0
        %4979 = vmatprep.subr.mxu0 0.0
        %4980 = vmatpush1.msra.mxu0 0.0
        %4981 = vmatprep.subr.mxu0 0.0
        %4982 = vmatpush1.msra.mxu0 0.0
        %4983 = vmatprep.subr.mxu0 0.0
        %4984 = vmatpush1.msra.mxu0 0.0
        %4985 = vmatprep.subr.mxu0 0.0
        %4986 = vmatpush1.msra.mxu0 0.0
        %4987 = vmatprep.subr.mxu0 0.0
        %4988 = vmatpush1.msra.mxu0 0.0
        %4989 = vmatprep.subr.mxu0 0.0
        %4990 = vmatpush1.msra.mxu0 0.0
        %4991 = vmatprep.subr.mxu0 0.0
        %4992 = vmatpush1.msra.mxu0 0.0
        %4993 = vmatprep.subr.mxu0 0.0
        %4994 = vmatpush1.msra.mxu0 0.0
        %4995 = vmatprep.mubr.f32.mxu0 0.0
        %4996 = vmatmul.mubr.f32.gmra.mrb[0].mxu0 %v4858
        %v4997 = vpop.f32.mrb[0].mxu0
        %v4998 = vadd.f32 0.0, %v4997
        %v4999 = vpop.f32.mrb[0].mxu0
        %5000 = vdwg.mxu0
        %v5001 = vadd.f32 %v4838, %v4927
        %v5002 = vadd.f32 %v4839, %v4929
        %v5003 = vadd.f32 %v4840, %v4998
        %v5004 = vld [vmem:[%s9] sm:$0xff]
        %5006 = vset.pattern.permute.xlu0 0
        %5007 = vperm.xlu0 %5006, %v5004
        %v5008 = vpop.permute.xlu0 %5007
        %v5010 = vadd.f32 %v5001, %v5008
        %v5011 = vadd.f32 %v5002, %v5008
        %v5012 = vadd.f32 %v5003, %v5008
        %5013 = vst [vmem:[%s352] sm:$0xff] %v5010
        %5014 = vst [vmem:[%s352 + $0x8] sm:$0xff] %v5011
        %5015 = vst [vmem:[%s352 + $0x10] sm:$0xff] %v5012
        %s5016 = sand.u32 %s247, 1
        %s5017 = scalar_lea.sflag [#allocation5], %s5016
        %s5018 = sand.u32 %s247, 1
        %s5019 = smul.addr %s5018, 24
        %s5020 = scalar_lea.vmem [#allocation4], %s5019
        // Predicated region
        $region61: #{tpu_custom_call.1} parent=59 // pred_check
          %p5021 = pneg %p257
        $region62: #{tpu_custom_call.1} parent=59 // pred_check_branch
          %5023 = sbr.rel (%p5021) target = $region64
        $region63: #{tpu_custom_call.1} parent=59 // pred_region
          %s5025 = ssub.s32 384, 384
          %5026 = vsyncadd %s5017, %s5025
          %s5027 = smul.addr %s24, 3
          %s5028 = smul.addr %s5027, 128
          %s5029 = scalar_lea.hbm %s10, %s5028
          %s5031 = sshll.u32 %s5020, 4
          %s5032 = int_to_ptr.vmem [resolvable:$true] %s5031
          %5034 = dma.vmem_to_hbm [thread:$0]  %s5032, 384, %s5029, %s5017
        $region64: #{tpu_custom_call.1} parent=59 // pred_fallthru
          _
      $region60: #{tpu_custom_call.1} parent=5 // pred_fallthru
        _
      %p5035 = scmp.le.s32.totalorder 2, %s19
      // Predicated region
      $region65: #{tpu_custom_call.1} parent=5 // pred_check
        %p5036 = pneg %p5035
      $region66: #{tpu_custom_call.1} parent=5 // pred_check_branch
        %5038 = sbr.rel (%p5036) target = $region68
      $region67: #{tpu_custom_call.1} parent=5 // pred_region
        %s5039 = ssub.s32 %s19, 2
        // Predicated region
        $region69: #{tpu_custom_call.1} parent=67 // pred_check
          %p5040 = pneg %p263
        $region70: #{tpu_custom_call.1} parent=67 // pred_check_branch
          %5042 = sbr.rel (%p5040) target = $region72
        $region71: #{tpu_custom_call.1} parent=67 // pred_region
          %s5043 = sand.u32 %s248, 1
          %s5044 = scalar_lea.sflag [#allocation5], %s5043
          %s5045 = sand.u32 %s248, 1
          %s5046 = smul.addr %s5045, 24
          %s5047 = scalar_lea.vmem [#allocation4], %s5046
          %5048 = dma.done %s5044, 384
        $region72: #{tpu_custom_call.1} parent=67 // pred_fallthru
          _
      $region68: #{tpu_custom_call.1} parent=5 // pred_fallthru
        _
    $region6: #{tpu_custom_call.1} parent=1 // loop_footer
      %s23 = sadd.s32 1, %s19
    $region7: #{tpu_custom_call.1} parent=1 // loop_footer_branch
      %18 = sbr.rel target = $region3
    $region8: #{tpu_custom_call.1} parent=1 // loop_exit
      _
    %5049 = vsyncpa [#allocation5], 1
    %s5050 = scalar_lea.sflag [#allocation5], 1
    %5051 = vsyncpa %s5050, 1

</llo_original>
